<compile_context>
chip_gen: v7x
topology: tpu7x:2x2x1
jax: 0.10.0
libtpu: 0.0.40
codegen_flags: <defaults>
</compile_context>

<pallas_src>
import numpy as np
import jax
import jax.numpy as jnp
from jax import lax
from jax.experimental import pallas as pl
from jax.experimental.pallas import tpu as pltpu

# Static geometry.
H_IN, W_IN = 28, 40
H1, W1 = 24, 36           # conv1 output
HP, WP = 12, 18           # after 2x2 maxpool
H2, W2 = 8, 14            # conv2 output
C1, C2 = 2, 16            # conv channel counts
K = 5                     # conv kernel size
CM_COLS = C1 * W1 - 1     # 71 columns of the lane-pair max
NF1, NF2, NF3 = 120, 84, 4
OUT_PAD = 128             # lane-padded fc3 output width


def fused_convnet_kernel(x_ref,                          # (28, BB, 40), rows (h, b)
                         t1_ref, b1_ref,                 # conv1 banded weights / bias
                         csel_ref,                       # maxpool even-column selector
                         t2_ref, b2_ref,                 # conv2 banded weights / bias
                         w1w_ref, fb1_ref,               # fc1 (flatten folded in) / bias
                         fw2_ref, fb2_ref,               # fc2
                         fw3_ref, fb3_ref,               # fc3 (lane-padded to 128)
                         out_ref):                       # (BB, 128)
    f32 = jnp.float32
    BB = x_ref.shape[1]

    # Rows are (spatial_row, batch): every row shift / slice below is a multiple of
    # BB (BB % 8 == 0), i.e. sublane-tile aligned, and batch lives in the matmul M dim.
    x2d = x_ref[...].reshape(H_IN * BB, W_IN)                        # (28*BB, 40)

    # ---- conv1 (5x5, 1->2) on the MXU: kw and out-channel folded into banded weights
    acc1 = jnp.dot(x2d[0:H1 * BB, :], t1_ref[0], preferred_element_type=f32)
    for kh in range(1, K):
        acc1 = acc1 + jnp.dot(x2d[kh * BB:(kh + H1) * BB, :], t1_ref[kh],
                              preferred_element_type=f32)
    act1 = jnp.maximum(acc1 + b1_ref[...], 0.0)                      # (24*BB, 72) lanes (oc, j)

    # ---- 2x2 maxpool: lane-pair max, even-column pick on the MXU, row-pair max ----
    cmax = jnp.maximum(act1[:, :-1], act1[:, 1:])                    # (24*BB, 71)
    csel = jnp.dot(cmax, csel_ref[...], preferred_element_type=f32)  # (24*BB, 36)
    csel3 = csel.reshape(HP, 2 * BB, C1 * WP)                        # rows (ip, {even,odd}, b)
    pooled2d = jnp.maximum(csel3[:, :BB, :],
                           csel3[:, BB:, :]).reshape(HP * BB, C1 * WP)   # (12*BB, 36)

    # ---- conv2 (5x5, 2->16) on the MXU: ic, kw, oc folded into banded weights ----
    acc2 = jnp.dot(pooled2d[0:H2 * BB, :], t2_ref[0], preferred_element_type=f32)
    for kh in range(1, K):
        acc2 = acc2 + jnp.dot(pooled2d[kh * BB:(kh + H2) * BB, :], t2_ref[kh],
                              preferred_element_type=f32)
    h2 = jnp.maximum(acc2 + b2_ref[...], 0.0)                        # (8*BB, 224) lanes (oc, j)

    # ---- fc1: flatten folded into per-io weight blocks; contiguous row-block slices
    y = jnp.dot(h2[0:BB, :], w1w_ref[0], preferred_element_type=f32)
    for io in range(1, H2):
        y = y + jnp.dot(h2[io * BB:(io + 1) * BB, :], w1w_ref[io],
                        preferred_element_type=f32)
    y = jnp.maximum(y + fb1_ref[...], 0.0)                           # (BB, 120)

    # ---- fc2 + ReLU, fc3 (output lanes padded to 128; wrapper slices to 4) ----
    y = jnp.maximum(jnp.dot(y, fw2_ref[...], preferred_element_type=f32)
                    + fb2_ref[...], 0.0)
    out_ref[...] = jnp.dot(y, fw3_ref[...], preferred_element_type=f32) + fb3_ref[...]


def _prep_params(params):
    """Weight re-layout (runs once in XLA, outside the kernel)."""
    f32 = jnp.float32

    # conv1 -> banded weights: t1[kh, j+kw, oc*36+j] = w1[oc, kh, kw]
    a = np.zeros((W_IN, W1, K), np.float32)
    for j in range(W1):
        for kw in range(K):
            a[j + kw, j, kw] = 1.0
    t1 = jnp.einsum("wjk,ohk->hwoj", jnp.asarray(a),
                    params["w1"].astype(f32)).reshape(K, W_IN, C1 * W1)
    b1v = jnp.repeat(params["b1"], W1).reshape(1, C1 * W1)

    # maxpool even-column selector: csel[c, ic*18+jp] = 1 iff c == ic*36 + 2*jp
    csel = np.zeros((CM_COLS, C1 * WP), np.float32)
    for ic in range(C1):
        for jp in range(WP):
            csel[ic * W1 + 2 * jp, ic * WP + jp] = 1.0

    # conv2 -> banded weights: t2[kh, ic*18 + j + kw, oc*14 + j] = w2[oc, ic, kh, kw]
    c = np.zeros((WP, W2, K), np.float32)
    for j in range(W2):
        for kw in range(K):
            c[j + kw, j, kw] = 1.0
    t2 = jnp.einsum("qjk,oihk->hiqoj", jnp.asarray(c),
                    params["w2"].astype(f32)).reshape(K, C1 * WP, C2 * W2)
    b2v = jnp.repeat(params["b2"], W2).reshape(1, C2 * W2)

    # fc1 weights with the (C,H,W) flatten folded in, blocked by conv2 output row io:
    # w1w[io, oc*14+j, o] = fc1_w[oc*112 + io*14 + j, o]
    w1w = jnp.transpose(params["fc1_w"].reshape(C2, H2, W2, NF1),
                        (1, 0, 2, 3)).reshape(H2, C2 * W2, NF1)

    return {
        "t1": t1, "b1v": b1v, "csel": jnp.asarray(csel),
        "t2": t2, "b2v": b2v,
        "w1w": w1w, "fb1": params["fc1_b"].reshape(1, NF1),
        "fw2": params["fc2_w"], "fb2": params["fc2_b"].reshape(1, NF2),
        "fw3": jnp.pad(params["fc3_w"], ((0, 0), (0, OUT_PAD - NF3))),
        "fb3": jnp.pad(params["fc3_b"], (0, OUT_PAD - NF3)).reshape(1, OUT_PAD),
    }


def convnet_forward(x, params):
    """x: (N, 1, 28, 40) float32 -> (N, 4) float32, one fused Pallas kernel."""
    N = x.shape[0]
    xsq = x[:, 0, :, :].astype(jnp.float32)                  # (N, 28, 40)

    # Batch block: multiple of 8 (keeps in-kernel row reshapes tile-aligned),
    # raised up to 128 for large N so every matmul gets a big M dimension.
    bb = min(128, ((max(N, 8) + 7) // 8) * 8)
    n_pad = ((N + bb - 1) // bb) * bb
    if n_pad != N:
        xsq = jnp.pad(xsq, ((0, n_pad - N), (0, 0), (0, 0)))
    xt = jnp.transpose(xsq, (1, 0, 2))                       # (28, n_pad, 40): rows (h, b)

    p = _prep_params(params)

    def const_spec(shape):
        return pl.BlockSpec(shape, lambda n: (0,) * len(shape))

    out = pl.pallas_call(
        fused_convnet_kernel,
        out_shape=jax.ShapeDtypeStruct((n_pad, OUT_PAD), jnp.float32),
        grid=(n_pad // bb,),
        in_specs=[
            pl.BlockSpec((H_IN, bb, W_IN), lambda n: (0, n, 0)),   # x batch block
            const_spec((K, W_IN, C1 * W1)),                        # t1
            const_spec((1, C1 * W1)),                              # b1v
            const_spec((CM_COLS, C1 * WP)),                        # csel
            const_spec((K, C1 * WP, C2 * W2)),                     # t2
            const_spec((1, C2 * W2)),                              # b2v
            const_spec((H2, C2 * W2, NF1)),                        # w1w
            const_spec((1, NF1)),                                  # fc1 bias
            const_spec((NF1, NF2)),                                # fc2 weights
            const_spec((1, NF2)),                                  # fc2 bias
            const_spec((NF2, OUT_PAD)),                            # fc3 weights (padded)
            const_spec((1, OUT_PAD)),                              # fc3 bias (padded)
        ],
        out_specs=pl.BlockSpec((bb, OUT_PAD), lambda n: (n, 0)),
        compiler_params=pltpu.CompilerParams(
            # TODO(synk): on v7x use CORE_PARALLEL / a 2-core core_map for this axis.
            dimension_semantics=("parallel",),
            vmem_limit_bytes=64 * 1024 * 1024),
    )(xt, p["t1"], p["b1v"], p["csel"], p["t2"], p["b2v"],
      p["w1w"], p["fb1"], p["fw2"], p["fb2"], p["fw3"], p["fb3"])
    return out[:N, :NF3]


# ----------------------------- Pure-JAX reference ----------------------------
def reference_forward(x, params):
    dn = ("NCHW", "OIHW", "NCHW")
    y = lax.conv_general_dilated(x, params["w1"][:, None, :, :], (1, 1), "VALID",
                                 dimension_numbers=dn)
    y = jax.nn.relu(y + params["b1"][None, :, None, None])
    y = lax.reduce_window(y, -jnp.inf, lax.max, (1, 1, 2, 2), (1, 1, 2, 2), "VALID")
    y = lax.conv_general_dilated(y, params["w2"], (1, 1), "VALID",
                                 dimension_numbers=dn)
    y = jax.nn.relu(y + params["b2"][None, :, None, None])
    y = y.reshape(y.shape[0], -1)
    y = jax.nn.relu(y @ params["fc1_w"] + params["fc1_b"])
    y = jax.nn.relu(y @ params["fc2_w"] + params["fc2_b"])
    return y @ params["fc3_w"] + params["fc3_b"]


def init_params(key):
    ks = jax.random.split(key, 12)
    f32 = jnp.float32
    return {
        "w1": 0.10 * jax.random.normal(ks[0], (C1, K, K), f32),          # conv1 (O,H,W), I=1
        "b1": 0.10 * jax.random.normal(ks[1], (C1,), f32),
        "w2": 0.05 * jax.random.normal(ks[2], (C2, C1, K, K), f32),      # conv2 OIHW
        "b2": 0.05 * jax.random.normal(ks[3], (C2,), f32),
        "fc1_w": 0.02 * jax.random.normal(ks[4], (C2 * H2 * W2, NF1), f32),
        "fc1_b": 0.02 * jax.random.normal(ks[5], (NF1,), f32),
        "fc2_w": 0.05 * jax.random.normal(ks[6], (NF1, NF2), f32),
        "fc2_b": 0.05 * jax.random.normal(ks[7], (NF2,), f32),
        "fc3_w": 0.05 * jax.random.normal(ks[8], (NF2, NF3), f32),
        "fc3_b": 0.05 * jax.random.normal(ks[9], (NF3,), f32),
    }


if __name__ == "__main__":
    key = jax.random.PRNGKey(0)
    pkey, xkey = jax.random.split(key)
    params = init_params(pkey)

    # Input shape forced by the module's flatten size 16*8*14 -> (H, W) = (28, 40).
    x = jax.random.normal(xkey, (2, 1, H_IN, W_IN), jnp.float32)

    out = jax.block_until_ready(convnet_forward(x, params))
    ref = jax.block_until_ready(reference_forward(x, params))
    assert out.shape == (2, NF3), out.shape
    np.testing.assert_allclose(np.asarray(out), np.asarray(ref), rtol=1e-3, atol=1e-3)

    print("KERNEL_OK")
</pallas_src>

<mosaic_0001>
module attributes {stable_mosaic.version = 11 : i64} {
  func.func @fused_convnet_kernel(%arg0: i32, %arg1: memref<28x8x40xf32, #tpu.memory_space<vmem>>, %arg2: memref<5x40x72xf32, #tpu.memory_space<vmem>>, %arg3: memref<1x72xf32, #tpu.memory_space<vmem>>, %arg4: memref<71x36xf32, #tpu.memory_space<vmem>>, %arg5: memref<5x36x224xf32, #tpu.memory_space<vmem>>, %arg6: memref<1x224xf32, #tpu.memory_space<vmem>>, %arg7: memref<8x224x120xf32, #tpu.memory_space<vmem>>, %arg8: memref<1x120xf32, #tpu.memory_space<vmem>>, %arg9: memref<120x84xf32, #tpu.memory_space<vmem>>, %arg10: memref<1x84xf32, #tpu.memory_space<vmem>>, %arg11: memref<84x128xf32, #tpu.memory_space<vmem>>, %arg12: memref<1x128xf32, #tpu.memory_space<vmem>>, %arg13: memref<8x128xf32, #tpu.memory_space<vmem>>) attributes {dimension_semantics = [#tpu.dimension_semantics<parallel>], iteration_bounds = array<i64: 1>, scalar_prefetch = 0 : i64, scratch_operands = 0 : i64, tpu.core_type = #tpu.core_type<tc>, window_params = [{transform_indices = @transform_0, window_bounds = array<i64: 28, 8, 40>}, {pipeline_mode = #tpu.pipeline_mode<synchronous>, transform_indices = @transform_1, window_bounds = array<i64: 5, 40, 72>}, {pipeline_mode = #tpu.pipeline_mode<synchronous>, transform_indices = @transform_2, window_bounds = array<i64: 1, 72>}, {pipeline_mode = #tpu.pipeline_mode<synchronous>, transform_indices = @transform_3, window_bounds = array<i64: 71, 36>}, {pipeline_mode = #tpu.pipeline_mode<synchronous>, transform_indices = @transform_4, window_bounds = array<i64: 5, 36, 224>}, {pipeline_mode = #tpu.pipeline_mode<synchronous>, transform_indices = @transform_5, window_bounds = array<i64: 1, 224>}, {pipeline_mode = #tpu.pipeline_mode<synchronous>, transform_indices = @transform_6, window_bounds = array<i64: 8, 224, 120>}, {pipeline_mode = #tpu.pipeline_mode<synchronous>, transform_indices = @transform_7, window_bounds = array<i64: 1, 120>}, {pipeline_mode = #tpu.pipeline_mode<synchronous>, transform_indices = @transform_8, window_bounds = array<i64: 120, 84>}, {pipeline_mode = #tpu.pipeline_mode<synchronous>, transform_indices = @transform_9, window_bounds = array<i64: 1, 84>}, {pipeline_mode = #tpu.pipeline_mode<synchronous>, transform_indices = @transform_10, window_bounds = array<i64: 84, 128>}, {pipeline_mode = #tpu.pipeline_mode<synchronous>, transform_indices = @transform_11, window_bounds = array<i64: 1, 128>}, {transform_indices = @transform_12, window_bounds = array<i64: 8, 128>}]} {
    %c0 = arith.constant 0 : index
    %c0_0 = arith.constant 0 : index
    %c0_1 = arith.constant 0 : index
    %0 = vector.load %arg1[%c0, %c0_0, %c0_1] : memref<28x8x40xf32, #tpu.memory_space<vmem>>, vector<28x8x40xf32>
    %1 = vector.shape_cast %0 : vector<28x8x40xf32> to vector<224x40xf32>
    %2 = vector.extract_strided_slice %1 {offsets = [0, 0], sizes = [192, 40], strides = [1, 1]} : vector<224x40xf32> to vector<192x40xf32>
    %c0_2 = arith.constant 0 : index
    %c0_3 = arith.constant 0 : index
    %c0_4 = arith.constant 0 : index
    %3 = vector.load %arg2[%c0_2, %c0_3, %c0_4] : memref<5x40x72xf32, #tpu.memory_space<vmem>>, vector<1x40x72xf32>
    %4 = vector.shape_cast %3 : vector<1x40x72xf32> to vector<40x72xf32>
    %cst = arith.constant dense<0.000000e+00> : vector<192x72xf32>
    %5 = tpu.matmul %2, %4, %cst {dimension_numbers = #tpu.dot_dimension_numbers<[1], [0], [0], [1], [0, 0, 1, 1], [], []>} : vector<192x40xf32>, vector<40x72xf32>, vector<192x72xf32> -> vector<192x72xf32>
    %6 = vector.extract_strided_slice %1 {offsets = [8, 0], sizes = [192, 40], strides = [1, 1]} : vector<224x40xf32> to vector<192x40xf32>
    %c1 = arith.constant 1 : index
    %c0_5 = arith.constant 0 : index
    %c0_6 = arith.constant 0 : index
    %7 = vector.load %arg2[%c1, %c0_5, %c0_6] : memref<5x40x72xf32, #tpu.memory_space<vmem>>, vector<1x40x72xf32>
    %8 = vector.shape_cast %7 : vector<1x40x72xf32> to vector<40x72xf32>
    %cst_7 = arith.constant dense<0.000000e+00> : vector<192x72xf32>
    %9 = tpu.matmul %6, %8, %cst_7 {dimension_numbers = #tpu.dot_dimension_numbers<[1], [0], [0], [1], [0, 0, 1, 1], [], []>} : vector<192x40xf32>, vector<40x72xf32>, vector<192x72xf32> -> vector<192x72xf32>
    %10 = arith.addf %5, %9 : vector<192x72xf32>
    %11 = vector.extract_strided_slice %1 {offsets = [16, 0], sizes = [192, 40], strides = [1, 1]} : vector<224x40xf32> to vector<192x40xf32>
    %c2 = arith.constant 2 : index
    %c0_8 = arith.constant 0 : index
    %c0_9 = arith.constant 0 : index
    %12 = vector.load %arg2[%c2, %c0_8, %c0_9] : memref<5x40x72xf32, #tpu.memory_space<vmem>>, vector<1x40x72xf32>
    %13 = vector.shape_cast %12 : vector<1x40x72xf32> to vector<40x72xf32>
    %cst_10 = arith.constant dense<0.000000e+00> : vector<192x72xf32>
    %14 = tpu.matmul %11, %13, %cst_10 {dimension_numbers = #tpu.dot_dimension_numbers<[1], [0], [0], [1], [0, 0, 1, 1], [], []>} : vector<192x40xf32>, vector<40x72xf32>, vector<192x72xf32> -> vector<192x72xf32>
    %15 = arith.addf %10, %14 : vector<192x72xf32>
    %16 = vector.extract_strided_slice %1 {offsets = [24, 0], sizes = [192, 40], strides = [1, 1]} : vector<224x40xf32> to vector<192x40xf32>
    %c3 = arith.constant 3 : index
    %c0_11 = arith.constant 0 : index
    %c0_12 = arith.constant 0 : index
    %17 = vector.load %arg2[%c3, %c0_11, %c0_12] : memref<5x40x72xf32, #tpu.memory_space<vmem>>, vector<1x40x72xf32>
    %18 = vector.shape_cast %17 : vector<1x40x72xf32> to vector<40x72xf32>
    %cst_13 = arith.constant dense<0.000000e+00> : vector<192x72xf32>
    %19 = tpu.matmul %16, %18, %cst_13 {dimension_numbers = #tpu.dot_dimension_numbers<[1], [0], [0], [1], [0, 0, 1, 1], [], []>} : vector<192x40xf32>, vector<40x72xf32>, vector<192x72xf32> -> vector<192x72xf32>
    %20 = arith.addf %15, %19 : vector<192x72xf32>
    %21 = vector.extract_strided_slice %1 {offsets = [32, 0], sizes = [192, 40], strides = [1, 1]} : vector<224x40xf32> to vector<192x40xf32>
    %c4 = arith.constant 4 : index
    %c0_14 = arith.constant 0 : index
    %c0_15 = arith.constant 0 : index
    %22 = vector.load %arg2[%c4, %c0_14, %c0_15] : memref<5x40x72xf32, #tpu.memory_space<vmem>>, vector<1x40x72xf32>
    %23 = vector.shape_cast %22 : vector<1x40x72xf32> to vector<40x72xf32>
    %cst_16 = arith.constant dense<0.000000e+00> : vector<192x72xf32>
    %24 = tpu.matmul %21, %23, %cst_16 {dimension_numbers = #tpu.dot_dimension_numbers<[1], [0], [0], [1], [0, 0, 1, 1], [], []>} : vector<192x40xf32>, vector<40x72xf32>, vector<192x72xf32> -> vector<192x72xf32>
    %25 = arith.addf %20, %24 : vector<192x72xf32>
    %c0_17 = arith.constant 0 : index
    %c0_18 = arith.constant 0 : index
    %26 = vector.load %arg3[%c0_17, %c0_18] : memref<1x72xf32, #tpu.memory_space<vmem>>, vector<1x72xf32>
    %27 = vector.broadcast %26 : vector<1x72xf32> to vector<192x72xf32>
    %28 = arith.addf %25, %27 : vector<192x72xf32>
    %cst_19 = arith.constant 0.000000e+00 : f32
    %29 = vector.broadcast %cst_19 : f32 to vector<192x72xf32>
    %30 = arith.maximumf %28, %29 : vector<192x72xf32>
    %31 = vector.extract_strided_slice %30 {offsets = [0, 0], sizes = [192, 71], strides = [1, 1]} : vector<192x72xf32> to vector<192x71xf32>
    %32 = vector.extract_strided_slice %30 {offsets = [0, 1], sizes = [192, 71], strides = [1, 1]} : vector<192x72xf32> to vector<192x71xf32>
    %33 = arith.maximumf %31, %32 : vector<192x71xf32>
    %c0_20 = arith.constant 0 : index
    %c0_21 = arith.constant 0 : index
    %34 = vector.load %arg4[%c0_20, %c0_21] : memref<71x36xf32, #tpu.memory_space<vmem>>, vector<71x36xf32>
    %cst_22 = arith.constant dense<0.000000e+00> : vector<192x36xf32>
    %35 = tpu.matmul %33, %34, %cst_22 {dimension_numbers = #tpu.dot_dimension_numbers<[1], [0], [0], [1], [0, 0, 1, 1], [], []>} : vector<192x71xf32>, vector<71x36xf32>, vector<192x36xf32> -> vector<192x36xf32>
    %36 = vector.shape_cast %35 : vector<192x36xf32> to vector<12x16x36xf32>
    %37 = vector.extract_strided_slice %36 {offsets = [0, 0, 0], sizes = [12, 8, 36], strides = [1, 1, 1]} : vector<12x16x36xf32> to vector<12x8x36xf32>
    %38 = vector.extract_strided_slice %36 {offsets = [0, 8, 0], sizes = [12, 8, 36], strides = [1, 1, 1]} : vector<12x16x36xf32> to vector<12x8x36xf32>
    %39 = arith.maximumf %37, %38 : vector<12x8x36xf32>
    %40 = vector.shape_cast %39 : vector<12x8x36xf32> to vector<96x36xf32>
    %41 = vector.extract_strided_slice %40 {offsets = [0, 0], sizes = [64, 36], strides = [1, 1]} : vector<96x36xf32> to vector<64x36xf32>
    %c0_23 = arith.constant 0 : index
    %c0_24 = arith.constant 0 : index
    %c0_25 = arith.constant 0 : index
    %42 = vector.load %arg5[%c0_23, %c0_24, %c0_25] : memref<5x36x224xf32, #tpu.memory_space<vmem>>, vector<1x36x224xf32>
    %43 = vector.shape_cast %42 : vector<1x36x224xf32> to vector<36x224xf32>
    %cst_26 = arith.constant dense<0.000000e+00> : vector<64x224xf32>
    %44 = tpu.matmul %41, %43, %cst_26 {dimension_numbers = #tpu.dot_dimension_numbers<[1], [0], [0], [1], [0, 0, 1, 1], [], []>} : vector<64x36xf32>, vector<36x224xf32>, vector<64x224xf32> -> vector<64x224xf32>
    %45 = vector.extract_strided_slice %40 {offsets = [8, 0], sizes = [64, 36], strides = [1, 1]} : vector<96x36xf32> to vector<64x36xf32>
    %c1_27 = arith.constant 1 : index
    %c0_28 = arith.constant 0 : index
    %c0_29 = arith.constant 0 : index
    %46 = vector.load %arg5[%c1_27, %c0_28, %c0_29] : memref<5x36x224xf32, #tpu.memory_space<vmem>>, vector<1x36x224xf32>
    %47 = vector.shape_cast %46 : vector<1x36x224xf32> to vector<36x224xf32>
    %cst_30 = arith.constant dense<0.000000e+00> : vector<64x224xf32>
    %48 = tpu.matmul %45, %47, %cst_30 {dimension_numbers = #tpu.dot_dimension_numbers<[1], [0], [0], [1], [0, 0, 1, 1], [], []>} : vector<64x36xf32>, vector<36x224xf32>, vector<64x224xf32> -> vector<64x224xf32>
    %49 = arith.addf %44, %48 : vector<64x224xf32>
    %50 = vector.extract_strided_slice %40 {offsets = [16, 0], sizes = [64, 36], strides = [1, 1]} : vector<96x36xf32> to vector<64x36xf32>
    %c2_31 = arith.constant 2 : index
    %c0_32 = arith.constant 0 : index
    %c0_33 = arith.constant 0 : index
    %51 = vector.load %arg5[%c2_31, %c0_32, %c0_33] : memref<5x36x224xf32, #tpu.memory_space<vmem>>, vector<1x36x224xf32>
    %52 = vector.shape_cast %51 : vector<1x36x224xf32> to vector<36x224xf32>
    %cst_34 = arith.constant dense<0.000000e+00> : vector<64x224xf32>
    %53 = tpu.matmul %50, %52, %cst_34 {dimension_numbers = #tpu.dot_dimension_numbers<[1], [0], [0], [1], [0, 0, 1, 1], [], []>} : vector<64x36xf32>, vector<36x224xf32>, vector<64x224xf32> -> vector<64x224xf32>
    %54 = arith.addf %49, %53 : vector<64x224xf32>
    %55 = vector.extract_strided_slice %40 {offsets = [24, 0], sizes = [64, 36], strides = [1, 1]} : vector<96x36xf32> to vector<64x36xf32>
    %c3_35 = arith.constant 3 : index
    %c0_36 = arith.constant 0 : index
    %c0_37 = arith.constant 0 : index
    %56 = vector.load %arg5[%c3_35, %c0_36, %c0_37] : memref<5x36x224xf32, #tpu.memory_space<vmem>>, vector<1x36x224xf32>
    %57 = vector.shape_cast %56 : vector<1x36x224xf32> to vector<36x224xf32>
    %cst_38 = arith.constant dense<0.000000e+00> : vector<64x224xf32>
    %58 = tpu.matmul %55, %57, %cst_38 {dimension_numbers = #tpu.dot_dimension_numbers<[1], [0], [0], [1], [0, 0, 1, 1], [], []>} : vector<64x36xf32>, vector<36x224xf32>, vector<64x224xf32> -> vector<64x224xf32>
    %59 = arith.addf %54, %58 : vector<64x224xf32>
    %60 = vector.extract_strided_slice %40 {offsets = [32, 0], sizes = [64, 36], strides = [1, 1]} : vector<96x36xf32> to vector<64x36xf32>
    %c4_39 = arith.constant 4 : index
    %c0_40 = arith.constant 0 : index
    %c0_41 = arith.constant 0 : index
    %61 = vector.load %arg5[%c4_39, %c0_40, %c0_41] : memref<5x36x224xf32, #tpu.memory_space<vmem>>, vector<1x36x224xf32>
    %62 = vector.shape_cast %61 : vector<1x36x224xf32> to vector<36x224xf32>
    %cst_42 = arith.constant dense<0.000000e+00> : vector<64x224xf32>
    %63 = tpu.matmul %60, %62, %cst_42 {dimension_numbers = #tpu.dot_dimension_numbers<[1], [0], [0], [1], [0, 0, 1, 1], [], []>} : vector<64x36xf32>, vector<36x224xf32>, vector<64x224xf32> -> vector<64x224xf32>
    %64 = arith.addf %59, %63 : vector<64x224xf32>
    %c0_43 = arith.constant 0 : index
    %c0_44 = arith.constant 0 : index
    %65 = vector.load %arg6[%c0_43, %c0_44] : memref<1x224xf32, #tpu.memory_space<vmem>>, vector<1x224xf32>
    %66 = vector.broadcast %65 : vector<1x224xf32> to vector<64x224xf32>
    %67 = arith.addf %64, %66 : vector<64x224xf32>
    %cst_45 = arith.constant 0.000000e+00 : f32
    %68 = vector.broadcast %cst_45 : f32 to vector<64x224xf32>
    %69 = arith.maximumf %67, %68 : vector<64x224xf32>
    %70 = vector.extract_strided_slice %69 {offsets = [0, 0], sizes = [8, 224], strides = [1, 1]} : vector<64x224xf32> to vector<8x224xf32>
    %c0_46 = arith.constant 0 : index
    %c0_47 = arith.constant 0 : index
    %c0_48 = arith.constant 0 : index
    %71 = vector.load %arg7[%c0_46, %c0_47, %c0_48] : memref<8x224x120xf32, #tpu.memory_space<vmem>>, vector<1x224x120xf32>
    %72 = vector.shape_cast %71 : vector<1x224x120xf32> to vector<224x120xf32>
    %cst_49 = arith.constant dense<0.000000e+00> : vector<8x120xf32>
    %73 = tpu.matmul %70, %72, %cst_49 {dimension_numbers = #tpu.dot_dimension_numbers<[1], [0], [0], [1], [0, 0, 1, 1], [], []>} : vector<8x224xf32>, vector<224x120xf32>, vector<8x120xf32> -> vector<8x120xf32>
    %74 = vector.extract_strided_slice %69 {offsets = [8, 0], sizes = [8, 224], strides = [1, 1]} : vector<64x224xf32> to vector<8x224xf32>
    %c1_50 = arith.constant 1 : index
    %c0_51 = arith.constant 0 : index
    %c0_52 = arith.constant 0 : index
    %75 = vector.load %arg7[%c1_50, %c0_51, %c0_52] : memref<8x224x120xf32, #tpu.memory_space<vmem>>, vector<1x224x120xf32>
    %76 = vector.shape_cast %75 : vector<1x224x120xf32> to vector<224x120xf32>
    %cst_53 = arith.constant dense<0.000000e+00> : vector<8x120xf32>
    %77 = tpu.matmul %74, %76, %cst_53 {dimension_numbers = #tpu.dot_dimension_numbers<[1], [0], [0], [1], [0, 0, 1, 1], [], []>} : vector<8x224xf32>, vector<224x120xf32>, vector<8x120xf32> -> vector<8x120xf32>
    %78 = arith.addf %73, %77 : vector<8x120xf32>
    %79 = vector.extract_strided_slice %69 {offsets = [16, 0], sizes = [8, 224], strides = [1, 1]} : vector<64x224xf32> to vector<8x224xf32>
    %c2_54 = arith.constant 2 : index
    %c0_55 = arith.constant 0 : index
    %c0_56 = arith.constant 0 : index
    %80 = vector.load %arg7[%c2_54, %c0_55, %c0_56] : memref<8x224x120xf32, #tpu.memory_space<vmem>>, vector<1x224x120xf32>
    %81 = vector.shape_cast %80 : vector<1x224x120xf32> to vector<224x120xf32>
    %cst_57 = arith.constant dense<0.000000e+00> : vector<8x120xf32>
    %82 = tpu.matmul %79, %81, %cst_57 {dimension_numbers = #tpu.dot_dimension_numbers<[1], [0], [0], [1], [0, 0, 1, 1], [], []>} : vector<8x224xf32>, vector<224x120xf32>, vector<8x120xf32> -> vector<8x120xf32>
    %83 = arith.addf %78, %82 : vector<8x120xf32>
    %84 = vector.extract_strided_slice %69 {offsets = [24, 0], sizes = [8, 224], strides = [1, 1]} : vector<64x224xf32> to vector<8x224xf32>
    %c3_58 = arith.constant 3 : index
    %c0_59 = arith.constant 0 : index
    %c0_60 = arith.constant 0 : index
    %85 = vector.load %arg7[%c3_58, %c0_59, %c0_60] : memref<8x224x120xf32, #tpu.memory_space<vmem>>, vector<1x224x120xf32>
    %86 = vector.shape_cast %85 : vector<1x224x120xf32> to vector<224x120xf32>
    %cst_61 = arith.constant dense<0.000000e+00> : vector<8x120xf32>
    %87 = tpu.matmul %84, %86, %cst_61 {dimension_numbers = #tpu.dot_dimension_numbers<[1], [0], [0], [1], [0, 0, 1, 1], [], []>} : vector<8x224xf32>, vector<224x120xf32>, vector<8x120xf32> -> vector<8x120xf32>
    %88 = arith.addf %83, %87 : vector<8x120xf32>
    %89 = vector.extract_strided_slice %69 {offsets = [32, 0], sizes = [8, 224], strides = [1, 1]} : vector<64x224xf32> to vector<8x224xf32>
    %c4_62 = arith.constant 4 : index
    %c0_63 = arith.constant 0 : index
    %c0_64 = arith.constant 0 : index
    %90 = vector.load %arg7[%c4_62, %c0_63, %c0_64] : memref<8x224x120xf32, #tpu.memory_space<vmem>>, vector<1x224x120xf32>
    %91 = vector.shape_cast %90 : vector<1x224x120xf32> to vector<224x120xf32>
    %cst_65 = arith.constant dense<0.000000e+00> : vector<8x120xf32>
    %92 = tpu.matmul %89, %91, %cst_65 {dimension_numbers = #tpu.dot_dimension_numbers<[1], [0], [0], [1], [0, 0, 1, 1], [], []>} : vector<8x224xf32>, vector<224x120xf32>, vector<8x120xf32> -> vector<8x120xf32>
    %93 = arith.addf %88, %92 : vector<8x120xf32>
    %94 = vector.extract_strided_slice %69 {offsets = [40, 0], sizes = [8, 224], strides = [1, 1]} : vector<64x224xf32> to vector<8x224xf32>
    %c5 = arith.constant 5 : index
    %c0_66 = arith.constant 0 : index
    %c0_67 = arith.constant 0 : index
    %95 = vector.load %arg7[%c5, %c0_66, %c0_67] : memref<8x224x120xf32, #tpu.memory_space<vmem>>, vector<1x224x120xf32>
    %96 = vector.shape_cast %95 : vector<1x224x120xf32> to vector<224x120xf32>
    %cst_68 = arith.constant dense<0.000000e+00> : vector<8x120xf32>
    %97 = tpu.matmul %94, %96, %cst_68 {dimension_numbers = #tpu.dot_dimension_numbers<[1], [0], [0], [1], [0, 0, 1, 1], [], []>} : vector<8x224xf32>, vector<224x120xf32>, vector<8x120xf32> -> vector<8x120xf32>
    %98 = arith.addf %93, %97 : vector<8x120xf32>
    %99 = vector.extract_strided_slice %69 {offsets = [48, 0], sizes = [8, 224], strides = [1, 1]} : vector<64x224xf32> to vector<8x224xf32>
    %c6 = arith.constant 6 : index
    %c0_69 = arith.constant 0 : index
    %c0_70 = arith.constant 0 : index
    %100 = vector.load %arg7[%c6, %c0_69, %c0_70] : memref<8x224x120xf32, #tpu.memory_space<vmem>>, vector<1x224x120xf32>
    %101 = vector.shape_cast %100 : vector<1x224x120xf32> to vector<224x120xf32>
    %cst_71 = arith.constant dense<0.000000e+00> : vector<8x120xf32>
    %102 = tpu.matmul %99, %101, %cst_71 {dimension_numbers = #tpu.dot_dimension_numbers<[1], [0], [0], [1], [0, 0, 1, 1], [], []>} : vector<8x224xf32>, vector<224x120xf32>, vector<8x120xf32> -> vector<8x120xf32>
    %103 = arith.addf %98, %102 : vector<8x120xf32>
    %104 = vector.extract_strided_slice %69 {offsets = [56, 0], sizes = [8, 224], strides = [1, 1]} : vector<64x224xf32> to vector<8x224xf32>
    %c7 = arith.constant 7 : index
    %c0_72 = arith.constant 0 : index
    %c0_73 = arith.constant 0 : index
    %105 = vector.load %arg7[%c7, %c0_72, %c0_73] : memref<8x224x120xf32, #tpu.memory_space<vmem>>, vector<1x224x120xf32>
    %106 = vector.shape_cast %105 : vector<1x224x120xf32> to vector<224x120xf32>
    %cst_74 = arith.constant dense<0.000000e+00> : vector<8x120xf32>
    %107 = tpu.matmul %104, %106, %cst_74 {dimension_numbers = #tpu.dot_dimension_numbers<[1], [0], [0], [1], [0, 0, 1, 1], [], []>} : vector<8x224xf32>, vector<224x120xf32>, vector<8x120xf32> -> vector<8x120xf32>
    %108 = arith.addf %103, %107 : vector<8x120xf32>
    %c0_75 = arith.constant 0 : index
    %c0_76 = arith.constant 0 : index
    %109 = vector.load %arg8[%c0_75, %c0_76] : memref<1x120xf32, #tpu.memory_space<vmem>>, vector<1x120xf32>
    %110 = vector.broadcast %109 : vector<1x120xf32> to vector<8x120xf32>
    %111 = arith.addf %108, %110 : vector<8x120xf32>
    %cst_77 = arith.constant 0.000000e+00 : f32
    %112 = vector.broadcast %cst_77 : f32 to vector<8x120xf32>
    %113 = arith.maximumf %111, %112 : vector<8x120xf32>
    %c0_78 = arith.constant 0 : index
    %c0_79 = arith.constant 0 : index
    %114 = vector.load %arg9[%c0_78, %c0_79] : memref<120x84xf32, #tpu.memory_space<vmem>>, vector<120x84xf32>
    %cst_80 = arith.constant dense<0.000000e+00> : vector<8x84xf32>
    %115 = tpu.matmul %113, %114, %cst_80 {dimension_numbers = #tpu.dot_dimension_numbers<[1], [0], [0], [1], [0, 0, 1, 1], [], []>} : vector<8x120xf32>, vector<120x84xf32>, vector<8x84xf32> -> vector<8x84xf32>
    %c0_81 = arith.constant 0 : index
    %c0_82 = arith.constant 0 : index
    %116 = vector.load %arg10[%c0_81, %c0_82] : memref<1x84xf32, #tpu.memory_space<vmem>>, vector<1x84xf32>
    %117 = vector.broadcast %116 : vector<1x84xf32> to vector<8x84xf32>
    %118 = arith.addf %115, %117 : vector<8x84xf32>
    %cst_83 = arith.constant 0.000000e+00 : f32
    %119 = vector.broadcast %cst_83 : f32 to vector<8x84xf32>
    %120 = arith.maximumf %118, %119 : vector<8x84xf32>
    %c0_84 = arith.constant 0 : index
    %c0_85 = arith.constant 0 : index
    %121 = vector.load %arg11[%c0_84, %c0_85] : memref<84x128xf32, #tpu.memory_space<vmem>>, vector<84x128xf32>
    %cst_86 = arith.constant dense<0.000000e+00> : vector<8x128xf32>
    %122 = tpu.matmul %120, %121, %cst_86 {dimension_numbers = #tpu.dot_dimension_numbers<[1], [0], [0], [1], [0, 0, 1, 1], [], []>} : vector<8x84xf32>, vector<84x128xf32>, vector<8x128xf32> -> vector<8x128xf32>
    %c0_87 = arith.constant 0 : index
    %c0_88 = arith.constant 0 : index
    %123 = vector.load %arg12[%c0_87, %c0_88] : memref<1x128xf32, #tpu.memory_space<vmem>>, vector<1x128xf32>
    %124 = vector.broadcast %123 : vector<1x128xf32> to vector<8x128xf32>
    %125 = arith.addf %122, %124 : vector<8x128xf32>
    %c0_89 = arith.constant 0 : index
    %c0_90 = arith.constant 0 : index
    %126 = vector.load %arg13[%c0_89, %c0_90] : memref<8x128xf32, #tpu.memory_space<vmem>>, vector<8x128xf32>
    tpu.vector_store %arg13[%c0_89, %c0_90], %125 {strides = array<i32>} : memref<8x128xf32, #tpu.memory_space<vmem>>, vector<8x128xf32>,
    return
  }
  func.func @transform_0(%arg0: i32) -> (i32, i32, i32) {
    %c0_i32 = arith.constant 0 : i32
    %c0_i32_0 = arith.constant 0 : i32
    %c0_i32_1 = arith.constant 0 : i32
    return %c0_i32, %arg0, %c0_i32_0 : i32, i32, i32
  }
  func.func @transform_1(%arg0: i32) -> (i32, i32, i32) {
    %c0_i32 = arith.constant 0 : i32
    %c0_i32_0 = arith.constant 0 : i32
    %c0_i32_1 = arith.constant 0 : i32
    %c0_i32_2 = arith.constant 0 : i32
    return %c0_i32, %c0_i32_0, %c0_i32_1 : i32, i32, i32
  }
  func.func @transform_2(%arg0: i32) -> (i32, i32) {
    %c0_i32 = arith.constant 0 : i32
    %c0_i32_0 = arith.constant 0 : i32
    %c0_i32_1 = arith.constant 0 : i32
    return %c0_i32, %c0_i32_0 : i32, i32
  }
  func.func @transform_3(%arg0: i32) -> (i32, i32) {
    %c0_i32 = arith.constant 0 : i32
    %c0_i32_0 = arith.constant 0 : i32
    %c0_i32_1 = arith.constant 0 : i32
    return %c0_i32, %c0_i32_0 : i32, i32
  }
  func.func @transform_4(%arg0: i32) -> (i32, i32, i32) {
    %c0_i32 = arith.constant 0 : i32
    %c0_i32_0 = arith.constant 0 : i32
    %c0_i32_1 = arith.constant 0 : i32
    %c0_i32_2 = arith.constant 0 : i32
    return %c0_i32, %c0_i32_0, %c0_i32_1 : i32, i32, i32
  }
  func.func @transform_5(%arg0: i32) -> (i32, i32) {
    %c0_i32 = arith.constant 0 : i32
    %c0_i32_0 = arith.constant 0 : i32
    %c0_i32_1 = arith.constant 0 : i32
    return %c0_i32, %c0_i32_0 : i32, i32
  }
  func.func @transform_6(%arg0: i32) -> (i32, i32, i32) {
    %c0_i32 = arith.constant 0 : i32
    %c0_i32_0 = arith.constant 0 : i32
    %c0_i32_1 = arith.constant 0 : i32
    %c0_i32_2 = arith.constant 0 : i32
    return %c0_i32, %c0_i32_0, %c0_i32_1 : i32, i32, i32
  }
  func.func @transform_7(%arg0: i32) -> (i32, i32) {
    %c0_i32 = arith.constant 0 : i32
    %c0_i32_0 = arith.constant 0 : i32
    %c0_i32_1 = arith.constant 0 : i32
    return %c0_i32, %c0_i32_0 : i32, i32
  }
  func.func @transform_8(%arg0: i32) -> (i32, i32) {
    %c0_i32 = arith.constant 0 : i32
    %c0_i32_0 = arith.constant 0 : i32
    %c0_i32_1 = arith.constant 0 : i32
    return %c0_i32, %c0_i32_0 : i32, i32
  }
  func.func @transform_9(%arg0: i32) -> (i32, i32) {
    %c0_i32 = arith.constant 0 : i32
    %c0_i32_0 = arith.constant 0 : i32
    %c0_i32_1 = arith.constant 0 : i32
    return %c0_i32, %c0_i32_0 : i32, i32
  }
  func.func @transform_10(%arg0: i32) -> (i32, i32) {
    %c0_i32 = arith.constant 0 : i32
    %c0_i32_0 = arith.constant 0 : i32
    %c0_i32_1 = arith.constant 0 : i32
    return %c0_i32, %c0_i32_0 : i32, i32
  }
  func.func @transform_11(%arg0: i32) -> (i32, i32) {
    %c0_i32 = arith.constant 0 : i32
    %c0_i32_0 = arith.constant 0 : i32
    %c0_i32_1 = arith.constant 0 : i32
    return %c0_i32, %c0_i32_0 : i32, i32
  }
  func.func @transform_12(%arg0: i32) -> (i32, i32) {
    %c0_i32 = arith.constant 0 : i32
    %c0_i32_0 = arith.constant 0 : i32
    return %arg0, %c0_i32 : i32, i32
  }
}

</mosaic_0001>

<llo_original>
// kernel: tpu_custom_call.1
$region0: #{tpu_custom_call.1}
  #allocation0 [shape = 'u32[]', space=smem, size = 0x4, offset = 0x4, fixed_abs, tag = 'smem constant byte address 0x4 - core index']
  #allocation1 [shape = 'u32[144,128]{1,0:T(1,128)}', space=vmem, size = 0x12000, scoped, tag = 'internal scratch']
  %s0 = inlined_call_operand.hbm [shape: f32[28,8,40], index: 0, kind: input, shape index: {}]
  %s1 = inlined_call_operand.hbm [shape: f32[5,40,72], index: 1, kind: input, shape index: {}]
  %s2 = inlined_call_operand.hbm [shape: f32[1,72], index: 2, kind: input, shape index: {}]
  %s3 = inlined_call_operand.hbm [shape: f32[71,36], index: 3, kind: input, shape index: {}]
  %s4 = inlined_call_operand.hbm [shape: f32[5,36,224], index: 4, kind: input, shape index: {}]
  %s5 = inlined_call_operand.hbm [shape: f32[1,224], index: 5, kind: input, shape index: {}]
  %s6 = inlined_call_operand.hbm [shape: f32[8,224,120], index: 6, kind: input, shape index: {}]
  %s7 = inlined_call_operand.hbm [shape: f32[1,120], index: 7, kind: input, shape index: {}]
  %s8 = inlined_call_operand.hbm [shape: f32[120,84], index: 8, kind: input, shape index: {}]
  %s9 = inlined_call_operand.hbm [shape: f32[1,84], index: 9, kind: input, shape index: {}]
  %s10 = inlined_call_operand.hbm [shape: f32[84,128], index: 10, kind: input, shape index: {}]
  %s11 = inlined_call_operand.hbm [shape: f32[1,128], index: 11, kind: input, shape index: {}]
  %s12 = inlined_call_operand.hbm [shape: f32[8,128], index: 12, kind: output, shape index: {}]
  %s13 = sld [smem:[#allocation0]]
  $region106: #{tpu_custom_call.1} parent=0
    _
  %s15 = ssub.s32 1, %s13
  %s16 = scalar_select 0, %s15, %s13
  $region1: #{tpu_custom_call.1} parent=0
    #allocation2 [shape = 'u8[114688]{0}', space=vmem, size = 0x1c000, scoped, tag = 'input window, operand 0, single buffered']
    #allocation3 [shape = 's32[1]{0}', space=sflag, size = 0x4, scoped, tag = 'scoped memory for tpu_custom_call.1']
    #allocation4 [shape = 's32[1]{0}', space=sflag, size = 0x4, scoped, tag = 'scoped memory for tpu_custom_call.1']
    #allocation5 [shape = 'u8[102400]{0}', space=vmem, size = 0x19000, scoped, tag = 'input window, operand 1, single buffered']
    #allocation6 [shape = 's32[1]{0}', space=sflag, size = 0x4, scoped, tag = 'scoped memory for tpu_custom_call.1']
    #allocation7 [shape = 'u8[512]{0}', space=vmem, size = 0x400, scoped, tag = 'input window, operand 2, single buffered']
    #allocation8 [shape = 'u8[36864]{0}', space=vmem, size = 0x9000, scoped, tag = 'input window, operand 3, single buffered']
    #allocation9 [shape = 's32[1]{0}', space=sflag, size = 0x4, scoped, tag = 'scoped memory for tpu_custom_call.1']
    #allocation10 [shape = 'u8[204800]{0}', space=vmem, size = 0x32000, scoped, tag = 'input window, operand 4, single buffered']
    #allocation11 [shape = 'u8[1024]{0}', space=vmem, size = 0x400, scoped, tag = 'input window, operand 5, single buffered']
    #allocation12 [shape = 's32[1]{0}', space=sflag, size = 0x4, scoped, tag = 'scoped memory for tpu_custom_call.1']
    #allocation13 [shape = 'u8[917504]{0}', space=vmem, size = 0xe0000, scoped, tag = 'input window, operand 6, single buffered']
    #allocation14 [shape = 'u8[512]{0}', space=vmem, size = 0x400, scoped, tag = 'input window, operand 7, single buffered']
    #allocation15 [shape = 's32[1]{0}', space=sflag, size = 0x4, scoped, tag = 'scoped memory for tpu_custom_call.1']
    #allocation16 [shape = 'u8[61440]{0}', space=vmem, size = 0xf000, scoped, tag = 'input window, operand 8, single buffered']
    #allocation17 [shape = 'u8[512]{0}', space=vmem, size = 0x400, scoped, tag = 'input window, operand 9, single buffered']
    #allocation18 [shape = 's32[1]{0}', space=sflag, size = 0x4, scoped, tag = 'scoped memory for tpu_custom_call.1']
    #allocation19 [shape = 'u8[45056]{0}', space=vmem, size = 0xb000, scoped, tag = 'input window, operand 10, single buffered']
    #allocation20 [shape = 'u8[512]{0}', space=vmem, size = 0x400, scoped, tag = 'input window, operand 11, single buffered']
    #allocation21 [shape = 's32[1]{0}', space=sflag, size = 0x4, scoped, tag = 'scoped memory for tpu_custom_call.1']
    #allocation22 [shape = 'u8[4096]{0}', space=vmem, size = 0x1000, scoped, tag = 'output window, operand 0, single buffered']
    %17 = vsyncpa [#allocation3], 0
    %18 = vsyncpa [#allocation6], 0
    %19 = vsyncpa [#allocation9], 0
    %20 = vsyncpa [#allocation12], 0
    %21 = vsyncpa [#allocation15], 0
    %22 = vsyncpa [#allocation18], 0
    %23 = vsyncpa [#allocation21], 0
    %24 = vsyncpa [#allocation4], 0
    // Predicated region
    $region2: #{tpu_custom_call.1} parent=1 // pred_check
      _
    $region3: #{tpu_custom_call.1} parent=1 // pred_check_branch
      %26 = sbr.rel (0) target = $region5
    $region4: #{tpu_custom_call.1} parent=1 // pred_region
      %s28 = ssub.s32 3584, 3584
      %29 = vsyncadd [#allocation3], %s28
      %s30 = sshll.u32 [#allocation2], 4
      %s31 = int_to_ptr.vmem [resolvable:$true] %s30
      %36 = dma.hbm_to_vmem [thread:$0]  %s0, 3584, %s31, [#allocation3], 128, 128, 8
    $region5: #{tpu_custom_call.1} parent=1 // pred_fallthru
      _
    // Predicated region
    $region6: #{tpu_custom_call.1} parent=1 // pred_check
      _
    $region7: #{tpu_custom_call.1} parent=1 // pred_check_branch
      %38 = sbr.rel (0) target = $region9
    $region8: #{tpu_custom_call.1} parent=1 // pred_region
      %s40 = ssub.s32 3200, 3200
      %41 = vsyncadd [#allocation6], %s40
      %s42 = sshll.u32 [#allocation5], 4
      %s43 = int_to_ptr.vmem [resolvable:$true] %s42
      %48 = dma.hbm_to_vmem [thread:$0]  %s1, 3200, %s43, [#allocation6], 128, 128, 8
    $region9: #{tpu_custom_call.1} parent=1 // pred_fallthru
      _
    // Predicated region
    $region10: #{tpu_custom_call.1} parent=1 // pred_check
      _
    $region11: #{tpu_custom_call.1} parent=1 // pred_check_branch
      %50 = sbr.rel (0) target = $region13
    $region12: #{tpu_custom_call.1} parent=1 // pred_region
      %s52 = ssub.s32 16, 16
      %53 = vsyncadd [#allocation6], %s52
      %s55 = sshll.u32 [#allocation7], 4
      %s56 = int_to_ptr.vmem [resolvable:$true] %s55
      %58 = dma.hbm_to_vmem [thread:$0]  %s2, 16, %s56, [#allocation6]
    $region13: #{tpu_custom_call.1} parent=1 // pred_fallthru
      _
    // Predicated region
    $region14: #{tpu_custom_call.1} parent=1 // pred_check
      _
    $region15: #{tpu_custom_call.1} parent=1 // pred_check_branch
      %60 = sbr.rel (0) target = $region17
    $region16: #{tpu_custom_call.1} parent=1 // pred_region
      %s62 = ssub.s32 1152, 1152
      %63 = vsyncadd [#allocation9], %s62
      %s64 = sshll.u32 [#allocation8], 4
      %s65 = int_to_ptr.vmem [resolvable:$true] %s64
      %70 = dma.hbm_to_vmem [thread:$0]  %s3, 1152, %s65, [#allocation9], 128, 128, 8
    $region17: #{tpu_custom_call.1} parent=1 // pred_fallthru
      _
    // Predicated region
    $region18: #{tpu_custom_call.1} parent=1 // pred_check
      _
    $region19: #{tpu_custom_call.1} parent=1 // pred_check_branch
      %72 = sbr.rel (0) target = $region21
    $region20: #{tpu_custom_call.1} parent=1 // pred_region
      %s74 = ssub.s32 6400, 6400
      %75 = vsyncadd [#allocation9], %s74
      %s76 = sshll.u32 [#allocation10], 4
      %s77 = int_to_ptr.vmem [resolvable:$true] %s76
      %82 = dma.hbm_to_vmem [thread:$0]  %s4, 6400, %s77, [#allocation9], 256, 256, 16
    $region21: #{tpu_custom_call.1} parent=1 // pred_fallthru
      _
    // Predicated region
    $region22: #{tpu_custom_call.1} parent=1 // pred_check
      _
    $region23: #{tpu_custom_call.1} parent=1 // pred_check_branch
      %84 = sbr.rel (0) target = $region25
    $region24: #{tpu_custom_call.1} parent=1 // pred_region
      %s86 = ssub.s32 32, 32
      %87 = vsyncadd [#allocation12], %s86
      %s89 = sshll.u32 [#allocation11], 4
      %s90 = int_to_ptr.vmem [resolvable:$true] %s89
      %92 = dma.hbm_to_vmem [thread:$0]  %s5, 32, %s90, [#allocation12]
    $region25: #{tpu_custom_call.1} parent=1 // pred_fallthru
      _
    // Predicated region
    $region26: #{tpu_custom_call.1} parent=1 // pred_check
      _
    $region27: #{tpu_custom_call.1} parent=1 // pred_check_branch
      %94 = sbr.rel (0) target = $region29
    $region28: #{tpu_custom_call.1} parent=1 // pred_region
      %s96 = ssub.s32 28672, 28672
      %97 = vsyncadd [#allocation12], %s96
      %s98 = sshll.u32 [#allocation13], 4
      %s99 = int_to_ptr.vmem [resolvable:$true] %s98
      %104 = dma.hbm_to_vmem [thread:$0]  %s6, 28672, %s99, [#allocation12], 128, 128, 8
    $region29: #{tpu_custom_call.1} parent=1 // pred_fallthru
      _
    // Predicated region
    $region30: #{tpu_custom_call.1} parent=1 // pred_check
      _
    $region31: #{tpu_custom_call.1} parent=1 // pred_check_branch
      %106 = sbr.rel (0) target = $region33
    $region32: #{tpu_custom_call.1} parent=1 // pred_region
      %s108 = ssub.s32 16, 16
      %109 = vsyncadd [#allocation15], %s108
      %s111 = sshll.u32 [#allocation14], 4
      %s112 = int_to_ptr.vmem [resolvable:$true] %s111
      %114 = dma.hbm_to_vmem [thread:$0]  %s7, 16, %s112, [#allocation15]
    $region33: #{tpu_custom_call.1} parent=1 // pred_fallthru
      _
    // Predicated region
    $region34: #{tpu_custom_call.1} parent=1 // pred_check
      _
    $region35: #{tpu_custom_call.1} parent=1 // pred_check_branch
      %116 = sbr.rel (0) target = $region37
    $region36: #{tpu_custom_call.1} parent=1 // pred_region
      %s118 = ssub.s32 1920, 1920
      %119 = vsyncadd [#allocation15], %s118
      %s120 = sshll.u32 [#allocation16], 4
      %s121 = int_to_ptr.vmem [resolvable:$true] %s120
      %126 = dma.hbm_to_vmem [thread:$0]  %s8, 1920, %s121, [#allocation15], 128, 128, 8
    $region37: #{tpu_custom_call.1} parent=1 // pred_fallthru
      _
    // Predicated region
    $region38: #{tpu_custom_call.1} parent=1 // pred_check
      _
    $region39: #{tpu_custom_call.1} parent=1 // pred_check_branch
      %128 = sbr.rel (0) target = $region41
    $region40: #{tpu_custom_call.1} parent=1 // pred_region
      %s130 = ssub.s32 16, 16
      %131 = vsyncadd [#allocation18], %s130
      %s133 = sshll.u32 [#allocation17], 4
      %s134 = int_to_ptr.vmem [resolvable:$true] %s133
      %136 = dma.hbm_to_vmem [thread:$0]  %s9, 16, %s134, [#allocation18]
    $region41: #{tpu_custom_call.1} parent=1 // pred_fallthru
      _
    // Predicated region
    $region42: #{tpu_custom_call.1} parent=1 // pred_check
      _
    $region43: #{tpu_custom_call.1} parent=1 // pred_check_branch
      %138 = sbr.rel (0) target = $region45
    $region44: #{tpu_custom_call.1} parent=1 // pred_region
      %s140 = ssub.s32 1408, 1408
      %141 = vsyncadd [#allocation18], %s140
      %s142 = sshll.u32 [#allocation19], 4
      %s143 = int_to_ptr.vmem [resolvable:$true] %s142
      %148 = dma.hbm_to_vmem [thread:$0]  %s10, 1408, %s143, [#allocation18], 128, 128, 8
    $region45: #{tpu_custom_call.1} parent=1 // pred_fallthru
      _
    // Predicated region
    $region46: #{tpu_custom_call.1} parent=1 // pred_check
      _
    $region47: #{tpu_custom_call.1} parent=1 // pred_check_branch
      %150 = sbr.rel (0) target = $region49
    $region48: #{tpu_custom_call.1} parent=1 // pred_region
      %s152 = ssub.s32 16, 16
      %153 = vsyncadd [#allocation21], %s152
      %s155 = sshll.u32 [#allocation20], 4
      %s156 = int_to_ptr.vmem [resolvable:$true] %s155
      %158 = dma.hbm_to_vmem [thread:$0]  %s11, 16, %s156, [#allocation21]
    $region49: #{tpu_custom_call.1} parent=1 // pred_fallthru
      _
    // Predicated region
    $region50: #{tpu_custom_call.1} parent=1 // pred_check
      _
    $region51: #{tpu_custom_call.1} parent=1 // pred_check_branch
      %160 = sbr.rel (0) target = $region53
    $region52: #{tpu_custom_call.1} parent=1 // pred_region
      %161 = dma.done [#allocation3], 3584
    $region53: #{tpu_custom_call.1} parent=1 // pred_fallthru
      _
    // Predicated region
    $region54: #{tpu_custom_call.1} parent=1 // pred_check
      _
    $region55: #{tpu_custom_call.1} parent=1 // pred_check_branch
      %163 = sbr.rel (0) target = $region57
    $region56: #{tpu_custom_call.1} parent=1 // pred_region
      %164 = dma.done [#allocation6], 3200
    $region57: #{tpu_custom_call.1} parent=1 // pred_fallthru
      _
    // Predicated region
    $region58: #{tpu_custom_call.1} parent=1 // pred_check
      _
    $region59: #{tpu_custom_call.1} parent=1 // pred_check_branch
      %166 = sbr.rel (0) target = $region61
    $region60: #{tpu_custom_call.1} parent=1 // pred_region
      %167 = dma.done [#allocation6], 16
    $region61: #{tpu_custom_call.1} parent=1 // pred_fallthru
      _
    // Predicated region
    $region62: #{tpu_custom_call.1} parent=1 // pred_check
      _
    $region63: #{tpu_custom_call.1} parent=1 // pred_check_branch
      %169 = sbr.rel (0) target = $region65
    $region64: #{tpu_custom_call.1} parent=1 // pred_region
      %170 = dma.done [#allocation9], 1152
    $region65: #{tpu_custom_call.1} parent=1 // pred_fallthru
      _
    // Predicated region
    $region66: #{tpu_custom_call.1} parent=1 // pred_check
      _
    $region67: #{tpu_custom_call.1} parent=1 // pred_check_branch
      %172 = sbr.rel (0) target = $region69
    $region68: #{tpu_custom_call.1} parent=1 // pred_region
      %173 = dma.done [#allocation9], 6400
    $region69: #{tpu_custom_call.1} parent=1 // pred_fallthru
      _
    // Predicated region
    $region70: #{tpu_custom_call.1} parent=1 // pred_check
      _
    $region71: #{tpu_custom_call.1} parent=1 // pred_check_branch
      %175 = sbr.rel (0) target = $region73
    $region72: #{tpu_custom_call.1} parent=1 // pred_region
      %176 = dma.done [#allocation12], 32
    $region73: #{tpu_custom_call.1} parent=1 // pred_fallthru
      _
    // Predicated region
    $region74: #{tpu_custom_call.1} parent=1 // pred_check
      _
    $region75: #{tpu_custom_call.1} parent=1 // pred_check_branch
      %178 = sbr.rel (0) target = $region77
    $region76: #{tpu_custom_call.1} parent=1 // pred_region
      %179 = dma.done [#allocation12], 28672
    $region77: #{tpu_custom_call.1} parent=1 // pred_fallthru
      _
    // Predicated region
    $region78: #{tpu_custom_call.1} parent=1 // pred_check
      _
    $region79: #{tpu_custom_call.1} parent=1 // pred_check_branch
      %181 = sbr.rel (0) target = $region81
    $region80: #{tpu_custom_call.1} parent=1 // pred_region
      %182 = dma.done [#allocation15], 16
    $region81: #{tpu_custom_call.1} parent=1 // pred_fallthru
      _
    // Predicated region
    $region82: #{tpu_custom_call.1} parent=1 // pred_check
      _
    $region83: #{tpu_custom_call.1} parent=1 // pred_check_branch
      %184 = sbr.rel (0) target = $region85
    $region84: #{tpu_custom_call.1} parent=1 // pred_region
      %185 = dma.done [#allocation15], 1920
    $region85: #{tpu_custom_call.1} parent=1 // pred_fallthru
      _
    // Predicated region
    $region86: #{tpu_custom_call.1} parent=1 // pred_check
      _
    $region87: #{tpu_custom_call.1} parent=1 // pred_check_branch
      %187 = sbr.rel (0) target = $region89
    $region88: #{tpu_custom_call.1} parent=1 // pred_region
      %188 = dma.done [#allocation18], 16
    $region89: #{tpu_custom_call.1} parent=1 // pred_fallthru
      _
    // Predicated region
    $region90: #{tpu_custom_call.1} parent=1 // pred_check
      _
    $region91: #{tpu_custom_call.1} parent=1 // pred_check_branch
      %190 = sbr.rel (0) target = $region93
    $region92: #{tpu_custom_call.1} parent=1 // pred_region
      %191 = dma.done [#allocation18], 1408
    $region93: #{tpu_custom_call.1} parent=1 // pred_fallthru
      _
    // Predicated region
    $region94: #{tpu_custom_call.1} parent=1 // pred_check
      _
    $region95: #{tpu_custom_call.1} parent=1 // pred_check_branch
      %193 = sbr.rel (0) target = $region97
    $region96: #{tpu_custom_call.1} parent=1 // pred_region
      %194 = dma.done [#allocation21], 16
    $region97: #{tpu_custom_call.1} parent=1 // pred_fallthru
      _
    %v195 = vld [vmem:[#allocation2] sm:$0xff]
    %v196 = vld [vmem:[#allocation2 + $0x8] sm:$0xff]
    %v197 = vld [vmem:[#allocation2 + $0x10] sm:$0xff]
    %v198 = vld [vmem:[#allocation2 + $0x18] sm:$0xff]
    %v199 = vld [vmem:[#allocation2 + $0x20] sm:$0xff]
    %v200 = vld [vmem:[#allocation2 + $0x28] sm:$0xff]
    %v201 = vld [vmem:[#allocation2 + $0x30] sm:$0xff]
    %v202 = vld [vmem:[#allocation2 + $0x38] sm:$0xff]
    %v203 = vld [vmem:[#allocation2 + $0x40] sm:$0xff]
    %v204 = vld [vmem:[#allocation2 + $0x48] sm:$0xff]
    %v205 = vld [vmem:[#allocation2 + $0x50] sm:$0xff]
    %v206 = vld [vmem:[#allocation2 + $0x58] sm:$0xff]
    %v207 = vld [vmem:[#allocation2 + $0x60] sm:$0xff]
    %v208 = vld [vmem:[#allocation2 + $0x68] sm:$0xff]
    %v209 = vld [vmem:[#allocation2 + $0x70] sm:$0xff]
    %v210 = vld [vmem:[#allocation2 + $0x78] sm:$0xff]
    %v211 = vld [vmem:[#allocation2 + $0x80] sm:$0xff]
    %v212 = vld [vmem:[#allocation2 + $0x88] sm:$0xff]
    %v213 = vld [vmem:[#allocation2 + $0x90] sm:$0xff]
    %v214 = vld [vmem:[#allocation2 + $0x98] sm:$0xff]
    %v215 = vld [vmem:[#allocation2 + $0xa0] sm:$0xff]
    %v216 = vld [vmem:[#allocation2 + $0xa8] sm:$0xff]
    %v217 = vld [vmem:[#allocation2 + $0xb0] sm:$0xff]
    %v218 = vld [vmem:[#allocation2 + $0xb8] sm:$0xff]
    %v219 = vld [vmem:[#allocation2 + $0xc0] sm:$0xff]
    %v220 = vld [vmem:[#allocation2 + $0xc8] sm:$0xff]
    %v221 = vld [vmem:[#allocation2 + $0xd0] sm:$0xff]
    %v222 = vld [vmem:[#allocation2 + $0xd8] sm:$0xff]
    %v223 = vld [vmem:[#allocation5] sm:$0xff]
    %v224 = vld [vmem:[#allocation5 + $0x8] sm:$0xff]
    %v225 = vld [vmem:[#allocation5 + $0x10] sm:$0xff]
    %v226 = vld [vmem:[#allocation5 + $0x18] sm:$0xff]
    %v227 = vld [vmem:[#allocation5 + $0x20] sm:$0xff]
    %s228 = scalar_lea.vmem [#allocation5], 40
    %v229 = vld [vmem:[%s228] sm:$0xff]
    %v230 = vld [vmem:[%s228 + $0x8] sm:$0xff]
    %v231 = vld [vmem:[%s228 + $0x10] sm:$0xff]
    %v232 = vld [vmem:[%s228 + $0x18] sm:$0xff]
    %v233 = vld [vmem:[%s228 + $0x20] sm:$0xff]
    %vm234 = vcmask 326656
    %v236 = vsel %vm234, %v196, 0
    %v239 = vsel %vm234, %v197, 0
    %v242 = vsel %vm234, %v198, 0
    %v245 = vsel %vm234, %v199, 0
    %v248 = vsel %vm234, %v200, 0
    %v251 = vsel %vm234, %v201, 0
    %v254 = vsel %vm234, %v202, 0
    %v257 = vsel %vm234, %v203, 0
    %v260 = vsel %vm234, %v204, 0
    %v263 = vsel %vm234, %v205, 0
    %v266 = vsel %vm234, %v206, 0
    %v269 = vsel %vm234, %v207, 0
    %v272 = vsel %vm234, %v208, 0
    %v275 = vsel %vm234, %v209, 0
    %v278 = vsel %vm234, %v210, 0
    %v281 = vsel %vm234, %v211, 0
    %v284 = vsel %vm234, %v212, 0
    %v287 = vsel %vm234, %v213, 0
    %v290 = vsel %vm234, %v214, 0
    %v293 = vsel %vm234, %v215, 0
    %v296 = vsel %vm234, %v216, 0
    %v299 = vsel %vm234, %v217, 0
    %v302 = vsel %vm234, %v218, 0
    %v305 = vsel %vm234, %v219, 0
    %307 = vmatprep.subr.mxu0 0.0
    %308 = vmatpush1.msra.mxu0 %v229
    %309 = vmatprep.subr.mxu0 0.0
    %310 = vmatpush1.msra.mxu0 %v230
    %311 = vmatprep.subr.mxu0 0.0
    %312 = vmatpush1.msra.mxu0 %v231
    %313 = vmatprep.subr.mxu0 0.0
    %314 = vmatpush1.msra.mxu0 %v232
    %315 = vmatprep.subr.mxu0 0.0
    %316 = vmatpush1.msra.mxu0 %v233
    %317 = vmatprep.subr.mxu0 0.0
    %318 = vmatpush1.msra.mxu0 0.0
    %319 = vmatprep.subr.mxu0 0.0
    %320 = vmatpush1.msra.mxu0 0.0
    %321 = vmatprep.subr.mxu0 0.0
    %322 = vmatpush1.msra.mxu0 0.0
    %323 = vmatprep.subr.mxu0 0.0
    %324 = vmatpush1.msra.mxu0 0.0
    %325 = vmatprep.subr.mxu0 0.0
    %326 = vmatpush1.msra.mxu0 0.0
    %327 = vmatprep.subr.mxu0 0.0
    %328 = vmatpush1.msra.mxu0 0.0
    %329 = vmatprep.subr.mxu0 0.0
    %330 = vmatpush1.msra.mxu0 0.0
    %331 = vmatprep.subr.mxu0 0.0
    %332 = vmatpush1.msra.mxu0 0.0
    %333 = vmatprep.subr.mxu0 0.0
    %334 = vmatpush1.msra.mxu0 0.0
    %335 = vmatprep.subr.mxu0 0.0
    %336 = vmatpush1.msra.mxu0 0.0
    %337 = vmatprep.subr.mxu0 0.0
    %338 = vmatpush1.msra.mxu0 0.0
    %339 = vmatprep.subr.mxu0 0.0
    %340 = vmatpush1.msra.mxu0 0.0
    %341 = vmatprep.subr.mxu0 0.0
    %342 = vmatpush1.msra.mxu0 0.0
    %343 = vmatprep.subr.mxu0 0.0
    %344 = vmatpush1.msra.mxu0 0.0
    %345 = vmatprep.subr.mxu0 0.0
    %346 = vmatpush1.msra.mxu0 0.0
    %347 = vmatprep.subr.mxu0 0.0
    %348 = vmatpush1.msra.mxu0 0.0
    %349 = vmatprep.subr.mxu0 0.0
    %350 = vmatpush1.msra.mxu0 0.0
    %351 = vmatprep.subr.mxu0 0.0
    %352 = vmatpush1.msra.mxu0 0.0
    %353 = vmatprep.subr.mxu0 0.0
    %354 = vmatpush1.msra.mxu0 0.0
    %355 = vmatprep.subr.mxu0 0.0
    %356 = vmatpush1.msra.mxu0 0.0
    %357 = vmatprep.subr.mxu0 0.0
    %358 = vmatpush1.msra.mxu0 0.0
    %359 = vmatprep.subr.mxu0 0.0
    %360 = vmatpush1.msra.mxu0 0.0
    %361 = vmatprep.subr.mxu0 0.0
    %362 = vmatpush1.msra.mxu0 0.0
    %363 = vmatprep.subr.mxu0 0.0
    %364 = vmatpush1.msra.mxu0 0.0
    %365 = vmatprep.subr.mxu0 0.0
    %366 = vmatpush1.msra.mxu0 0.0
    %367 = vmatprep.subr.mxu0 0.0
    %368 = vmatpush1.msra.mxu0 0.0
    %369 = vmatprep.subr.mxu0 0.0
    %370 = vmatpush1.msra.mxu0 0.0
    %371 = vmatprep.mubr.f32.mxu0 0.0
    %372 = vmatmul.mubr.f32.gmra.mrb[0].mxu0 %v236
    %v373 = vpop.f32.mrb[0].mxu0
    %v374 = vadd.f32 0.0, %v373
    %v375 = vpop.f32.mrb[0].mxu0
    %376 = vmatprep.mubr.f32.mxu0 0.0
    %377 = vmatmul.mubr.f32.gmra.mrb[0].mxu0 %v239
    %v378 = vpop.f32.mrb[0].mxu0
    %v379 = vadd.f32 0.0, %v378
    %v380 = vpop.f32.mrb[0].mxu0
    %381 = vmatprep.mubr.f32.mxu0 0.0
    %382 = vmatmul.mubr.f32.gmra.mrb[0].mxu0 %v242
    %v383 = vpop.f32.mrb[0].mxu0
    %v384 = vadd.f32 0.0, %v383
    %v385 = vpop.f32.mrb[0].mxu0
    %386 = vmatprep.mubr.f32.mxu0 0.0
    %387 = vmatmul.mubr.f32.gmra.mrb[0].mxu0 %v245
    %v388 = vpop.f32.mrb[0].mxu0
    %v389 = vadd.f32 0.0, %v388
    %v390 = vpop.f32.mrb[0].mxu0
    %391 = vmatprep.mubr.f32.mxu0 0.0
    %392 = vmatmul.mubr.f32.gmra.mrb[0].mxu0 %v248
    %v393 = vpop.f32.mrb[0].mxu0
    %v394 = vadd.f32 0.0, %v393
    %v395 = vpop.f32.mrb[0].mxu0
    %396 = vmatprep.mubr.f32.mxu0 0.0
    %397 = vmatmul.mubr.f32.gmra.mrb[0].mxu0 %v251
    %v398 = vpop.f32.mrb[0].mxu0
    %v399 = vadd.f32 0.0, %v398
    %v400 = vpop.f32.mrb[0].mxu0
    %401 = vmatprep.mubr.f32.mxu0 0.0
    %402 = vmatmul.mubr.f32.gmra.mrb[0].mxu0 %v254
    %v403 = vpop.f32.mrb[0].mxu0
    %v404 = vadd.f32 0.0, %v403
    %v405 = vpop.f32.mrb[0].mxu0
    %406 = vmatprep.mubr.f32.mxu0 0.0
    %407 = vmatmul.mubr.f32.gmra.mrb[0].mxu0 %v257
    %v408 = vpop.f32.mrb[0].mxu0
    %v409 = vadd.f32 0.0, %v408
    %v410 = vpop.f32.mrb[0].mxu0
    %411 = vmatprep.mubr.f32.mxu0 0.0
    %412 = vmatmul.mubr.f32.gmra.mrb[0].mxu0 %v260
    %v413 = vpop.f32.mrb[0].mxu0
    %v414 = vadd.f32 0.0, %v413
    %v415 = vpop.f32.mrb[0].mxu0
    %416 = vmatprep.mubr.f32.mxu0 0.0
    %417 = vmatmul.mubr.f32.gmra.mrb[0].mxu0 %v263
    %v418 = vpop.f32.mrb[0].mxu0
    %v419 = vadd.f32 0.0, %v418
    %v420 = vpop.f32.mrb[0].mxu0
    %421 = vmatprep.mubr.f32.mxu0 0.0
    %422 = vmatmul.mubr.f32.gmra.mrb[0].mxu0 %v266
    %v423 = vpop.f32.mrb[0].mxu0
    %v424 = vadd.f32 0.0, %v423
    %v425 = vpop.f32.mrb[0].mxu0
    %426 = vmatprep.mubr.f32.mxu0 0.0
    %427 = vmatmul.mubr.f32.gmra.mrb[0].mxu0 %v269
    %v428 = vpop.f32.mrb[0].mxu0
    %v429 = vadd.f32 0.0, %v428
    %v430 = vpop.f32.mrb[0].mxu0
    %431 = vmatprep.mubr.f32.mxu0 0.0
    %432 = vmatmul.mubr.f32.gmra.mrb[0].mxu0 %v272
    %v433 = vpop.f32.mrb[0].mxu0
    %v434 = vadd.f32 0.0, %v433
    %v435 = vpop.f32.mrb[0].mxu0
    %436 = vmatprep.mubr.f32.mxu0 0.0
    %437 = vmatmul.mubr.f32.gmra.mrb[0].mxu0 %v275
    %v438 = vpop.f32.mrb[0].mxu0
    %v439 = vadd.f32 0.0, %v438
    %v440 = vpop.f32.mrb[0].mxu0
    %441 = vmatprep.mubr.f32.mxu0 0.0
    %442 = vmatmul.mubr.f32.gmra.mrb[0].mxu0 %v278
    %v443 = vpop.f32.mrb[0].mxu0
    %v444 = vadd.f32 0.0, %v443
    %v445 = vpop.f32.mrb[0].mxu0
    %446 = vmatprep.mubr.f32.mxu0 0.0
    %447 = vmatmul.mubr.f32.gmra.mrb[0].mxu0 %v281
    %v448 = vpop.f32.mrb[0].mxu0
    %v449 = vadd.f32 0.0, %v448
    %v450 = vpop.f32.mrb[0].mxu0
    %451 = vmatprep.mubr.f32.mxu0 0.0
    %452 = vmatmul.mubr.f32.gmra.mrb[0].mxu0 %v284
    %v453 = vpop.f32.mrb[0].mxu0
    %v454 = vadd.f32 0.0, %v453
    %v455 = vpop.f32.mrb[0].mxu0
    %456 = vmatprep.mubr.f32.mxu0 0.0
    %457 = vmatmul.mubr.f32.gmra.mrb[0].mxu0 %v287
    %v458 = vpop.f32.mrb[0].mxu0
    %v459 = vadd.f32 0.0, %v458
    %v460 = vpop.f32.mrb[0].mxu0
    %461 = vmatprep.mubr.f32.mxu0 0.0
    %462 = vmatmul.mubr.f32.gmra.mrb[0].mxu0 %v290
    %v463 = vpop.f32.mrb[0].mxu0
    %v464 = vadd.f32 0.0, %v463
    %v465 = vpop.f32.mrb[0].mxu0
    %466 = vmatprep.mubr.f32.mxu0 0.0
    %467 = vmatmul.mubr.f32.gmra.mrb[0].mxu0 %v293
    %v468 = vpop.f32.mrb[0].mxu0
    %v469 = vadd.f32 0.0, %v468
    %v470 = vpop.f32.mrb[0].mxu0
    %471 = vmatprep.mubr.f32.mxu0 0.0
    %472 = vmatmul.mubr.f32.gmra.mrb[0].mxu0 %v296
    %v473 = vpop.f32.mrb[0].mxu0
    %v474 = vadd.f32 0.0, %v473
    %v475 = vpop.f32.mrb[0].mxu0
    %476 = vmatprep.mubr.f32.mxu0 0.0
    %477 = vmatmul.mubr.f32.gmra.mrb[0].mxu0 %v299
    %v478 = vpop.f32.mrb[0].mxu0
    %v479 = vadd.f32 0.0, %v478
    %v480 = vpop.f32.mrb[0].mxu0
    %481 = vmatprep.mubr.f32.mxu0 0.0
    %482 = vmatmul.mubr.f32.gmra.mrb[0].mxu0 %v302
    %v483 = vpop.f32.mrb[0].mxu0
    %v484 = vadd.f32 0.0, %v483
    %v485 = vpop.f32.mrb[0].mxu0
    %486 = vmatprep.mubr.f32.mxu0 0.0
    %487 = vmatmul.mubr.f32.gmra.mrb[0].mxu0 %v305
    %v488 = vpop.f32.mrb[0].mxu0
    %v489 = vadd.f32 0.0, %v488
    %v490 = vpop.f32.mrb[0].mxu0
    %491 = vdwg.mxu0
    %v493 = vsel %vm234, %v195, 0
    %495 = vmatprep.subr.mxu0 0.0
    %496 = vmatpush1.msra.mxu0 %v223
    %497 = vmatprep.subr.mxu0 0.0
    %498 = vmatpush1.msra.mxu0 %v224
    %499 = vmatprep.subr.mxu0 0.0
    %500 = vmatpush1.msra.mxu0 %v225
    %501 = vmatprep.subr.mxu0 0.0
    %502 = vmatpush1.msra.mxu0 %v226
    %503 = vmatprep.subr.mxu0 0.0
    %504 = vmatpush1.msra.mxu0 %v227
    %505 = vmatprep.subr.mxu0 0.0
    %506 = vmatpush1.msra.mxu0 0.0
    %507 = vmatprep.subr.mxu0 0.0
    %508 = vmatpush1.msra.mxu0 0.0
    %509 = vmatprep.subr.mxu0 0.0
    %510 = vmatpush1.msra.mxu0 0.0
    %511 = vmatprep.subr.mxu0 0.0
    %512 = vmatpush1.msra.mxu0 0.0
    %513 = vmatprep.subr.mxu0 0.0
    %514 = vmatpush1.msra.mxu0 0.0
    %515 = vmatprep.subr.mxu0 0.0
    %516 = vmatpush1.msra.mxu0 0.0
    %517 = vmatprep.subr.mxu0 0.0
    %518 = vmatpush1.msra.mxu0 0.0
    %519 = vmatprep.subr.mxu0 0.0
    %520 = vmatpush1.msra.mxu0 0.0
    %521 = vmatprep.subr.mxu0 0.0
    %522 = vmatpush1.msra.mxu0 0.0
    %523 = vmatprep.subr.mxu0 0.0
    %524 = vmatpush1.msra.mxu0 0.0
    %525 = vmatprep.subr.mxu0 0.0
    %526 = vmatpush1.msra.mxu0 0.0
    %527 = vmatprep.subr.mxu0 0.0
    %528 = vmatpush1.msra.mxu0 0.0
    %529 = vmatprep.subr.mxu0 0.0
    %530 = vmatpush1.msra.mxu0 0.0
    %531 = vmatprep.subr.mxu0 0.0
    %532 = vmatpush1.msra.mxu0 0.0
    %533 = vmatprep.subr.mxu0 0.0
    %534 = vmatpush1.msra.mxu0 0.0
    %535 = vmatprep.subr.mxu0 0.0
    %536 = vmatpush1.msra.mxu0 0.0
    %537 = vmatprep.subr.mxu0 0.0
    %538 = vmatpush1.msra.mxu0 0.0
    %539 = vmatprep.subr.mxu0 0.0
    %540 = vmatpush1.msra.mxu0 0.0
    %541 = vmatprep.subr.mxu0 0.0
    %542 = vmatpush1.msra.mxu0 0.0
    %543 = vmatprep.subr.mxu0 0.0
    %544 = vmatpush1.msra.mxu0 0.0
    %545 = vmatprep.subr.mxu0 0.0
    %546 = vmatpush1.msra.mxu0 0.0
    %547 = vmatprep.subr.mxu0 0.0
    %548 = vmatpush1.msra.mxu0 0.0
    %549 = vmatprep.subr.mxu0 0.0
    %550 = vmatpush1.msra.mxu0 0.0
    %551 = vmatprep.subr.mxu0 0.0
    %552 = vmatpush1.msra.mxu0 0.0
    %553 = vmatprep.subr.mxu0 0.0
    %554 = vmatpush1.msra.mxu0 0.0
    %555 = vmatprep.subr.mxu0 0.0
    %556 = vmatpush1.msra.mxu0 0.0
    %557 = vmatprep.subr.mxu0 0.0
    %558 = vmatpush1.msra.mxu0 0.0
    %559 = vmatprep.mubr.f32.mxu0 0.0
    %560 = vmatmul.mubr.f32.gmra.mrb[0].mxu0 %v493
    %v561 = vpop.f32.mrb[0].mxu0
    %v562 = vadd.f32 %v374, %v561
    %v563 = vpop.f32.mrb[0].mxu0
    %564 = vmatprep.mubr.f32.mxu0 0.0
    %565 = vmatmul.mubr.f32.gmra.mrb[0].mxu0 %v236
    %v566 = vpop.f32.mrb[0].mxu0
    %v567 = vadd.f32 %v379, %v566
    %v568 = vpop.f32.mrb[0].mxu0
    %569 = vmatprep.mubr.f32.mxu0 0.0
    %570 = vmatmul.mubr.f32.gmra.mrb[0].mxu0 %v239
    %v571 = vpop.f32.mrb[0].mxu0
    %v572 = vadd.f32 %v384, %v571
    %v573 = vpop.f32.mrb[0].mxu0
    %574 = vmatprep.mubr.f32.mxu0 0.0
    %575 = vmatmul.mubr.f32.gmra.mrb[0].mxu0 %v242
    %v576 = vpop.f32.mrb[0].mxu0
    %v577 = vadd.f32 %v389, %v576
    %v578 = vpop.f32.mrb[0].mxu0
    %579 = vmatprep.mubr.f32.mxu0 0.0
    %580 = vmatmul.mubr.f32.gmra.mrb[0].mxu0 %v245
    %v581 = vpop.f32.mrb[0].mxu0
    %v582 = vadd.f32 %v394, %v581
    %v583 = vpop.f32.mrb[0].mxu0
    %584 = vmatprep.mubr.f32.mxu0 0.0
    %585 = vmatmul.mubr.f32.gmra.mrb[0].mxu0 %v248
    %v586 = vpop.f32.mrb[0].mxu0
    %v587 = vadd.f32 %v399, %v586
    %v588 = vpop.f32.mrb[0].mxu0
    %589 = vmatprep.mubr.f32.mxu0 0.0
    %590 = vmatmul.mubr.f32.gmra.mrb[0].mxu0 %v251
    %v591 = vpop.f32.mrb[0].mxu0
    %v592 = vadd.f32 %v404, %v591
    %v593 = vpop.f32.mrb[0].mxu0
    %594 = vmatprep.mubr.f32.mxu0 0.0
    %595 = vmatmul.mubr.f32.gmra.mrb[0].mxu0 %v254
    %v596 = vpop.f32.mrb[0].mxu0
    %v597 = vadd.f32 %v409, %v596
    %v598 = vpop.f32.mrb[0].mxu0
    %599 = vmatprep.mubr.f32.mxu0 0.0
    %600 = vmatmul.mubr.f32.gmra.mrb[0].mxu0 %v257
    %v601 = vpop.f32.mrb[0].mxu0
    %v602 = vadd.f32 %v414, %v601
    %v603 = vpop.f32.mrb[0].mxu0
    %604 = vmatprep.mubr.f32.mxu0 0.0
    %605 = vmatmul.mubr.f32.gmra.mrb[0].mxu0 %v260
    %v606 = vpop.f32.mrb[0].mxu0
    %v607 = vadd.f32 %v419, %v606
    %v608 = vpop.f32.mrb[0].mxu0
    %609 = vmatprep.mubr.f32.mxu0 0.0
    %610 = vmatmul.mubr.f32.gmra.mrb[0].mxu0 %v263
    %v611 = vpop.f32.mrb[0].mxu0
    %v612 = vadd.f32 %v424, %v611
    %v613 = vpop.f32.mrb[0].mxu0
    %614 = vmatprep.mubr.f32.mxu0 0.0
    %615 = vmatmul.mubr.f32.gmra.mrb[0].mxu0 %v266
    %v616 = vpop.f32.mrb[0].mxu0
    %v617 = vadd.f32 %v429, %v616
    %v618 = vpop.f32.mrb[0].mxu0
    %619 = vmatprep.mubr.f32.mxu0 0.0
    %620 = vmatmul.mubr.f32.gmra.mrb[0].mxu0 %v269
    %v621 = vpop.f32.mrb[0].mxu0
    %v622 = vadd.f32 %v434, %v621
    %v623 = vpop.f32.mrb[0].mxu0
    %624 = vmatprep.mubr.f32.mxu0 0.0
    %625 = vmatmul.mubr.f32.gmra.mrb[0].mxu0 %v272
    %v626 = vpop.f32.mrb[0].mxu0
    %v627 = vadd.f32 %v439, %v626
    %v628 = vpop.f32.mrb[0].mxu0
    %629 = vmatprep.mubr.f32.mxu0 0.0
    %630 = vmatmul.mubr.f32.gmra.mrb[0].mxu0 %v275
    %v631 = vpop.f32.mrb[0].mxu0
    %v632 = vadd.f32 %v444, %v631
    %v633 = vpop.f32.mrb[0].mxu0
    %634 = vmatprep.mubr.f32.mxu0 0.0
    %635 = vmatmul.mubr.f32.gmra.mrb[0].mxu0 %v278
    %v636 = vpop.f32.mrb[0].mxu0
    %v637 = vadd.f32 %v449, %v636
    %v638 = vpop.f32.mrb[0].mxu0
    %639 = vmatprep.mubr.f32.mxu0 0.0
    %640 = vmatmul.mubr.f32.gmra.mrb[0].mxu0 %v281
    %v641 = vpop.f32.mrb[0].mxu0
    %v642 = vadd.f32 %v454, %v641
    %v643 = vpop.f32.mrb[0].mxu0
    %644 = vmatprep.mubr.f32.mxu0 0.0
    %645 = vmatmul.mubr.f32.gmra.mrb[0].mxu0 %v284
    %v646 = vpop.f32.mrb[0].mxu0
    %v647 = vadd.f32 %v459, %v646
    %v648 = vpop.f32.mrb[0].mxu0
    %649 = vmatprep.mubr.f32.mxu0 0.0
    %650 = vmatmul.mubr.f32.gmra.mrb[0].mxu0 %v287
    %v651 = vpop.f32.mrb[0].mxu0
    %v652 = vadd.f32 %v464, %v651
    %v653 = vpop.f32.mrb[0].mxu0
    %654 = vmatprep.mubr.f32.mxu0 0.0
    %655 = vmatmul.mubr.f32.gmra.mrb[0].mxu0 %v290
    %v656 = vpop.f32.mrb[0].mxu0
    %v657 = vadd.f32 %v469, %v656
    %v658 = vpop.f32.mrb[0].mxu0
    %659 = vmatprep.mubr.f32.mxu0 0.0
    %660 = vmatmul.mubr.f32.gmra.mrb[0].mxu0 %v293
    %v661 = vpop.f32.mrb[0].mxu0
    %v662 = vadd.f32 %v474, %v661
    %v663 = vpop.f32.mrb[0].mxu0
    %664 = vmatprep.mubr.f32.mxu0 0.0
    %665 = vmatmul.mubr.f32.gmra.mrb[0].mxu0 %v296
    %v666 = vpop.f32.mrb[0].mxu0
    %v667 = vadd.f32 %v479, %v666
    %v668 = vpop.f32.mrb[0].mxu0
    %669 = vmatprep.mubr.f32.mxu0 0.0
    %670 = vmatmul.mubr.f32.gmra.mrb[0].mxu0 %v299
    %v671 = vpop.f32.mrb[0].mxu0
    %v672 = vadd.f32 %v484, %v671
    %v673 = vpop.f32.mrb[0].mxu0
    %674 = vmatprep.mubr.f32.mxu0 0.0
    %675 = vmatmul.mubr.f32.gmra.mrb[0].mxu0 %v302
    %v676 = vpop.f32.mrb[0].mxu0
    %v677 = vadd.f32 %v489, %v676
    %v678 = vpop.f32.mrb[0].mxu0
    %679 = vdwg.mxu0
    %s680 = scalar_lea.vmem [#allocation5], 80
    %v681 = vld [vmem:[%s680] sm:$0xff]
    %v682 = vld [vmem:[%s680 + $0x8] sm:$0xff]
    %v683 = vld [vmem:[%s680 + $0x10] sm:$0xff]
    %v684 = vld [vmem:[%s680 + $0x18] sm:$0xff]
    %v685 = vld [vmem:[%s680 + $0x20] sm:$0xff]
    %v687 = vsel %vm234, %v220, 0
    %689 = vmatprep.subr.mxu0 0.0
    %690 = vmatpush1.msra.mxu0 %v681
    %691 = vmatprep.subr.mxu0 0.0
    %692 = vmatpush1.msra.mxu0 %v682
    %693 = vmatprep.subr.mxu0 0.0
    %694 = vmatpush1.msra.mxu0 %v683
    %695 = vmatprep.subr.mxu0 0.0
    %696 = vmatpush1.msra.mxu0 %v684
    %697 = vmatprep.subr.mxu0 0.0
    %698 = vmatpush1.msra.mxu0 %v685
    %699 = vmatprep.subr.mxu0 0.0
    %700 = vmatpush1.msra.mxu0 0.0
    %701 = vmatprep.subr.mxu0 0.0
    %702 = vmatpush1.msra.mxu0 0.0
    %703 = vmatprep.subr.mxu0 0.0
    %704 = vmatpush1.msra.mxu0 0.0
    %705 = vmatprep.subr.mxu0 0.0
    %706 = vmatpush1.msra.mxu0 0.0
    %707 = vmatprep.subr.mxu0 0.0
    %708 = vmatpush1.msra.mxu0 0.0
    %709 = vmatprep.subr.mxu0 0.0
    %710 = vmatpush1.msra.mxu0 0.0
    %711 = vmatprep.subr.mxu0 0.0
    %712 = vmatpush1.msra.mxu0 0.0
    %713 = vmatprep.subr.mxu0 0.0
    %714 = vmatpush1.msra.mxu0 0.0
    %715 = vmatprep.subr.mxu0 0.0
    %716 = vmatpush1.msra.mxu0 0.0
    %717 = vmatprep.subr.mxu0 0.0
    %718 = vmatpush1.msra.mxu0 0.0
    %719 = vmatprep.subr.mxu0 0.0
    %720 = vmatpush1.msra.mxu0 0.0
    %721 = vmatprep.subr.mxu0 0.0
    %722 = vmatpush1.msra.mxu0 0.0
    %723 = vmatprep.subr.mxu0 0.0
    %724 = vmatpush1.msra.mxu0 0.0
    %725 = vmatprep.subr.mxu0 0.0
    %726 = vmatpush1.msra.mxu0 0.0
    %727 = vmatprep.subr.mxu0 0.0
    %728 = vmatpush1.msra.mxu0 0.0
    %729 = vmatprep.subr.mxu0 0.0
    %730 = vmatpush1.msra.mxu0 0.0
    %731 = vmatprep.subr.mxu0 0.0
    %732 = vmatpush1.msra.mxu0 0.0
    %733 = vmatprep.subr.mxu0 0.0
    %734 = vmatpush1.msra.mxu0 0.0
    %735 = vmatprep.subr.mxu0 0.0
    %736 = vmatpush1.msra.mxu0 0.0
    %737 = vmatprep.subr.mxu0 0.0
    %738 = vmatpush1.msra.mxu0 0.0
    %739 = vmatprep.subr.mxu0 0.0
    %740 = vmatpush1.msra.mxu0 0.0
    %741 = vmatprep.subr.mxu0 0.0
    %742 = vmatpush1.msra.mxu0 0.0
    %743 = vmatprep.subr.mxu0 0.0
    %744 = vmatpush1.msra.mxu0 0.0
    %745 = vmatprep.subr.mxu0 0.0
    %746 = vmatpush1.msra.mxu0 0.0
    %747 = vmatprep.subr.mxu0 0.0
    %748 = vmatpush1.msra.mxu0 0.0
    %749 = vmatprep.subr.mxu0 0.0
    %750 = vmatpush1.msra.mxu0 0.0
    %751 = vmatprep.subr.mxu0 0.0
    %752 = vmatpush1.msra.mxu0 0.0
    %753 = vmatprep.mubr.f32.mxu0 0.0
    %754 = vmatmul.mubr.f32.gmra.mrb[0].mxu0 %v239
    %v755 = vpop.f32.mrb[0].mxu0
    %v756 = vadd.f32 0.0, %v755
    %v757 = vpop.f32.mrb[0].mxu0
    %758 = vmatprep.mubr.f32.mxu0 0.0
    %759 = vmatmul.mubr.f32.gmra.mrb[0].mxu0 %v242
    %v760 = vpop.f32.mrb[0].mxu0
    %v761 = vadd.f32 0.0, %v760
    %v762 = vpop.f32.mrb[0].mxu0
    %763 = vmatprep.mubr.f32.mxu0 0.0
    %764 = vmatmul.mubr.f32.gmra.mrb[0].mxu0 %v245
    %v765 = vpop.f32.mrb[0].mxu0
    %v766 = vadd.f32 0.0, %v765
    %v767 = vpop.f32.mrb[0].mxu0
    %768 = vmatprep.mubr.f32.mxu0 0.0
    %769 = vmatmul.mubr.f32.gmra.mrb[0].mxu0 %v248
    %v770 = vpop.f32.mrb[0].mxu0
    %v771 = vadd.f32 0.0, %v770
    %v772 = vpop.f32.mrb[0].mxu0
    %773 = vmatprep.mubr.f32.mxu0 0.0
    %774 = vmatmul.mubr.f32.gmra.mrb[0].mxu0 %v251
    %v775 = vpop.f32.mrb[0].mxu0
    %v776 = vadd.f32 0.0, %v775
    %v777 = vpop.f32.mrb[0].mxu0
    %778 = vmatprep.mubr.f32.mxu0 0.0
    %779 = vmatmul.mubr.f32.gmra.mrb[0].mxu0 %v254
    %v780 = vpop.f32.mrb[0].mxu0
    %v781 = vadd.f32 0.0, %v780
    %v782 = vpop.f32.mrb[0].mxu0
    %783 = vmatprep.mubr.f32.mxu0 0.0
    %784 = vmatmul.mubr.f32.gmra.mrb[0].mxu0 %v257
    %v785 = vpop.f32.mrb[0].mxu0
    %v786 = vadd.f32 0.0, %v785
    %v787 = vpop.f32.mrb[0].mxu0
    %788 = vmatprep.mubr.f32.mxu0 0.0
    %789 = vmatmul.mubr.f32.gmra.mrb[0].mxu0 %v260
    %v790 = vpop.f32.mrb[0].mxu0
    %v791 = vadd.f32 0.0, %v790
    %v792 = vpop.f32.mrb[0].mxu0
    %793 = vmatprep.mubr.f32.mxu0 0.0
    %794 = vmatmul.mubr.f32.gmra.mrb[0].mxu0 %v263
    %v795 = vpop.f32.mrb[0].mxu0
    %v796 = vadd.f32 0.0, %v795
    %v797 = vpop.f32.mrb[0].mxu0
    %798 = vmatprep.mubr.f32.mxu0 0.0
    %799 = vmatmul.mubr.f32.gmra.mrb[0].mxu0 %v266
    %v800 = vpop.f32.mrb[0].mxu0
    %v801 = vadd.f32 0.0, %v800
    %v802 = vpop.f32.mrb[0].mxu0
    %803 = vmatprep.mubr.f32.mxu0 0.0
    %804 = vmatmul.mubr.f32.gmra.mrb[0].mxu0 %v269
    %v805 = vpop.f32.mrb[0].mxu0
    %v806 = vadd.f32 0.0, %v805
    %v807 = vpop.f32.mrb[0].mxu0
    %808 = vmatprep.mubr.f32.mxu0 0.0
    %809 = vmatmul.mubr.f32.gmra.mrb[0].mxu0 %v272
    %v810 = vpop.f32.mrb[0].mxu0
    %v811 = vadd.f32 0.0, %v810
    %v812 = vpop.f32.mrb[0].mxu0
    %813 = vmatprep.mubr.f32.mxu0 0.0
    %814 = vmatmul.mubr.f32.gmra.mrb[0].mxu0 %v275
    %v815 = vpop.f32.mrb[0].mxu0
    %v816 = vadd.f32 0.0, %v815
    %v817 = vpop.f32.mrb[0].mxu0
    %818 = vmatprep.mubr.f32.mxu0 0.0
    %819 = vmatmul.mubr.f32.gmra.mrb[0].mxu0 %v278
    %v820 = vpop.f32.mrb[0].mxu0
    %v821 = vadd.f32 0.0, %v820
    %v822 = vpop.f32.mrb[0].mxu0
    %823 = vmatprep.mubr.f32.mxu0 0.0
    %824 = vmatmul.mubr.f32.gmra.mrb[0].mxu0 %v281
    %v825 = vpop.f32.mrb[0].mxu0
    %v826 = vadd.f32 0.0, %v825
    %v827 = vpop.f32.mrb[0].mxu0
    %828 = vmatprep.mubr.f32.mxu0 0.0
    %829 = vmatmul.mubr.f32.gmra.mrb[0].mxu0 %v284
    %v830 = vpop.f32.mrb[0].mxu0
    %v831 = vadd.f32 0.0, %v830
    %v832 = vpop.f32.mrb[0].mxu0
    %833 = vmatprep.mubr.f32.mxu0 0.0
    %834 = vmatmul.mubr.f32.gmra.mrb[0].mxu0 %v287
    %v835 = vpop.f32.mrb[0].mxu0
    %v836 = vadd.f32 0.0, %v835
    %v837 = vpop.f32.mrb[0].mxu0
    %838 = vmatprep.mubr.f32.mxu0 0.0
    %839 = vmatmul.mubr.f32.gmra.mrb[0].mxu0 %v290
    %v840 = vpop.f32.mrb[0].mxu0
    %v841 = vadd.f32 0.0, %v840
    %v842 = vpop.f32.mrb[0].mxu0
    %843 = vmatprep.mubr.f32.mxu0 0.0
    %844 = vmatmul.mubr.f32.gmra.mrb[0].mxu0 %v293
    %v845 = vpop.f32.mrb[0].mxu0
    %v846 = vadd.f32 0.0, %v845
    %v847 = vpop.f32.mrb[0].mxu0
    %848 = vmatprep.mubr.f32.mxu0 0.0
    %849 = vmatmul.mubr.f32.gmra.mrb[0].mxu0 %v296
    %v850 = vpop.f32.mrb[0].mxu0
    %v851 = vadd.f32 0.0, %v850
    %v852 = vpop.f32.mrb[0].mxu0
    %853 = vmatprep.mubr.f32.mxu0 0.0
    %854 = vmatmul.mubr.f32.gmra.mrb[0].mxu0 %v299
    %v855 = vpop.f32.mrb[0].mxu0
    %v856 = vadd.f32 0.0, %v855
    %v857 = vpop.f32.mrb[0].mxu0
    %858 = vmatprep.mubr.f32.mxu0 0.0
    %859 = vmatmul.mubr.f32.gmra.mrb[0].mxu0 %v302
    %v860 = vpop.f32.mrb[0].mxu0
    %v861 = vadd.f32 0.0, %v860
    %v862 = vpop.f32.mrb[0].mxu0
    %863 = vmatprep.mubr.f32.mxu0 0.0
    %864 = vmatmul.mubr.f32.gmra.mrb[0].mxu0 %v305
    %v865 = vpop.f32.mrb[0].mxu0
    %v866 = vadd.f32 0.0, %v865
    %v867 = vpop.f32.mrb[0].mxu0
    %868 = vmatprep.mubr.f32.mxu0 0.0
    %869 = vmatmul.mubr.f32.gmra.mrb[0].mxu0 %v687
    %v870 = vpop.f32.mrb[0].mxu0
    %v871 = vadd.f32 0.0, %v870
    %v872 = vpop.f32.mrb[0].mxu0
    %873 = vdwg.mxu0
    %v874 = vadd.f32 %v562, %v756
    %v875 = vadd.f32 %v567, %v761
    %v876 = vadd.f32 %v572, %v766
    %v877 = vadd.f32 %v577, %v771
    %v878 = vadd.f32 %v582, %v776
    %v879 = vadd.f32 %v587, %v781
    %v880 = vadd.f32 %v592, %v786
    %v881 = vadd.f32 %v597, %v791
    %v882 = vadd.f32 %v602, %v796
    %v883 = vadd.f32 %v607, %v801
    %v884 = vadd.f32 %v612, %v806
    %v885 = vadd.f32 %v617, %v811
    %v886 = vadd.f32 %v622, %v816
    %v887 = vadd.f32 %v627, %v821
    %v888 = vadd.f32 %v632, %v826
    %v889 = vadd.f32 %v637, %v831
    %v890 = vadd.f32 %v642, %v836
    %v891 = vadd.f32 %v647, %v841
    %v892 = vadd.f32 %v652, %v846
    %v893 = vadd.f32 %v657, %v851
    %v894 = vadd.f32 %v662, %v856
    %v895 = vadd.f32 %v667, %v861
    %v896 = vadd.f32 %v672, %v866
    %v897 = vadd.f32 %v677, %v871
    %s898 = scalar_lea.vmem [#allocation5], 120
    %v899 = vld [vmem:[%s898] sm:$0xff]
    %v900 = vld [vmem:[%s898 + $0x8] sm:$0xff]
    %v901 = vld [vmem:[%s898 + $0x10] sm:$0xff]
    %v902 = vld [vmem:[%s898 + $0x18] sm:$0xff]
    %v903 = vld [vmem:[%s898 + $0x20] sm:$0xff]
    %v905 = vsel %vm234, %v221, 0
    %907 = vmatprep.subr.mxu0 0.0
    %908 = vmatpush1.msra.mxu0 %v899
    %909 = vmatprep.subr.mxu0 0.0
    %910 = vmatpush1.msra.mxu0 %v900
    %911 = vmatprep.subr.mxu0 0.0
    %912 = vmatpush1.msra.mxu0 %v901
    %913 = vmatprep.subr.mxu0 0.0
    %914 = vmatpush1.msra.mxu0 %v902
    %915 = vmatprep.subr.mxu0 0.0
    %916 = vmatpush1.msra.mxu0 %v903
    %917 = vmatprep.subr.mxu0 0.0
    %918 = vmatpush1.msra.mxu0 0.0
    %919 = vmatprep.subr.mxu0 0.0
    %920 = vmatpush1.msra.mxu0 0.0
    %921 = vmatprep.subr.mxu0 0.0
    %922 = vmatpush1.msra.mxu0 0.0
    %923 = vmatprep.subr.mxu0 0.0
    %924 = vmatpush1.msra.mxu0 0.0
    %925 = vmatprep.subr.mxu0 0.0
    %926 = vmatpush1.msra.mxu0 0.0
    %927 = vmatprep.subr.mxu0 0.0
    %928 = vmatpush1.msra.mxu0 0.0
    %929 = vmatprep.subr.mxu0 0.0
    %930 = vmatpush1.msra.mxu0 0.0
    %931 = vmatprep.subr.mxu0 0.0
    %932 = vmatpush1.msra.mxu0 0.0
    %933 = vmatprep.subr.mxu0 0.0
    %934 = vmatpush1.msra.mxu0 0.0
    %935 = vmatprep.subr.mxu0 0.0
    %936 = vmatpush1.msra.mxu0 0.0
    %937 = vmatprep.subr.mxu0 0.0
    %938 = vmatpush1.msra.mxu0 0.0
    %939 = vmatprep.subr.mxu0 0.0
    %940 = vmatpush1.msra.mxu0 0.0
    %941 = vmatprep.subr.mxu0 0.0
    %942 = vmatpush1.msra.mxu0 0.0
    %943 = vmatprep.subr.mxu0 0.0
    %944 = vmatpush1.msra.mxu0 0.0
    %945 = vmatprep.subr.mxu0 0.0
    %946 = vmatpush1.msra.mxu0 0.0
    %947 = vmatprep.subr.mxu0 0.0
    %948 = vmatpush1.msra.mxu0 0.0
    %949 = vmatprep.subr.mxu0 0.0
    %950 = vmatpush1.msra.mxu0 0.0
    %951 = vmatprep.subr.mxu0 0.0
    %952 = vmatpush1.msra.mxu0 0.0
    %953 = vmatprep.subr.mxu0 0.0
    %954 = vmatpush1.msra.mxu0 0.0
    %955 = vmatprep.subr.mxu0 0.0
    %956 = vmatpush1.msra.mxu0 0.0
    %957 = vmatprep.subr.mxu0 0.0
    %958 = vmatpush1.msra.mxu0 0.0
    %959 = vmatprep.subr.mxu0 0.0
    %960 = vmatpush1.msra.mxu0 0.0
    %961 = vmatprep.subr.mxu0 0.0
    %962 = vmatpush1.msra.mxu0 0.0
    %963 = vmatprep.subr.mxu0 0.0
    %964 = vmatpush1.msra.mxu0 0.0
    %965 = vmatprep.subr.mxu0 0.0
    %966 = vmatpush1.msra.mxu0 0.0
    %967 = vmatprep.subr.mxu0 0.0
    %968 = vmatpush1.msra.mxu0 0.0
    %969 = vmatprep.subr.mxu0 0.0
    %970 = vmatpush1.msra.mxu0 0.0
    %971 = vmatprep.mubr.f32.mxu0 0.0
    %972 = vmatmul.mubr.f32.gmra.mrb[0].mxu0 %v242
    %v973 = vpop.f32.mrb[0].mxu0
    %v974 = vadd.f32 0.0, %v973
    %v975 = vpop.f32.mrb[0].mxu0
    %976 = vmatprep.mubr.f32.mxu0 0.0
    %977 = vmatmul.mubr.f32.gmra.mrb[0].mxu0 %v245
    %v978 = vpop.f32.mrb[0].mxu0
    %v979 = vadd.f32 0.0, %v978
    %v980 = vpop.f32.mrb[0].mxu0
    %981 = vmatprep.mubr.f32.mxu0 0.0
    %982 = vmatmul.mubr.f32.gmra.mrb[0].mxu0 %v248
    %v983 = vpop.f32.mrb[0].mxu0
    %v984 = vadd.f32 0.0, %v983
    %v985 = vpop.f32.mrb[0].mxu0
    %986 = vmatprep.mubr.f32.mxu0 0.0
    %987 = vmatmul.mubr.f32.gmra.mrb[0].mxu0 %v251
    %v988 = vpop.f32.mrb[0].mxu0
    %v989 = vadd.f32 0.0, %v988
    %v990 = vpop.f32.mrb[0].mxu0
    %991 = vmatprep.mubr.f32.mxu0 0.0
    %992 = vmatmul.mubr.f32.gmra.mrb[0].mxu0 %v254
    %v993 = vpop.f32.mrb[0].mxu0
    %v994 = vadd.f32 0.0, %v993
    %v995 = vpop.f32.mrb[0].mxu0
    %996 = vmatprep.mubr.f32.mxu0 0.0
    %997 = vmatmul.mubr.f32.gmra.mrb[0].mxu0 %v257
    %v998 = vpop.f32.mrb[0].mxu0
    %v999 = vadd.f32 0.0, %v998
    %v1000 = vpop.f32.mrb[0].mxu0
    %1001 = vmatprep.mubr.f32.mxu0 0.0
    %1002 = vmatmul.mubr.f32.gmra.mrb[0].mxu0 %v260
    %v1003 = vpop.f32.mrb[0].mxu0
    %v1004 = vadd.f32 0.0, %v1003
    %v1005 = vpop.f32.mrb[0].mxu0
    %1006 = vmatprep.mubr.f32.mxu0 0.0
    %1007 = vmatmul.mubr.f32.gmra.mrb[0].mxu0 %v263
    %v1008 = vpop.f32.mrb[0].mxu0
    %v1009 = vadd.f32 0.0, %v1008
    %v1010 = vpop.f32.mrb[0].mxu0
    %1011 = vmatprep.mubr.f32.mxu0 0.0
    %1012 = vmatmul.mubr.f32.gmra.mrb[0].mxu0 %v266
    %v1013 = vpop.f32.mrb[0].mxu0
    %v1014 = vadd.f32 0.0, %v1013
    %v1015 = vpop.f32.mrb[0].mxu0
    %1016 = vmatprep.mubr.f32.mxu0 0.0
    %1017 = vmatmul.mubr.f32.gmra.mrb[0].mxu0 %v269
    %v1018 = vpop.f32.mrb[0].mxu0
    %v1019 = vadd.f32 0.0, %v1018
    %v1020 = vpop.f32.mrb[0].mxu0
    %1021 = vmatprep.mubr.f32.mxu0 0.0
    %1022 = vmatmul.mubr.f32.gmra.mrb[0].mxu0 %v272
    %v1023 = vpop.f32.mrb[0].mxu0
    %v1024 = vadd.f32 0.0, %v1023
    %v1025 = vpop.f32.mrb[0].mxu0
    %1026 = vmatprep.mubr.f32.mxu0 0.0
    %1027 = vmatmul.mubr.f32.gmra.mrb[0].mxu0 %v275
    %v1028 = vpop.f32.mrb[0].mxu0
    %v1029 = vadd.f32 0.0, %v1028
    %v1030 = vpop.f32.mrb[0].mxu0
    %1031 = vmatprep.mubr.f32.mxu0 0.0
    %1032 = vmatmul.mubr.f32.gmra.mrb[0].mxu0 %v278
    %v1033 = vpop.f32.mrb[0].mxu0
    %v1034 = vadd.f32 0.0, %v1033
    %v1035 = vpop.f32.mrb[0].mxu0
    %1036 = vmatprep.mubr.f32.mxu0 0.0
    %1037 = vmatmul.mubr.f32.gmra.mrb[0].mxu0 %v281
    %v1038 = vpop.f32.mrb[0].mxu0
    %v1039 = vadd.f32 0.0, %v1038
    %v1040 = vpop.f32.mrb[0].mxu0
    %1041 = vmatprep.mubr.f32.mxu0 0.0
    %1042 = vmatmul.mubr.f32.gmra.mrb[0].mxu0 %v284
    %v1043 = vpop.f32.mrb[0].mxu0
    %v1044 = vadd.f32 0.0, %v1043
    %v1045 = vpop.f32.mrb[0].mxu0
    %1046 = vmatprep.mubr.f32.mxu0 0.0
    %1047 = vmatmul.mubr.f32.gmra.mrb[0].mxu0 %v287
    %v1048 = vpop.f32.mrb[0].mxu0
    %v1049 = vadd.f32 0.0, %v1048
    %v1050 = vpop.f32.mrb[0].mxu0
    %1051 = vmatprep.mubr.f32.mxu0 0.0
    %1052 = vmatmul.mubr.f32.gmra.mrb[0].mxu0 %v290
    %v1053 = vpop.f32.mrb[0].mxu0
    %v1054 = vadd.f32 0.0, %v1053
    %v1055 = vpop.f32.mrb[0].mxu0
    %1056 = vmatprep.mubr.f32.mxu0 0.0
    %1057 = vmatmul.mubr.f32.gmra.mrb[0].mxu0 %v293
    %v1058 = vpop.f32.mrb[0].mxu0
    %v1059 = vadd.f32 0.0, %v1058
    %v1060 = vpop.f32.mrb[0].mxu0
    %1061 = vmatprep.mubr.f32.mxu0 0.0
    %1062 = vmatmul.mubr.f32.gmra.mrb[0].mxu0 %v296
    %v1063 = vpop.f32.mrb[0].mxu0
    %v1064 = vadd.f32 0.0, %v1063
    %v1065 = vpop.f32.mrb[0].mxu0
    %1066 = vmatprep.mubr.f32.mxu0 0.0
    %1067 = vmatmul.mubr.f32.gmra.mrb[0].mxu0 %v299
    %v1068 = vpop.f32.mrb[0].mxu0
    %v1069 = vadd.f32 0.0, %v1068
    %v1070 = vpop.f32.mrb[0].mxu0
    %1071 = vmatprep.mubr.f32.mxu0 0.0
    %1072 = vmatmul.mubr.f32.gmra.mrb[0].mxu0 %v302
    %v1073 = vpop.f32.mrb[0].mxu0
    %v1074 = vadd.f32 0.0, %v1073
    %v1075 = vpop.f32.mrb[0].mxu0
    %1076 = vmatprep.mubr.f32.mxu0 0.0
    %1077 = vmatmul.mubr.f32.gmra.mrb[0].mxu0 %v305
    %v1078 = vpop.f32.mrb[0].mxu0
    %v1079 = vadd.f32 0.0, %v1078
    %v1080 = vpop.f32.mrb[0].mxu0
    %1081 = vmatprep.mubr.f32.mxu0 0.0
    %1082 = vmatmul.mubr.f32.gmra.mrb[0].mxu0 %v687
    %v1083 = vpop.f32.mrb[0].mxu0
    %v1084 = vadd.f32 0.0, %v1083
    %v1085 = vpop.f32.mrb[0].mxu0
    %1086 = vmatprep.mubr.f32.mxu0 0.0
    %1087 = vmatmul.mubr.f32.gmra.mrb[0].mxu0 %v905
    %v1088 = vpop.f32.mrb[0].mxu0
    %v1089 = vadd.f32 0.0, %v1088
    %v1090 = vpop.f32.mrb[0].mxu0
    %1091 = vdwg.mxu0
    %v1092 = vadd.f32 %v874, %v974
    %v1093 = vadd.f32 %v875, %v979
    %v1094 = vadd.f32 %v876, %v984
    %v1095 = vadd.f32 %v877, %v989
    %v1096 = vadd.f32 %v878, %v994
    %v1097 = vadd.f32 %v879, %v999
    %v1098 = vadd.f32 %v880, %v1004
    %v1099 = vadd.f32 %v881, %v1009
    %v1100 = vadd.f32 %v882, %v1014
    %v1101 = vadd.f32 %v883, %v1019
    %v1102 = vadd.f32 %v884, %v1024
    %v1103 = vadd.f32 %v885, %v1029
    %v1104 = vadd.f32 %v886, %v1034
    %v1105 = vadd.f32 %v887, %v1039
    %v1106 = vadd.f32 %v888, %v1044
    %v1107 = vadd.f32 %v889, %v1049
    %v1108 = vadd.f32 %v890, %v1054
    %v1109 = vadd.f32 %v891, %v1059
    %v1110 = vadd.f32 %v892, %v1064
    %v1111 = vadd.f32 %v893, %v1069
    %v1112 = vadd.f32 %v894, %v1074
    %v1113 = vadd.f32 %v895, %v1079
    %v1114 = vadd.f32 %v896, %v1084
    %v1115 = vadd.f32 %v897, %v1089
    %s1116 = scalar_lea.vmem [#allocation5], 160
    %v1117 = vld [vmem:[%s1116] sm:$0xff]
    %v1118 = vld [vmem:[%s1116 + $0x8] sm:$0xff]
    %v1119 = vld [vmem:[%s1116 + $0x10] sm:$0xff]
    %v1120 = vld [vmem:[%s1116 + $0x18] sm:$0xff]
    %v1121 = vld [vmem:[%s1116 + $0x20] sm:$0xff]
    %v1123 = vsel %vm234, %v222, 0
    %1125 = vmatprep.subr.mxu0 0.0
    %1126 = vmatpush1.msra.mxu0 %v1117
    %1127 = vmatprep.subr.mxu0 0.0
    %1128 = vmatpush1.msra.mxu0 %v1118
    %1129 = vmatprep.subr.mxu0 0.0
    %1130 = vmatpush1.msra.mxu0 %v1119
    %1131 = vmatprep.subr.mxu0 0.0
    %1132 = vmatpush1.msra.mxu0 %v1120
    %1133 = vmatprep.subr.mxu0 0.0
    %1134 = vmatpush1.msra.mxu0 %v1121
    %1135 = vmatprep.subr.mxu0 0.0
    %1136 = vmatpush1.msra.mxu0 0.0
    %1137 = vmatprep.subr.mxu0 0.0
    %1138 = vmatpush1.msra.mxu0 0.0
    %1139 = vmatprep.subr.mxu0 0.0
    %1140 = vmatpush1.msra.mxu0 0.0
    %1141 = vmatprep.subr.mxu0 0.0
    %1142 = vmatpush1.msra.mxu0 0.0
    %1143 = vmatprep.subr.mxu0 0.0
    %1144 = vmatpush1.msra.mxu0 0.0
    %1145 = vmatprep.subr.mxu0 0.0
    %1146 = vmatpush1.msra.mxu0 0.0
    %1147 = vmatprep.subr.mxu0 0.0
    %1148 = vmatpush1.msra.mxu0 0.0
    %1149 = vmatprep.subr.mxu0 0.0
    %1150 = vmatpush1.msra.mxu0 0.0
    %1151 = vmatprep.subr.mxu0 0.0
    %1152 = vmatpush1.msra.mxu0 0.0
    %1153 = vmatprep.subr.mxu0 0.0
    %1154 = vmatpush1.msra.mxu0 0.0
    %1155 = vmatprep.subr.mxu0 0.0
    %1156 = vmatpush1.msra.mxu0 0.0
    %1157 = vmatprep.subr.mxu0 0.0
    %1158 = vmatpush1.msra.mxu0 0.0
    %1159 = vmatprep.subr.mxu0 0.0
    %1160 = vmatpush1.msra.mxu0 0.0
    %1161 = vmatprep.subr.mxu0 0.0
    %1162 = vmatpush1.msra.mxu0 0.0
    %1163 = vmatprep.subr.mxu0 0.0
    %1164 = vmatpush1.msra.mxu0 0.0
    %1165 = vmatprep.subr.mxu0 0.0
    %1166 = vmatpush1.msra.mxu0 0.0
    %1167 = vmatprep.subr.mxu0 0.0
    %1168 = vmatpush1.msra.mxu0 0.0
    %1169 = vmatprep.subr.mxu0 0.0
    %1170 = vmatpush1.msra.mxu0 0.0
    %1171 = vmatprep.subr.mxu0 0.0
    %1172 = vmatpush1.msra.mxu0 0.0
    %1173 = vmatprep.subr.mxu0 0.0
    %1174 = vmatpush1.msra.mxu0 0.0
    %1175 = vmatprep.subr.mxu0 0.0
    %1176 = vmatpush1.msra.mxu0 0.0
    %1177 = vmatprep.subr.mxu0 0.0
    %1178 = vmatpush1.msra.mxu0 0.0
    %1179 = vmatprep.subr.mxu0 0.0
    %1180 = vmatpush1.msra.mxu0 0.0
    %1181 = vmatprep.subr.mxu0 0.0
    %1182 = vmatpush1.msra.mxu0 0.0
    %1183 = vmatprep.subr.mxu0 0.0
    %1184 = vmatpush1.msra.mxu0 0.0
    %1185 = vmatprep.subr.mxu0 0.0
    %1186 = vmatpush1.msra.mxu0 0.0
    %1187 = vmatprep.subr.mxu0 0.0
    %1188 = vmatpush1.msra.mxu0 0.0
    %1189 = vmatprep.mubr.f32.mxu0 0.0
    %1190 = vmatmul.mubr.f32.gmra.mrb[0].mxu0 %v245
    %v1191 = vpop.f32.mrb[0].mxu0
    %v1192 = vadd.f32 0.0, %v1191
    %v1193 = vpop.f32.mrb[0].mxu0
    %1194 = vmatprep.mubr.f32.mxu0 0.0
    %1195 = vmatmul.mubr.f32.gmra.mrb[0].mxu0 %v248
    %v1196 = vpop.f32.mrb[0].mxu0
    %v1197 = vadd.f32 0.0, %v1196
    %v1198 = vpop.f32.mrb[0].mxu0
    %1199 = vmatprep.mubr.f32.mxu0 0.0
    %1200 = vmatmul.mubr.f32.gmra.mrb[0].mxu0 %v251
    %v1201 = vpop.f32.mrb[0].mxu0
    %v1202 = vadd.f32 0.0, %v1201
    %v1203 = vpop.f32.mrb[0].mxu0
    %1204 = vmatprep.mubr.f32.mxu0 0.0
    %1205 = vmatmul.mubr.f32.gmra.mrb[0].mxu0 %v254
    %v1206 = vpop.f32.mrb[0].mxu0
    %v1207 = vadd.f32 0.0, %v1206
    %v1208 = vpop.f32.mrb[0].mxu0
    %1209 = vmatprep.mubr.f32.mxu0 0.0
    %1210 = vmatmul.mubr.f32.gmra.mrb[0].mxu0 %v257
    %v1211 = vpop.f32.mrb[0].mxu0
    %v1212 = vadd.f32 0.0, %v1211
    %v1213 = vpop.f32.mrb[0].mxu0
    %1214 = vmatprep.mubr.f32.mxu0 0.0
    %1215 = vmatmul.mubr.f32.gmra.mrb[0].mxu0 %v260
    %v1216 = vpop.f32.mrb[0].mxu0
    %v1217 = vadd.f32 0.0, %v1216
    %v1218 = vpop.f32.mrb[0].mxu0
    %1219 = vmatprep.mubr.f32.mxu0 0.0
    %1220 = vmatmul.mubr.f32.gmra.mrb[0].mxu0 %v263
    %v1221 = vpop.f32.mrb[0].mxu0
    %v1222 = vadd.f32 0.0, %v1221
    %v1223 = vpop.f32.mrb[0].mxu0
    %1224 = vmatprep.mubr.f32.mxu0 0.0
    %1225 = vmatmul.mubr.f32.gmra.mrb[0].mxu0 %v266
    %v1226 = vpop.f32.mrb[0].mxu0
    %v1227 = vadd.f32 0.0, %v1226
    %v1228 = vpop.f32.mrb[0].mxu0
    %1229 = vmatprep.mubr.f32.mxu0 0.0
    %1230 = vmatmul.mubr.f32.gmra.mrb[0].mxu0 %v269
    %v1231 = vpop.f32.mrb[0].mxu0
    %v1232 = vadd.f32 0.0, %v1231
    %v1233 = vpop.f32.mrb[0].mxu0
    %1234 = vmatprep.mubr.f32.mxu0 0.0
    %1235 = vmatmul.mubr.f32.gmra.mrb[0].mxu0 %v272
    %v1236 = vpop.f32.mrb[0].mxu0
    %v1237 = vadd.f32 0.0, %v1236
    %v1238 = vpop.f32.mrb[0].mxu0
    %1239 = vmatprep.mubr.f32.mxu0 0.0
    %1240 = vmatmul.mubr.f32.gmra.mrb[0].mxu0 %v275
    %v1241 = vpop.f32.mrb[0].mxu0
    %v1242 = vadd.f32 0.0, %v1241
    %v1243 = vpop.f32.mrb[0].mxu0
    %1244 = vmatprep.mubr.f32.mxu0 0.0
    %1245 = vmatmul.mubr.f32.gmra.mrb[0].mxu0 %v278
    %v1246 = vpop.f32.mrb[0].mxu0
    %v1247 = vadd.f32 0.0, %v1246
    %v1248 = vpop.f32.mrb[0].mxu0
    %1249 = vmatprep.mubr.f32.mxu0 0.0
    %1250 = vmatmul.mubr.f32.gmra.mrb[0].mxu0 %v281
    %v1251 = vpop.f32.mrb[0].mxu0
    %v1252 = vadd.f32 0.0, %v1251
    %v1253 = vpop.f32.mrb[0].mxu0
    %1254 = vmatprep.mubr.f32.mxu0 0.0
    %1255 = vmatmul.mubr.f32.gmra.mrb[0].mxu0 %v284
    %v1256 = vpop.f32.mrb[0].mxu0
    %v1257 = vadd.f32 0.0, %v1256
    %v1258 = vpop.f32.mrb[0].mxu0
    %1259 = vmatprep.mubr.f32.mxu0 0.0
    %1260 = vmatmul.mubr.f32.gmra.mrb[0].mxu0 %v287
    %v1261 = vpop.f32.mrb[0].mxu0
    %v1262 = vadd.f32 0.0, %v1261
    %v1263 = vpop.f32.mrb[0].mxu0
    %1264 = vmatprep.mubr.f32.mxu0 0.0
    %1265 = vmatmul.mubr.f32.gmra.mrb[0].mxu0 %v290
    %v1266 = vpop.f32.mrb[0].mxu0
    %v1267 = vadd.f32 0.0, %v1266
    %v1268 = vpop.f32.mrb[0].mxu0
    %1269 = vmatprep.mubr.f32.mxu0 0.0
    %1270 = vmatmul.mubr.f32.gmra.mrb[0].mxu0 %v293
    %v1271 = vpop.f32.mrb[0].mxu0
    %v1272 = vadd.f32 0.0, %v1271
    %v1273 = vpop.f32.mrb[0].mxu0
    %1274 = vmatprep.mubr.f32.mxu0 0.0
    %1275 = vmatmul.mubr.f32.gmra.mrb[0].mxu0 %v296
    %v1276 = vpop.f32.mrb[0].mxu0
    %v1277 = vadd.f32 0.0, %v1276
    %v1278 = vpop.f32.mrb[0].mxu0
    %1279 = vmatprep.mubr.f32.mxu0 0.0
    %1280 = vmatmul.mubr.f32.gmra.mrb[0].mxu0 %v299
    %v1281 = vpop.f32.mrb[0].mxu0
    %v1282 = vadd.f32 0.0, %v1281
    %v1283 = vpop.f32.mrb[0].mxu0
    %1284 = vmatprep.mubr.f32.mxu0 0.0
    %1285 = vmatmul.mubr.f32.gmra.mrb[0].mxu0 %v302
    %v1286 = vpop.f32.mrb[0].mxu0
    %v1287 = vadd.f32 0.0, %v1286
    %v1288 = vpop.f32.mrb[0].mxu0
    %1289 = vmatprep.mubr.f32.mxu0 0.0
    %1290 = vmatmul.mubr.f32.gmra.mrb[0].mxu0 %v305
    %v1291 = vpop.f32.mrb[0].mxu0
    %v1292 = vadd.f32 0.0, %v1291
    %v1293 = vpop.f32.mrb[0].mxu0
    %1294 = vmatprep.mubr.f32.mxu0 0.0
    %1295 = vmatmul.mubr.f32.gmra.mrb[0].mxu0 %v687
    %v1296 = vpop.f32.mrb[0].mxu0
    %v1297 = vadd.f32 0.0, %v1296
    %v1298 = vpop.f32.mrb[0].mxu0
    %1299 = vmatprep.mubr.f32.mxu0 0.0
    %1300 = vmatmul.mubr.f32.gmra.mrb[0].mxu0 %v905
    %v1301 = vpop.f32.mrb[0].mxu0
    %v1302 = vadd.f32 0.0, %v1301
    %v1303 = vpop.f32.mrb[0].mxu0
    %1304 = vmatprep.mubr.f32.mxu0 0.0
    %1305 = vmatmul.mubr.f32.gmra.mrb[0].mxu0 %v1123
    %v1306 = vpop.f32.mrb[0].mxu0
    %v1307 = vadd.f32 0.0, %v1306
    %v1308 = vpop.f32.mrb[0].mxu0
    %1309 = vdwg.mxu0
    %v1310 = vadd.f32 %v1092, %v1192
    %v1311 = vadd.f32 %v1093, %v1197
    %v1312 = vadd.f32 %v1094, %v1202
    %v1313 = vadd.f32 %v1095, %v1207
    %v1314 = vadd.f32 %v1096, %v1212
    %v1315 = vadd.f32 %v1097, %v1217
    %v1316 = vadd.f32 %v1098, %v1222
    %v1317 = vadd.f32 %v1099, %v1227
    %v1318 = vadd.f32 %v1100, %v1232
    %v1319 = vadd.f32 %v1101, %v1237
    %v1320 = vadd.f32 %v1102, %v1242
    %v1321 = vadd.f32 %v1103, %v1247
    %v1322 = vadd.f32 %v1104, %v1252
    %v1323 = vadd.f32 %v1105, %v1257
    %v1324 = vadd.f32 %v1106, %v1262
    %v1325 = vadd.f32 %v1107, %v1267
    %v1326 = vadd.f32 %v1108, %v1272
    %v1327 = vadd.f32 %v1109, %v1277
    %v1328 = vadd.f32 %v1110, %v1282
    %v1329 = vadd.f32 %v1111, %v1287
    %v1330 = vadd.f32 %v1112, %v1292
    %v1331 = vadd.f32 %v1113, %v1297
    %v1332 = vadd.f32 %v1114, %v1302
    %v1333 = vadd.f32 %v1115, %v1307
    %v1334 = vld [vmem:[#allocation7] sm:$0x1]
    %v1336 = vlaneseq
    %v1337 = vshrl.u32 %v1336, 7
    %v1338 = vsub.s32 0, %v1337
    %v1339 = vrot.slane %v1334, %v1338
    %v1341 = vadd.f32 %v1310, %v1339
    %v1342 = vadd.f32 %v1311, %v1339
    %v1343 = vadd.f32 %v1312, %v1339
    %v1344 = vadd.f32 %v1313, %v1339
    %v1345 = vadd.f32 %v1314, %v1339
    %v1346 = vadd.f32 %v1315, %v1339
    %v1347 = vadd.f32 %v1316, %v1339
    %v1348 = vadd.f32 %v1317, %v1339
    %v1349 = vadd.f32 %v1318, %v1339
    %v1350 = vadd.f32 %v1319, %v1339
    %v1351 = vadd.f32 %v1320, %v1339
    %v1352 = vadd.f32 %v1321, %v1339
    %v1353 = vadd.f32 %v1322, %v1339
    %v1354 = vadd.f32 %v1323, %v1339
    %v1355 = vadd.f32 %v1324, %v1339
    %v1356 = vadd.f32 %v1325, %v1339
    %v1357 = vadd.f32 %v1326, %v1339
    %v1358 = vadd.f32 %v1327, %v1339
    %v1359 = vadd.f32 %v1328, %v1339
    %v1360 = vadd.f32 %v1329, %v1339
    %v1361 = vadd.f32 %v1330, %v1339
    %v1362 = vadd.f32 %v1331, %v1339
    %v1363 = vadd.f32 %v1332, %v1339
    %v1364 = vadd.f32 %v1333, %v1339
    %v1365 = vmax.f32 %v1341, 0.0
    %v1366 = vmax.f32 %v1342, 0.0
    %v1367 = vmax.f32 %v1343, 0.0
    %v1368 = vmax.f32 %v1344, 0.0
    %v1369 = vmax.f32 %v1345, 0.0
    %v1370 = vmax.f32 %v1346, 0.0
    %v1371 = vmax.f32 %v1347, 0.0
    %v1372 = vmax.f32 %v1348, 0.0
    %v1373 = vmax.f32 %v1349, 0.0
    %v1374 = vmax.f32 %v1350, 0.0
    %v1375 = vmax.f32 %v1351, 0.0
    %v1376 = vmax.f32 %v1352, 0.0
    %v1377 = vmax.f32 %v1353, 0.0
    %v1378 = vmax.f32 %v1354, 0.0
    %v1379 = vmax.f32 %v1355, 0.0
    %v1380 = vmax.f32 %v1356, 0.0
    %v1381 = vmax.f32 %v1357, 0.0
    %v1382 = vmax.f32 %v1358, 0.0
    %v1383 = vmax.f32 %v1359, 0.0
    %v1384 = vmax.f32 %v1360, 0.0
    %v1385 = vmax.f32 %v1361, 0.0
    %v1386 = vmax.f32 %v1362, 0.0
    %v1387 = vmax.f32 %v1363, 0.0
    %v1388 = vmax.f32 %v1364, 0.0
    %1413 = vrot.lane.b32.xlu0 %v1365, 127
    %v1414 = vpop.permute.xlu0 %1413
    %1415 = vrot.lane.b32.xlu0 %v1366, 127
    %v1416 = vpop.permute.xlu0 %1415
    %1417 = vrot.lane.b32.xlu0 %v1367, 127
    %v1418 = vpop.permute.xlu0 %1417
    %1419 = vrot.lane.b32.xlu0 %v1368, 127
    %v1420 = vpop.permute.xlu0 %1419
    %1421 = vrot.lane.b32.xlu0 %v1369, 127
    %v1422 = vpop.permute.xlu0 %1421
    %1423 = vrot.lane.b32.xlu0 %v1370, 127
    %v1424 = vpop.permute.xlu0 %1423
    %1425 = vrot.lane.b32.xlu0 %v1371, 127
    %v1426 = vpop.permute.xlu0 %1425
    %1427 = vrot.lane.b32.xlu0 %v1372, 127
    %v1428 = vpop.permute.xlu0 %1427
    %1429 = vrot.lane.b32.xlu0 %v1373, 127
    %v1430 = vpop.permute.xlu0 %1429
    %1431 = vrot.lane.b32.xlu0 %v1374, 127
    %v1432 = vpop.permute.xlu0 %1431
    %1433 = vrot.lane.b32.xlu0 %v1375, 127
    %v1434 = vpop.permute.xlu0 %1433
    %1435 = vrot.lane.b32.xlu0 %v1376, 127
    %v1436 = vpop.permute.xlu0 %1435
    %1437 = vrot.lane.b32.xlu0 %v1377, 127
    %v1438 = vpop.permute.xlu0 %1437
    %1439 = vrot.lane.b32.xlu0 %v1378, 127
    %v1440 = vpop.permute.xlu0 %1439
    %1441 = vrot.lane.b32.xlu0 %v1379, 127
    %v1442 = vpop.permute.xlu0 %1441
    %1443 = vrot.lane.b32.xlu0 %v1380, 127
    %v1444 = vpop.permute.xlu0 %1443
    %1445 = vrot.lane.b32.xlu0 %v1381, 127
    %v1446 = vpop.permute.xlu0 %1445
    %1447 = vrot.lane.b32.xlu0 %v1382, 127
    %v1448 = vpop.permute.xlu0 %1447
    %1449 = vrot.lane.b32.xlu0 %v1383, 127
    %v1450 = vpop.permute.xlu0 %1449
    %1451 = vrot.lane.b32.xlu0 %v1384, 127
    %v1452 = vpop.permute.xlu0 %1451
    %1453 = vrot.lane.b32.xlu0 %v1385, 127
    %v1454 = vpop.permute.xlu0 %1453
    %1455 = vrot.lane.b32.xlu0 %v1386, 127
    %v1456 = vpop.permute.xlu0 %1455
    %1457 = vrot.lane.b32.xlu0 %v1387, 127
    %v1458 = vpop.permute.xlu0 %1457
    %1459 = vrot.lane.b32.xlu0 %v1388, 127
    %v1460 = vpop.permute.xlu0 %1459
    %v1485 = vmax.f32 %v1365, %v1414
    %v1486 = vmax.f32 %v1366, %v1416
    %v1487 = vmax.f32 %v1367, %v1418
    %v1488 = vmax.f32 %v1368, %v1420
    %v1489 = vmax.f32 %v1369, %v1422
    %v1490 = vmax.f32 %v1370, %v1424
    %v1491 = vmax.f32 %v1371, %v1426
    %v1492 = vmax.f32 %v1372, %v1428
    %v1493 = vmax.f32 %v1373, %v1430
    %v1494 = vmax.f32 %v1374, %v1432
    %v1495 = vmax.f32 %v1375, %v1434
    %v1496 = vmax.f32 %v1376, %v1436
    %v1497 = vmax.f32 %v1377, %v1438
    %v1498 = vmax.f32 %v1378, %v1440
    %v1499 = vmax.f32 %v1379, %v1442
    %v1500 = vmax.f32 %v1380, %v1444
    %v1501 = vmax.f32 %v1381, %v1446
    %v1502 = vmax.f32 %v1382, %v1448
    %v1503 = vmax.f32 %v1383, %v1450
    %v1504 = vmax.f32 %v1384, %v1452
    %v1505 = vmax.f32 %v1385, %v1454
    %v1506 = vmax.f32 %v1386, %v1456
    %v1507 = vmax.f32 %v1387, %v1458
    %v1508 = vmax.f32 %v1388, %v1460
    %v1509 = vld [vmem:[#allocation8] sm:$0xff]
    %v1510 = vld [vmem:[#allocation8 + $0x8] sm:$0xff]
    %v1511 = vld [vmem:[#allocation8 + $0x10] sm:$0xff]
    %v1512 = vld [vmem:[#allocation8 + $0x18] sm:$0xff]
    %v1513 = vld [vmem:[#allocation8 + $0x20] sm:$0xff]
    %v1514 = vld [vmem:[#allocation8 + $0x28] sm:$0xff]
    %v1515 = vld [vmem:[#allocation8 + $0x30] sm:$0xff]
    %v1516 = vld [vmem:[#allocation8 + $0x38] sm:$0xff]
    %v1517 = vld [vmem:[#allocation8 + $0x40] sm:$0x7f]
    %vm1518 = vcmask 580608
    %v1520 = vsel %vm1518, %v1485, 0
    %v1523 = vsel %vm1518, %v1486, 0
    %v1526 = vsel %vm1518, %v1487, 0
    %v1529 = vsel %vm1518, %v1488, 0
    %v1532 = vsel %vm1518, %v1489, 0
    %v1535 = vsel %vm1518, %v1490, 0
    %v1538 = vsel %vm1518, %v1491, 0
    %v1541 = vsel %vm1518, %v1492, 0
    %v1544 = vsel %vm1518, %v1493, 0
    %v1547 = vsel %vm1518, %v1494, 0
    %v1550 = vsel %vm1518, %v1495, 0
    %v1553 = vsel %vm1518, %v1496, 0
    %v1556 = vsel %vm1518, %v1497, 0
    %v1559 = vsel %vm1518, %v1498, 0
    %v1562 = vsel %vm1518, %v1499, 0
    %v1565 = vsel %vm1518, %v1500, 0
    %v1568 = vsel %vm1518, %v1501, 0
    %v1571 = vsel %vm1518, %v1502, 0
    %v1574 = vsel %vm1518, %v1503, 0
    %v1577 = vsel %vm1518, %v1504, 0
    %v1580 = vsel %vm1518, %v1505, 0
    %v1583 = vsel %vm1518, %v1506, 0
    %v1586 = vsel %vm1518, %v1507, 0
    %v1589 = vsel %vm1518, %v1508, 0
    %vm1591 = vcmask 1046528
    %v1593 = vsel %vm1591, %v1517, 0
    %1595 = vmatprep.subr.mxu0 0.0
    %1596 = vmatpush1.msra.mxu0 %v1509
    %1597 = vmatprep.subr.mxu0 0.0
    %1598 = vmatpush1.msra.mxu0 %v1510
    %1599 = vmatprep.subr.mxu0 0.0
    %1600 = vmatpush1.msra.mxu0 %v1511
    %1601 = vmatprep.subr.mxu0 0.0
    %1602 = vmatpush1.msra.mxu0 %v1512
    %1603 = vmatprep.subr.mxu0 0.0
    %1604 = vmatpush1.msra.mxu0 %v1513
    %1605 = vmatprep.subr.mxu0 0.0
    %1606 = vmatpush1.msra.mxu0 %v1514
    %1607 = vmatprep.subr.mxu0 0.0
    %1608 = vmatpush1.msra.mxu0 %v1515
    %1609 = vmatprep.subr.mxu0 0.0
    %1610 = vmatpush1.msra.mxu0 %v1516
    %1611 = vmatprep.subr.mxu0 0.0
    %1612 = vmatpush1.msra.mxu0 %v1593
    %1613 = vmatprep.subr.mxu0 0.0
    %1614 = vmatpush1.msra.mxu0 0.0
    %1615 = vmatprep.subr.mxu0 0.0
    %1616 = vmatpush1.msra.mxu0 0.0
    %1617 = vmatprep.subr.mxu0 0.0
    %1618 = vmatpush1.msra.mxu0 0.0
    %1619 = vmatprep.subr.mxu0 0.0
    %1620 = vmatpush1.msra.mxu0 0.0
    %1621 = vmatprep.subr.mxu0 0.0
    %1622 = vmatpush1.msra.mxu0 0.0
    %1623 = vmatprep.subr.mxu0 0.0
    %1624 = vmatpush1.msra.mxu0 0.0
    %1625 = vmatprep.subr.mxu0 0.0
    %1626 = vmatpush1.msra.mxu0 0.0
    %1627 = vmatprep.subr.mxu0 0.0
    %1628 = vmatpush1.msra.mxu0 0.0
    %1629 = vmatprep.subr.mxu0 0.0
    %1630 = vmatpush1.msra.mxu0 0.0
    %1631 = vmatprep.subr.mxu0 0.0
    %1632 = vmatpush1.msra.mxu0 0.0
    %1633 = vmatprep.subr.mxu0 0.0
    %1634 = vmatpush1.msra.mxu0 0.0
    %1635 = vmatprep.subr.mxu0 0.0
    %1636 = vmatpush1.msra.mxu0 0.0
    %1637 = vmatprep.subr.mxu0 0.0
    %1638 = vmatpush1.msra.mxu0 0.0
    %1639 = vmatprep.subr.mxu0 0.0
    %1640 = vmatpush1.msra.mxu0 0.0
    %1641 = vmatprep.subr.mxu0 0.0
    %1642 = vmatpush1.msra.mxu0 0.0
    %1643 = vmatprep.subr.mxu0 0.0
    %1644 = vmatpush1.msra.mxu0 0.0
    %1645 = vmatprep.subr.mxu0 0.0
    %1646 = vmatpush1.msra.mxu0 0.0
    %1647 = vmatprep.subr.mxu0 0.0
    %1648 = vmatpush1.msra.mxu0 0.0
    %1649 = vmatprep.subr.mxu0 0.0
    %1650 = vmatpush1.msra.mxu0 0.0
    %1651 = vmatprep.subr.mxu0 0.0
    %1652 = vmatpush1.msra.mxu0 0.0
    %1653 = vmatprep.subr.mxu0 0.0
    %1654 = vmatpush1.msra.mxu0 0.0
    %1655 = vmatprep.subr.mxu0 0.0
    %1656 = vmatpush1.msra.mxu0 0.0
    %1657 = vmatprep.subr.mxu0 0.0
    %1658 = vmatpush1.msra.mxu0 0.0
    %1659 = vmatprep.mubr.f32.mxu0 0.0
    %1660 = vmatmul.mubr.f32.gmra.mrb[0].mxu0 %v1520
    %v1661 = vpop.f32.mrb[0].mxu0
    %v1662 = vadd.f32 0.0, %v1661
    %v1663 = vpop.f32.mrb[0].mxu0
    %1664 = vmatprep.mubr.f32.mxu0 0.0
    %1665 = vmatmul.mubr.f32.gmra.mrb[0].mxu0 %v1523
    %v1666 = vpop.f32.mrb[0].mxu0
    %v1667 = vadd.f32 0.0, %v1666
    %v1668 = vpop.f32.mrb[0].mxu0
    %1669 = vmatprep.mubr.f32.mxu0 0.0
    %1670 = vmatmul.mubr.f32.gmra.mrb[0].mxu0 %v1526
    %v1671 = vpop.f32.mrb[0].mxu0
    %v1672 = vadd.f32 0.0, %v1671
    %v1673 = vpop.f32.mrb[0].mxu0
    %1674 = vmatprep.mubr.f32.mxu0 0.0
    %1675 = vmatmul.mubr.f32.gmra.mrb[0].mxu0 %v1529
    %v1676 = vpop.f32.mrb[0].mxu0
    %v1677 = vadd.f32 0.0, %v1676
    %v1678 = vpop.f32.mrb[0].mxu0
    %1679 = vmatprep.mubr.f32.mxu0 0.0
    %1680 = vmatmul.mubr.f32.gmra.mrb[0].mxu0 %v1532
    %v1681 = vpop.f32.mrb[0].mxu0
    %v1682 = vadd.f32 0.0, %v1681
    %v1683 = vpop.f32.mrb[0].mxu0
    %1684 = vmatprep.mubr.f32.mxu0 0.0
    %1685 = vmatmul.mubr.f32.gmra.mrb[0].mxu0 %v1535
    %v1686 = vpop.f32.mrb[0].mxu0
    %v1687 = vadd.f32 0.0, %v1686
    %v1688 = vpop.f32.mrb[0].mxu0
    %1689 = vmatprep.mubr.f32.mxu0 0.0
    %1690 = vmatmul.mubr.f32.gmra.mrb[0].mxu0 %v1538
    %v1691 = vpop.f32.mrb[0].mxu0
    %v1692 = vadd.f32 0.0, %v1691
    %v1693 = vpop.f32.mrb[0].mxu0
    %1694 = vmatprep.mubr.f32.mxu0 0.0
    %1695 = vmatmul.mubr.f32.gmra.mrb[0].mxu0 %v1541
    %v1696 = vpop.f32.mrb[0].mxu0
    %v1697 = vadd.f32 0.0, %v1696
    %v1698 = vpop.f32.mrb[0].mxu0
    %1699 = vmatprep.mubr.f32.mxu0 0.0
    %1700 = vmatmul.mubr.f32.gmra.mrb[0].mxu0 %v1544
    %v1701 = vpop.f32.mrb[0].mxu0
    %v1702 = vadd.f32 0.0, %v1701
    %v1703 = vpop.f32.mrb[0].mxu0
    %1704 = vmatprep.mubr.f32.mxu0 0.0
    %1705 = vmatmul.mubr.f32.gmra.mrb[0].mxu0 %v1547
    %v1706 = vpop.f32.mrb[0].mxu0
    %v1707 = vadd.f32 0.0, %v1706
    %v1708 = vpop.f32.mrb[0].mxu0
    %1709 = vmatprep.mubr.f32.mxu0 0.0
    %1710 = vmatmul.mubr.f32.gmra.mrb[0].mxu0 %v1550
    %v1711 = vpop.f32.mrb[0].mxu0
    %v1712 = vadd.f32 0.0, %v1711
    %v1713 = vpop.f32.mrb[0].mxu0
    %1714 = vmatprep.mubr.f32.mxu0 0.0
    %1715 = vmatmul.mubr.f32.gmra.mrb[0].mxu0 %v1553
    %v1716 = vpop.f32.mrb[0].mxu0
    %v1717 = vadd.f32 0.0, %v1716
    %v1718 = vpop.f32.mrb[0].mxu0
    %1719 = vmatprep.mubr.f32.mxu0 0.0
    %1720 = vmatmul.mubr.f32.gmra.mrb[0].mxu0 %v1556
    %v1721 = vpop.f32.mrb[0].mxu0
    %v1722 = vadd.f32 0.0, %v1721
    %v1723 = vpop.f32.mrb[0].mxu0
    %1724 = vmatprep.mubr.f32.mxu0 0.0
    %1725 = vmatmul.mubr.f32.gmra.mrb[0].mxu0 %v1559
    %v1726 = vpop.f32.mrb[0].mxu0
    %v1727 = vadd.f32 0.0, %v1726
    %v1728 = vpop.f32.mrb[0].mxu0
    %1729 = vmatprep.mubr.f32.mxu0 0.0
    %1730 = vmatmul.mubr.f32.gmra.mrb[0].mxu0 %v1562
    %v1731 = vpop.f32.mrb[0].mxu0
    %v1732 = vadd.f32 0.0, %v1731
    %v1733 = vpop.f32.mrb[0].mxu0
    %1734 = vmatprep.mubr.f32.mxu0 0.0
    %1735 = vmatmul.mubr.f32.gmra.mrb[0].mxu0 %v1565
    %v1736 = vpop.f32.mrb[0].mxu0
    %v1737 = vadd.f32 0.0, %v1736
    %v1738 = vpop.f32.mrb[0].mxu0
    %1739 = vmatprep.mubr.f32.mxu0 0.0
    %1740 = vmatmul.mubr.f32.gmra.mrb[0].mxu0 %v1568
    %v1741 = vpop.f32.mrb[0].mxu0
    %v1742 = vadd.f32 0.0, %v1741
    %v1743 = vpop.f32.mrb[0].mxu0
    %1744 = vmatprep.mubr.f32.mxu0 0.0
    %1745 = vmatmul.mubr.f32.gmra.mrb[0].mxu0 %v1571
    %v1746 = vpop.f32.mrb[0].mxu0
    %v1747 = vadd.f32 0.0, %v1746
    %v1748 = vpop.f32.mrb[0].mxu0
    %1749 = vmatprep.mubr.f32.mxu0 0.0
    %1750 = vmatmul.mubr.f32.gmra.mrb[0].mxu0 %v1574
    %v1751 = vpop.f32.mrb[0].mxu0
    %v1752 = vadd.f32 0.0, %v1751
    %v1753 = vpop.f32.mrb[0].mxu0
    %1754 = vmatprep.mubr.f32.mxu0 0.0
    %1755 = vmatmul.mubr.f32.gmra.mrb[0].mxu0 %v1577
    %v1756 = vpop.f32.mrb[0].mxu0
    %v1757 = vadd.f32 0.0, %v1756
    %v1758 = vpop.f32.mrb[0].mxu0
    %1759 = vmatprep.mubr.f32.mxu0 0.0
    %1760 = vmatmul.mubr.f32.gmra.mrb[0].mxu0 %v1580
    %v1761 = vpop.f32.mrb[0].mxu0
    %v1762 = vadd.f32 0.0, %v1761
    %v1763 = vpop.f32.mrb[0].mxu0
    %1764 = vmatprep.mubr.f32.mxu0 0.0
    %1765 = vmatmul.mubr.f32.gmra.mrb[0].mxu0 %v1583
    %v1766 = vpop.f32.mrb[0].mxu0
    %v1767 = vadd.f32 0.0, %v1766
    %v1768 = vpop.f32.mrb[0].mxu0
    %1769 = vmatprep.mubr.f32.mxu0 0.0
    %1770 = vmatmul.mubr.f32.gmra.mrb[0].mxu0 %v1586
    %v1771 = vpop.f32.mrb[0].mxu0
    %v1772 = vadd.f32 0.0, %v1771
    %v1773 = vpop.f32.mrb[0].mxu0
    %1774 = vmatprep.mubr.f32.mxu0 0.0
    %1775 = vmatmul.mubr.f32.gmra.mrb[0].mxu0 %v1589
    %v1776 = vpop.f32.mrb[0].mxu0
    %v1777 = vadd.f32 0.0, %v1776
    %v1778 = vpop.f32.mrb[0].mxu0
    %1779 = vdwg.mxu0
    %v1780 = vmax.f32 %v1662, %v1667
    %v1781 = vmax.f32 %v1672, %v1677
    %v1782 = vmax.f32 %v1682, %v1687
    %v1783 = vmax.f32 %v1692, %v1697
    %v1784 = vmax.f32 %v1702, %v1707
    %v1785 = vmax.f32 %v1712, %v1717
    %v1786 = vmax.f32 %v1722, %v1727
    %v1787 = vmax.f32 %v1732, %v1737
    %v1788 = vmax.f32 %v1742, %v1747
    %v1789 = vmax.f32 %v1752, %v1757
    %v1790 = vmax.f32 %v1762, %v1767
    %v1791 = vmax.f32 %v1772, %v1777
    %v1792 = vld [vmem:[#allocation10] sm:$0xff]
    %v1793 = vld [vmem:[#allocation10 + $0x8] sm:$0xff]
    %v1794 = vld [vmem:[#allocation10 + $0x10] sm:$0xff]
    %v1795 = vld [vmem:[#allocation10 + $0x18] sm:$0xff]
    %v1796 = vld [vmem:[#allocation10 + $0x20] sm:$0xff]
    %v1797 = vld [vmem:[#allocation10 + $0x28] sm:$0xff]
    %v1798 = vld [vmem:[#allocation10 + $0x30] sm:$0xff]
    %v1799 = vld [vmem:[#allocation10 + $0x38] sm:$0xff]
    %v1800 = vld [vmem:[#allocation10 + $0x40] sm:$0xf]
    %v1801 = vld [vmem:[#allocation10 + $0x48] sm:$0xf]
    %s1802 = scalar_lea.vmem [#allocation10], 80
    %v1803 = vld [vmem:[%s1802] sm:$0xff]
    %v1804 = vld [vmem:[%s1802 + $0x8] sm:$0xff]
    %v1805 = vld [vmem:[%s1802 + $0x10] sm:$0xff]
    %v1806 = vld [vmem:[%s1802 + $0x18] sm:$0xff]
    %v1807 = vld [vmem:[%s1802 + $0x20] sm:$0xff]
    %v1808 = vld [vmem:[%s1802 + $0x28] sm:$0xff]
    %v1809 = vld [vmem:[%s1802 + $0x30] sm:$0xff]
    %v1810 = vld [vmem:[%s1802 + $0x38] sm:$0xff]
    %v1811 = vld [vmem:[%s1802 + $0x40] sm:$0xf]
    %v1812 = vld [vmem:[%s1802 + $0x48] sm:$0xf]
    %vm1813 = vcmask 293888
    %v1815 = vsel %vm1813, %v1781, 0
    %v1818 = vsel %vm1813, %v1782, 0
    %v1821 = vsel %vm1813, %v1783, 0
    %v1824 = vsel %vm1813, %v1784, 0
    %v1827 = vsel %vm1813, %v1785, 0
    %v1830 = vsel %vm1813, %v1786, 0
    %v1833 = vsel %vm1813, %v1787, 0
    %v1836 = vsel %vm1813, %v1788, 0
    %vm1838 = vcmask 1043456
    %v1840 = vsel %vm1838, %v1811, 0
    %v1843 = vsel %vm1838, %v1812, 0
    %1845 = vmatprep.subr.mxu0 %v1804
    %1846 = vmatpush1.msra.mxu0 %v1803
    %1847 = vmatprep.subr.mxu0 %v1806
    %1848 = vmatpush1.msra.mxu0 %v1805
    %1849 = vmatprep.subr.mxu0 %v1808
    %1850 = vmatpush1.msra.mxu0 %v1807
    %1851 = vmatprep.subr.mxu0 %v1810
    %1852 = vmatpush1.msra.mxu0 %v1809
    %1853 = vmatprep.subr.mxu0 %v1843
    %1854 = vmatpush1.msra.mxu0 %v1840
    %1855 = vmatprep.subr.mxu0 0.0
    %1856 = vmatpush1.msra.mxu0 0.0
    %1857 = vmatprep.subr.mxu0 0.0
    %1858 = vmatpush1.msra.mxu0 0.0
    %1859 = vmatprep.subr.mxu0 0.0
    %1860 = vmatpush1.msra.mxu0 0.0
    %1861 = vmatprep.subr.mxu0 0.0
    %1862 = vmatpush1.msra.mxu0 0.0
    %1863 = vmatprep.subr.mxu0 0.0
    %1864 = vmatpush1.msra.mxu0 0.0
    %1865 = vmatprep.subr.mxu0 0.0
    %1866 = vmatpush1.msra.mxu0 0.0
    %1867 = vmatprep.subr.mxu0 0.0
    %1868 = vmatpush1.msra.mxu0 0.0
    %1869 = vmatprep.subr.mxu0 0.0
    %1870 = vmatpush1.msra.mxu0 0.0
    %1871 = vmatprep.subr.mxu0 0.0
    %1872 = vmatpush1.msra.mxu0 0.0
    %1873 = vmatprep.subr.mxu0 0.0
    %1874 = vmatpush1.msra.mxu0 0.0
    %1875 = vmatprep.subr.mxu0 0.0
    %1876 = vmatpush1.msra.mxu0 0.0
    %1877 = vmatprep.subr.mxu0 0.0
    %1878 = vmatpush1.msra.mxu0 0.0
    %1879 = vmatprep.subr.mxu0 0.0
    %1880 = vmatpush1.msra.mxu0 0.0
    %1881 = vmatprep.subr.mxu0 0.0
    %1882 = vmatpush1.msra.mxu0 0.0
    %1883 = vmatprep.subr.mxu0 0.0
    %1884 = vmatpush1.msra.mxu0 0.0
    %1885 = vmatprep.subr.mxu0 0.0
    %1886 = vmatpush1.msra.mxu0 0.0
    %1887 = vmatprep.subr.mxu0 0.0
    %1888 = vmatpush1.msra.mxu0 0.0
    %1889 = vmatprep.subr.mxu0 0.0
    %1890 = vmatpush1.msra.mxu0 0.0
    %1891 = vmatprep.subr.mxu0 0.0
    %1892 = vmatpush1.msra.mxu0 0.0
    %1893 = vmatprep.subr.mxu0 0.0
    %1894 = vmatpush1.msra.mxu0 0.0
    %1895 = vmatprep.subr.mxu0 0.0
    %1896 = vmatpush1.msra.mxu0 0.0
    %1897 = vmatprep.subr.mxu0 0.0
    %1898 = vmatpush1.msra.mxu0 0.0
    %1899 = vmatprep.subr.mxu0 0.0
    %1900 = vmatpush1.msra.mxu0 0.0
    %1901 = vmatprep.subr.mxu0 0.0
    %1902 = vmatpush1.msra.mxu0 0.0
    %1903 = vmatprep.subr.mxu0 0.0
    %1904 = vmatpush1.msra.mxu0 0.0
    %1905 = vmatprep.subr.mxu0 0.0
    %1906 = vmatpush1.msra.mxu0 0.0
    %1907 = vmatprep.subr.mxu0 0.0
    %1908 = vmatpush1.msra.mxu0 0.0
    %1909 = vmatprep.mubr.f32.mxu0 0.0
    %1910 = vmatmul.mubr.f32.gmra.mrb[0].mxu0 %v1815
    %v1911 = vpop.f32.mrb[0].mxu0
    %v1912 = vadd.f32 0.0, %v1911
    %v1913 = vpop.f32.mrb[0].mxu0
    %v1914 = vadd.f32 0.0, %v1913
    %1915 = vmatprep.mubr.f32.mxu0 0.0
    %1916 = vmatmul.mubr.f32.gmra.mrb[0].mxu0 %v1818
    %v1917 = vpop.f32.mrb[0].mxu0
    %v1918 = vadd.f32 0.0, %v1917
    %v1919 = vpop.f32.mrb[0].mxu0
    %v1920 = vadd.f32 0.0, %v1919
    %1921 = vmatprep.mubr.f32.mxu0 0.0
    %1922 = vmatmul.mubr.f32.gmra.mrb[0].mxu0 %v1821
    %v1923 = vpop.f32.mrb[0].mxu0
    %v1924 = vadd.f32 0.0, %v1923
    %v1925 = vpop.f32.mrb[0].mxu0
    %v1926 = vadd.f32 0.0, %v1925
    %1927 = vmatprep.mubr.f32.mxu0 0.0
    %1928 = vmatmul.mubr.f32.gmra.mrb[0].mxu0 %v1824
    %v1929 = vpop.f32.mrb[0].mxu0
    %v1930 = vadd.f32 0.0, %v1929
    %v1931 = vpop.f32.mrb[0].mxu0
    %v1932 = vadd.f32 0.0, %v1931
    %1933 = vmatprep.mubr.f32.mxu0 0.0
    %1934 = vmatmul.mubr.f32.gmra.mrb[0].mxu0 %v1827
    %v1935 = vpop.f32.mrb[0].mxu0
    %v1936 = vadd.f32 0.0, %v1935
    %v1937 = vpop.f32.mrb[0].mxu0
    %v1938 = vadd.f32 0.0, %v1937
    %1939 = vmatprep.mubr.f32.mxu0 0.0
    %1940 = vmatmul.mubr.f32.gmra.mrb[0].mxu0 %v1830
    %v1941 = vpop.f32.mrb[0].mxu0
    %v1942 = vadd.f32 0.0, %v1941
    %v1943 = vpop.f32.mrb[0].mxu0
    %v1944 = vadd.f32 0.0, %v1943
    %1945 = vmatprep.mubr.f32.mxu0 0.0
    %1946 = vmatmul.mubr.f32.gmra.mrb[0].mxu0 %v1833
    %v1947 = vpop.f32.mrb[0].mxu0
    %v1948 = vadd.f32 0.0, %v1947
    %v1949 = vpop.f32.mrb[0].mxu0
    %v1950 = vadd.f32 0.0, %v1949
    %1951 = vmatprep.mubr.f32.mxu0 0.0
    %1952 = vmatmul.mubr.f32.gmra.mrb[0].mxu0 %v1836
    %v1953 = vpop.f32.mrb[0].mxu0
    %v1954 = vadd.f32 0.0, %v1953
    %v1955 = vpop.f32.mrb[0].mxu0
    %v1956 = vadd.f32 0.0, %v1955
    %1957 = vdwg.mxu0
    %v1959 = vsel %vm1813, %v1780, 0
    %v1962 = vsel %vm1838, %v1800, 0
    %v1965 = vsel %vm1838, %v1801, 0
    %1967 = vmatprep.subr.mxu0 %v1793
    %1968 = vmatpush1.msra.mxu0 %v1792
    %1969 = vmatprep.subr.mxu0 %v1795
    %1970 = vmatpush1.msra.mxu0 %v1794
    %1971 = vmatprep.subr.mxu0 %v1797
    %1972 = vmatpush1.msra.mxu0 %v1796
    %1973 = vmatprep.subr.mxu0 %v1799
    %1974 = vmatpush1.msra.mxu0 %v1798
    %1975 = vmatprep.subr.mxu0 %v1965
    %1976 = vmatpush1.msra.mxu0 %v1962
    %1977 = vmatprep.subr.mxu0 0.0
    %1978 = vmatpush1.msra.mxu0 0.0
    %1979 = vmatprep.subr.mxu0 0.0
    %1980 = vmatpush1.msra.mxu0 0.0
    %1981 = vmatprep.subr.mxu0 0.0
    %1982 = vmatpush1.msra.mxu0 0.0
    %1983 = vmatprep.subr.mxu0 0.0
    %1984 = vmatpush1.msra.mxu0 0.0
    %1985 = vmatprep.subr.mxu0 0.0
    %1986 = vmatpush1.msra.mxu0 0.0
    %1987 = vmatprep.subr.mxu0 0.0
    %1988 = vmatpush1.msra.mxu0 0.0
    %1989 = vmatprep.subr.mxu0 0.0
    %1990 = vmatpush1.msra.mxu0 0.0
    %1991 = vmatprep.subr.mxu0 0.0
    %1992 = vmatpush1.msra.mxu0 0.0
    %1993 = vmatprep.subr.mxu0 0.0
    %1994 = vmatpush1.msra.mxu0 0.0
    %1995 = vmatprep.subr.mxu0 0.0
    %1996 = vmatpush1.msra.mxu0 0.0
    %1997 = vmatprep.subr.mxu0 0.0
    %1998 = vmatpush1.msra.mxu0 0.0
    %1999 = vmatprep.subr.mxu0 0.0
    %2000 = vmatpush1.msra.mxu0 0.0
    %2001 = vmatprep.subr.mxu0 0.0
    %2002 = vmatpush1.msra.mxu0 0.0
    %2003 = vmatprep.subr.mxu0 0.0
    %2004 = vmatpush1.msra.mxu0 0.0
    %2005 = vmatprep.subr.mxu0 0.0
    %2006 = vmatpush1.msra.mxu0 0.0
    %2007 = vmatprep.subr.mxu0 0.0
    %2008 = vmatpush1.msra.mxu0 0.0
    %2009 = vmatprep.subr.mxu0 0.0
    %2010 = vmatpush1.msra.mxu0 0.0
    %2011 = vmatprep.subr.mxu0 0.0
    %2012 = vmatpush1.msra.mxu0 0.0
    %2013 = vmatprep.subr.mxu0 0.0
    %2014 = vmatpush1.msra.mxu0 0.0
    %2015 = vmatprep.subr.mxu0 0.0
    %2016 = vmatpush1.msra.mxu0 0.0
    %2017 = vmatprep.subr.mxu0 0.0
    %2018 = vmatpush1.msra.mxu0 0.0
    %2019 = vmatprep.subr.mxu0 0.0
    %2020 = vmatpush1.msra.mxu0 0.0
    %2021 = vmatprep.subr.mxu0 0.0
    %2022 = vmatpush1.msra.mxu0 0.0
    %2023 = vmatprep.subr.mxu0 0.0
    %2024 = vmatpush1.msra.mxu0 0.0
    %2025 = vmatprep.subr.mxu0 0.0
    %2026 = vmatpush1.msra.mxu0 0.0
    %2027 = vmatprep.subr.mxu0 0.0
    %2028 = vmatpush1.msra.mxu0 0.0
    %2029 = vmatprep.subr.mxu0 0.0
    %2030 = vmatpush1.msra.mxu0 0.0
    %2031 = vmatprep.mubr.f32.mxu0 0.0
    %2032 = vmatmul.mubr.f32.gmra.mrb[0].mxu0 %v1959
    %v2033 = vpop.f32.mrb[0].mxu0
    %v2034 = vadd.f32 %v1912, %v2033
    %v2035 = vpop.f32.mrb[0].mxu0
    %v2036 = vadd.f32 %v1914, %v2035
    %2037 = vmatprep.mubr.f32.mxu0 0.0
    %2038 = vmatmul.mubr.f32.gmra.mrb[0].mxu0 %v1815
    %v2039 = vpop.f32.mrb[0].mxu0
    %v2040 = vadd.f32 %v1918, %v2039
    %v2041 = vpop.f32.mrb[0].mxu0
    %v2042 = vadd.f32 %v1920, %v2041
    %2043 = vmatprep.mubr.f32.mxu0 0.0
    %2044 = vmatmul.mubr.f32.gmra.mrb[0].mxu0 %v1818
    %v2045 = vpop.f32.mrb[0].mxu0
    %v2046 = vadd.f32 %v1924, %v2045
    %v2047 = vpop.f32.mrb[0].mxu0
    %v2048 = vadd.f32 %v1926, %v2047
    %2049 = vmatprep.mubr.f32.mxu0 0.0
    %2050 = vmatmul.mubr.f32.gmra.mrb[0].mxu0 %v1821
    %v2051 = vpop.f32.mrb[0].mxu0
    %v2052 = vadd.f32 %v1930, %v2051
    %v2053 = vpop.f32.mrb[0].mxu0
    %v2054 = vadd.f32 %v1932, %v2053
    %2055 = vmatprep.mubr.f32.mxu0 0.0
    %2056 = vmatmul.mubr.f32.gmra.mrb[0].mxu0 %v1824
    %v2057 = vpop.f32.mrb[0].mxu0
    %v2058 = vadd.f32 %v1936, %v2057
    %v2059 = vpop.f32.mrb[0].mxu0
    %v2060 = vadd.f32 %v1938, %v2059
    %2061 = vmatprep.mubr.f32.mxu0 0.0
    %2062 = vmatmul.mubr.f32.gmra.mrb[0].mxu0 %v1827
    %v2063 = vpop.f32.mrb[0].mxu0
    %v2064 = vadd.f32 %v1942, %v2063
    %v2065 = vpop.f32.mrb[0].mxu0
    %v2066 = vadd.f32 %v1944, %v2065
    %2067 = vmatprep.mubr.f32.mxu0 0.0
    %2068 = vmatmul.mubr.f32.gmra.mrb[0].mxu0 %v1830
    %v2069 = vpop.f32.mrb[0].mxu0
    %v2070 = vadd.f32 %v1948, %v2069
    %v2071 = vpop.f32.mrb[0].mxu0
    %v2072 = vadd.f32 %v1950, %v2071
    %2073 = vmatprep.mubr.f32.mxu0 0.0
    %2074 = vmatmul.mubr.f32.gmra.mrb[0].mxu0 %v1833
    %v2075 = vpop.f32.mrb[0].mxu0
    %v2076 = vadd.f32 %v1954, %v2075
    %v2077 = vpop.f32.mrb[0].mxu0
    %v2078 = vadd.f32 %v1956, %v2077
    %2079 = vdwg.mxu0
    %s2080 = scalar_lea.vmem [#allocation10], 160
    %v2081 = vld [vmem:[%s2080] sm:$0xff]
    %v2082 = vld [vmem:[%s2080 + $0x8] sm:$0xff]
    %v2083 = vld [vmem:[%s2080 + $0x10] sm:$0xff]
    %v2084 = vld [vmem:[%s2080 + $0x18] sm:$0xff]
    %v2085 = vld [vmem:[%s2080 + $0x20] sm:$0xff]
    %v2086 = vld [vmem:[%s2080 + $0x28] sm:$0xff]
    %v2087 = vld [vmem:[%s2080 + $0x30] sm:$0xff]
    %v2088 = vld [vmem:[%s2080 + $0x38] sm:$0xff]
    %v2089 = vld [vmem:[%s2080 + $0x40] sm:$0xf]
    %v2090 = vld [vmem:[%s2080 + $0x48] sm:$0xf]
    %v2092 = vsel %vm1813, %v1789, 0
    %v2095 = vsel %vm1838, %v2089, 0
    %v2098 = vsel %vm1838, %v2090, 0
    %2100 = vmatprep.subr.mxu0 %v2082
    %2101 = vmatpush1.msra.mxu0 %v2081
    %2102 = vmatprep.subr.mxu0 %v2084
    %2103 = vmatpush1.msra.mxu0 %v2083
    %2104 = vmatprep.subr.mxu0 %v2086
    %2105 = vmatpush1.msra.mxu0 %v2085
    %2106 = vmatprep.subr.mxu0 %v2088
    %2107 = vmatpush1.msra.mxu0 %v2087
    %2108 = vmatprep.subr.mxu0 %v2098
    %2109 = vmatpush1.msra.mxu0 %v2095
    %2110 = vmatprep.subr.mxu0 0.0
    %2111 = vmatpush1.msra.mxu0 0.0
    %2112 = vmatprep.subr.mxu0 0.0
    %2113 = vmatpush1.msra.mxu0 0.0
    %2114 = vmatprep.subr.mxu0 0.0
    %2115 = vmatpush1.msra.mxu0 0.0
    %2116 = vmatprep.subr.mxu0 0.0
    %2117 = vmatpush1.msra.mxu0 0.0
    %2118 = vmatprep.subr.mxu0 0.0
    %2119 = vmatpush1.msra.mxu0 0.0
    %2120 = vmatprep.subr.mxu0 0.0
    %2121 = vmatpush1.msra.mxu0 0.0
    %2122 = vmatprep.subr.mxu0 0.0
    %2123 = vmatpush1.msra.mxu0 0.0
    %2124 = vmatprep.subr.mxu0 0.0
    %2125 = vmatpush1.msra.mxu0 0.0
    %2126 = vmatprep.subr.mxu0 0.0
    %2127 = vmatpush1.msra.mxu0 0.0
    %2128 = vmatprep.subr.mxu0 0.0
    %2129 = vmatpush1.msra.mxu0 0.0
    %2130 = vmatprep.subr.mxu0 0.0
    %2131 = vmatpush1.msra.mxu0 0.0
    %2132 = vmatprep.subr.mxu0 0.0
    %2133 = vmatpush1.msra.mxu0 0.0
    %2134 = vmatprep.subr.mxu0 0.0
    %2135 = vmatpush1.msra.mxu0 0.0
    %2136 = vmatprep.subr.mxu0 0.0
    %2137 = vmatpush1.msra.mxu0 0.0
    %2138 = vmatprep.subr.mxu0 0.0
    %2139 = vmatpush1.msra.mxu0 0.0
    %2140 = vmatprep.subr.mxu0 0.0
    %2141 = vmatpush1.msra.mxu0 0.0
    %2142 = vmatprep.subr.mxu0 0.0
    %2143 = vmatpush1.msra.mxu0 0.0
    %2144 = vmatprep.subr.mxu0 0.0
    %2145 = vmatpush1.msra.mxu0 0.0
    %2146 = vmatprep.subr.mxu0 0.0
    %2147 = vmatpush1.msra.mxu0 0.0
    %2148 = vmatprep.subr.mxu0 0.0
    %2149 = vmatpush1.msra.mxu0 0.0
    %2150 = vmatprep.subr.mxu0 0.0
    %2151 = vmatpush1.msra.mxu0 0.0
    %2152 = vmatprep.subr.mxu0 0.0
    %2153 = vmatpush1.msra.mxu0 0.0
    %2154 = vmatprep.subr.mxu0 0.0
    %2155 = vmatpush1.msra.mxu0 0.0
    %2156 = vmatprep.subr.mxu0 0.0
    %2157 = vmatpush1.msra.mxu0 0.0
    %2158 = vmatprep.subr.mxu0 0.0
    %2159 = vmatpush1.msra.mxu0 0.0
    %2160 = vmatprep.subr.mxu0 0.0
    %2161 = vmatpush1.msra.mxu0 0.0
    %2162 = vmatprep.subr.mxu0 0.0
    %2163 = vmatpush1.msra.mxu0 0.0
    %2164 = vmatprep.mubr.f32.mxu0 0.0
    %2165 = vmatmul.mubr.f32.gmra.mrb[0].mxu0 %v1818
    %v2166 = vpop.f32.mrb[0].mxu0
    %v2167 = vadd.f32 0.0, %v2166
    %v2168 = vpop.f32.mrb[0].mxu0
    %v2169 = vadd.f32 0.0, %v2168
    %2170 = vmatprep.mubr.f32.mxu0 0.0
    %2171 = vmatmul.mubr.f32.gmra.mrb[0].mxu0 %v1821
    %v2172 = vpop.f32.mrb[0].mxu0
    %v2173 = vadd.f32 0.0, %v2172
    %v2174 = vpop.f32.mrb[0].mxu0
    %v2175 = vadd.f32 0.0, %v2174
    %2176 = vmatprep.mubr.f32.mxu0 0.0
    %2177 = vmatmul.mubr.f32.gmra.mrb[0].mxu0 %v1824
    %v2178 = vpop.f32.mrb[0].mxu0
    %v2179 = vadd.f32 0.0, %v2178
    %v2180 = vpop.f32.mrb[0].mxu0
    %v2181 = vadd.f32 0.0, %v2180
    %2182 = vmatprep.mubr.f32.mxu0 0.0
    %2183 = vmatmul.mubr.f32.gmra.mrb[0].mxu0 %v1827
    %v2184 = vpop.f32.mrb[0].mxu0
    %v2185 = vadd.f32 0.0, %v2184
    %v2186 = vpop.f32.mrb[0].mxu0
    %v2187 = vadd.f32 0.0, %v2186
    %2188 = vmatprep.mubr.f32.mxu0 0.0
    %2189 = vmatmul.mubr.f32.gmra.mrb[0].mxu0 %v1830
    %v2190 = vpop.f32.mrb[0].mxu0
    %v2191 = vadd.f32 0.0, %v2190
    %v2192 = vpop.f32.mrb[0].mxu0
    %v2193 = vadd.f32 0.0, %v2192
    %2194 = vmatprep.mubr.f32.mxu0 0.0
    %2195 = vmatmul.mubr.f32.gmra.mrb[0].mxu0 %v1833
    %v2196 = vpop.f32.mrb[0].mxu0
    %v2197 = vadd.f32 0.0, %v2196
    %v2198 = vpop.f32.mrb[0].mxu0
    %v2199 = vadd.f32 0.0, %v2198
    %2200 = vmatprep.mubr.f32.mxu0 0.0
    %2201 = vmatmul.mubr.f32.gmra.mrb[0].mxu0 %v1836
    %v2202 = vpop.f32.mrb[0].mxu0
    %v2203 = vadd.f32 0.0, %v2202
    %v2204 = vpop.f32.mrb[0].mxu0
    %v2205 = vadd.f32 0.0, %v2204
    %2206 = vmatprep.mubr.f32.mxu0 0.0
    %2207 = vmatmul.mubr.f32.gmra.mrb[0].mxu0 %v2092
    %v2208 = vpop.f32.mrb[0].mxu0
    %v2209 = vadd.f32 0.0, %v2208
    %v2210 = vpop.f32.mrb[0].mxu0
    %v2211 = vadd.f32 0.0, %v2210
    %2212 = vdwg.mxu0
    %v2213 = vadd.f32 %v2034, %v2167
    %v2214 = vadd.f32 %v2036, %v2169
    %v2215 = vadd.f32 %v2040, %v2173
    %v2216 = vadd.f32 %v2042, %v2175
    %v2217 = vadd.f32 %v2046, %v2179
    %v2218 = vadd.f32 %v2048, %v2181
    %v2219 = vadd.f32 %v2052, %v2185
    %v2220 = vadd.f32 %v2054, %v2187
    %v2221 = vadd.f32 %v2058, %v2191
    %v2222 = vadd.f32 %v2060, %v2193
    %v2223 = vadd.f32 %v2064, %v2197
    %v2224 = vadd.f32 %v2066, %v2199
    %v2225 = vadd.f32 %v2070, %v2203
    %v2226 = vadd.f32 %v2072, %v2205
    %v2227 = vadd.f32 %v2076, %v2209
    %v2228 = vadd.f32 %v2078, %v2211
    %s2229 = scalar_lea.vmem [#allocation10], 240
    %v2230 = vld [vmem:[%s2229] sm:$0xff]
    %v2231 = vld [vmem:[%s2229 + $0x8] sm:$0xff]
    %v2232 = vld [vmem:[%s2229 + $0x10] sm:$0xff]
    %v2233 = vld [vmem:[%s2229 + $0x18] sm:$0xff]
    %v2234 = vld [vmem:[%s2229 + $0x20] sm:$0xff]
    %v2235 = vld [vmem:[%s2229 + $0x28] sm:$0xff]
    %v2236 = vld [vmem:[%s2229 + $0x30] sm:$0xff]
    %v2237 = vld [vmem:[%s2229 + $0x38] sm:$0xff]
    %v2238 = vld [vmem:[%s2229 + $0x40] sm:$0xf]
    %v2239 = vld [vmem:[%s2229 + $0x48] sm:$0xf]
    %v2241 = vsel %vm1813, %v1790, 0
    %v2244 = vsel %vm1838, %v2238, 0
    %v2247 = vsel %vm1838, %v2239, 0
    %2249 = vmatprep.subr.mxu0 %v2231
    %2250 = vmatpush1.msra.mxu0 %v2230
    %2251 = vmatprep.subr.mxu0 %v2233
    %2252 = vmatpush1.msra.mxu0 %v2232
    %2253 = vmatprep.subr.mxu0 %v2235
    %2254 = vmatpush1.msra.mxu0 %v2234
    %2255 = vmatprep.subr.mxu0 %v2237
    %2256 = vmatpush1.msra.mxu0 %v2236
    %2257 = vmatprep.subr.mxu0 %v2247
    %2258 = vmatpush1.msra.mxu0 %v2244
    %2259 = vmatprep.subr.mxu0 0.0
    %2260 = vmatpush1.msra.mxu0 0.0
    %2261 = vmatprep.subr.mxu0 0.0
    %2262 = vmatpush1.msra.mxu0 0.0
    %2263 = vmatprep.subr.mxu0 0.0
    %2264 = vmatpush1.msra.mxu0 0.0
    %2265 = vmatprep.subr.mxu0 0.0
    %2266 = vmatpush1.msra.mxu0 0.0
    %2267 = vmatprep.subr.mxu0 0.0
    %2268 = vmatpush1.msra.mxu0 0.0
    %2269 = vmatprep.subr.mxu0 0.0
    %2270 = vmatpush1.msra.mxu0 0.0
    %2271 = vmatprep.subr.mxu0 0.0
    %2272 = vmatpush1.msra.mxu0 0.0
    %2273 = vmatprep.subr.mxu0 0.0
    %2274 = vmatpush1.msra.mxu0 0.0
    %2275 = vmatprep.subr.mxu0 0.0
    %2276 = vmatpush1.msra.mxu0 0.0
    %2277 = vmatprep.subr.mxu0 0.0
    %2278 = vmatpush1.msra.mxu0 0.0
    %2279 = vmatprep.subr.mxu0 0.0
    %2280 = vmatpush1.msra.mxu0 0.0
    %2281 = vmatprep.subr.mxu0 0.0
    %2282 = vmatpush1.msra.mxu0 0.0
    %2283 = vmatprep.subr.mxu0 0.0
    %2284 = vmatpush1.msra.mxu0 0.0
    %2285 = vmatprep.subr.mxu0 0.0
    %2286 = vmatpush1.msra.mxu0 0.0
    %2287 = vmatprep.subr.mxu0 0.0
    %2288 = vmatpush1.msra.mxu0 0.0
    %2289 = vmatprep.subr.mxu0 0.0
    %2290 = vmatpush1.msra.mxu0 0.0
    %2291 = vmatprep.subr.mxu0 0.0
    %2292 = vmatpush1.msra.mxu0 0.0
    %2293 = vmatprep.subr.mxu0 0.0
    %2294 = vmatpush1.msra.mxu0 0.0
    %2295 = vmatprep.subr.mxu0 0.0
    %2296 = vmatpush1.msra.mxu0 0.0
    %2297 = vmatprep.subr.mxu0 0.0
    %2298 = vmatpush1.msra.mxu0 0.0
    %2299 = vmatprep.subr.mxu0 0.0
    %2300 = vmatpush1.msra.mxu0 0.0
    %2301 = vmatprep.subr.mxu0 0.0
    %2302 = vmatpush1.msra.mxu0 0.0
    %2303 = vmatprep.subr.mxu0 0.0
    %2304 = vmatpush1.msra.mxu0 0.0
    %2305 = vmatprep.subr.mxu0 0.0
    %2306 = vmatpush1.msra.mxu0 0.0
    %2307 = vmatprep.subr.mxu0 0.0
    %2308 = vmatpush1.msra.mxu0 0.0
    %2309 = vmatprep.subr.mxu0 0.0
    %2310 = vmatpush1.msra.mxu0 0.0
    %2311 = vmatprep.subr.mxu0 0.0
    %2312 = vmatpush1.msra.mxu0 0.0
    %2313 = vmatprep.mubr.f32.mxu0 0.0
    %2314 = vmatmul.mubr.f32.gmra.mrb[0].mxu0 %v1821
    %v2315 = vpop.f32.mrb[0].mxu0
    %v2316 = vadd.f32 0.0, %v2315
    %v2317 = vpop.f32.mrb[0].mxu0
    %v2318 = vadd.f32 0.0, %v2317
    %2319 = vmatprep.mubr.f32.mxu0 0.0
    %2320 = vmatmul.mubr.f32.gmra.mrb[0].mxu0 %v1824
    %v2321 = vpop.f32.mrb[0].mxu0
    %v2322 = vadd.f32 0.0, %v2321
    %v2323 = vpop.f32.mrb[0].mxu0
    %v2324 = vadd.f32 0.0, %v2323
    %2325 = vmatprep.mubr.f32.mxu0 0.0
    %2326 = vmatmul.mubr.f32.gmra.mrb[0].mxu0 %v1827
    %v2327 = vpop.f32.mrb[0].mxu0
    %v2328 = vadd.f32 0.0, %v2327
    %v2329 = vpop.f32.mrb[0].mxu0
    %v2330 = vadd.f32 0.0, %v2329
    %2331 = vmatprep.mubr.f32.mxu0 0.0
    %2332 = vmatmul.mubr.f32.gmra.mrb[0].mxu0 %v1830
    %v2333 = vpop.f32.mrb[0].mxu0
    %v2334 = vadd.f32 0.0, %v2333
    %v2335 = vpop.f32.mrb[0].mxu0
    %v2336 = vadd.f32 0.0, %v2335
    %2337 = vmatprep.mubr.f32.mxu0 0.0
    %2338 = vmatmul.mubr.f32.gmra.mrb[0].mxu0 %v1833
    %v2339 = vpop.f32.mrb[0].mxu0
    %v2340 = vadd.f32 0.0, %v2339
    %v2341 = vpop.f32.mrb[0].mxu0
    %v2342 = vadd.f32 0.0, %v2341
    %2343 = vmatprep.mubr.f32.mxu0 0.0
    %2344 = vmatmul.mubr.f32.gmra.mrb[0].mxu0 %v1836
    %v2345 = vpop.f32.mrb[0].mxu0
    %v2346 = vadd.f32 0.0, %v2345
    %v2347 = vpop.f32.mrb[0].mxu0
    %v2348 = vadd.f32 0.0, %v2347
    %2349 = vmatprep.mubr.f32.mxu0 0.0
    %2350 = vmatmul.mubr.f32.gmra.mrb[0].mxu0 %v2092
    %v2351 = vpop.f32.mrb[0].mxu0
    %v2352 = vadd.f32 0.0, %v2351
    %v2353 = vpop.f32.mrb[0].mxu0
    %v2354 = vadd.f32 0.0, %v2353
    %2355 = vmatprep.mubr.f32.mxu0 0.0
    %2356 = vmatmul.mubr.f32.gmra.mrb[0].mxu0 %v2241
    %v2357 = vpop.f32.mrb[0].mxu0
    %v2358 = vadd.f32 0.0, %v2357
    %v2359 = vpop.f32.mrb[0].mxu0
    %v2360 = vadd.f32 0.0, %v2359
    %2361 = vdwg.mxu0
    %v2362 = vadd.f32 %v2213, %v2316
    %v2363 = vadd.f32 %v2214, %v2318
    %v2364 = vadd.f32 %v2215, %v2322
    %v2365 = vadd.f32 %v2216, %v2324
    %v2366 = vadd.f32 %v2217, %v2328
    %v2367 = vadd.f32 %v2218, %v2330
    %v2368 = vadd.f32 %v2219, %v2334
    %v2369 = vadd.f32 %v2220, %v2336
    %v2370 = vadd.f32 %v2221, %v2340
    %v2371 = vadd.f32 %v2222, %v2342
    %v2372 = vadd.f32 %v2223, %v2346
    %v2373 = vadd.f32 %v2224, %v2348
    %v2374 = vadd.f32 %v2225, %v2352
    %v2375 = vadd.f32 %v2226, %v2354
    %v2376 = vadd.f32 %v2227, %v2358
    %v2377 = vadd.f32 %v2228, %v2360
    %s2378 = scalar_lea.vmem [#allocation10], 320
    %v2379 = vld [vmem:[%s2378] sm:$0xff]
    %v2380 = vld [vmem:[%s2378 + $0x8] sm:$0xff]
    %v2381 = vld [vmem:[%s2378 + $0x10] sm:$0xff]
    %v2382 = vld [vmem:[%s2378 + $0x18] sm:$0xff]
    %v2383 = vld [vmem:[%s2378 + $0x20] sm:$0xff]
    %v2384 = vld [vmem:[%s2378 + $0x28] sm:$0xff]
    %v2385 = vld [vmem:[%s2378 + $0x30] sm:$0xff]
    %v2386 = vld [vmem:[%s2378 + $0x38] sm:$0xff]
    %v2387 = vld [vmem:[%s2378 + $0x40] sm:$0xf]
    %v2388 = vld [vmem:[%s2378 + $0x48] sm:$0xf]
    %v2390 = vsel %vm1813, %v1791, 0
    %v2393 = vsel %vm1838, %v2387, 0
    %v2396 = vsel %vm1838, %v2388, 0
    %2398 = vmatprep.subr.mxu0 %v2380
    %2399 = vmatpush1.msra.mxu0 %v2379
    %2400 = vmatprep.subr.mxu0 %v2382
    %2401 = vmatpush1.msra.mxu0 %v2381
    %2402 = vmatprep.subr.mxu0 %v2384
    %2403 = vmatpush1.msra.mxu0 %v2383
    %2404 = vmatprep.subr.mxu0 %v2386
    %2405 = vmatpush1.msra.mxu0 %v2385
    %2406 = vmatprep.subr.mxu0 %v2396
    %2407 = vmatpush1.msra.mxu0 %v2393
    %2408 = vmatprep.subr.mxu0 0.0
    %2409 = vmatpush1.msra.mxu0 0.0
    %2410 = vmatprep.subr.mxu0 0.0
    %2411 = vmatpush1.msra.mxu0 0.0
    %2412 = vmatprep.subr.mxu0 0.0
    %2413 = vmatpush1.msra.mxu0 0.0
    %2414 = vmatprep.subr.mxu0 0.0
    %2415 = vmatpush1.msra.mxu0 0.0
    %2416 = vmatprep.subr.mxu0 0.0
    %2417 = vmatpush1.msra.mxu0 0.0
    %2418 = vmatprep.subr.mxu0 0.0
    %2419 = vmatpush1.msra.mxu0 0.0
    %2420 = vmatprep.subr.mxu0 0.0
    %2421 = vmatpush1.msra.mxu0 0.0
    %2422 = vmatprep.subr.mxu0 0.0
    %2423 = vmatpush1.msra.mxu0 0.0
    %2424 = vmatprep.subr.mxu0 0.0
    %2425 = vmatpush1.msra.mxu0 0.0
    %2426 = vmatprep.subr.mxu0 0.0
    %2427 = vmatpush1.msra.mxu0 0.0
    %2428 = vmatprep.subr.mxu0 0.0
    %2429 = vmatpush1.msra.mxu0 0.0
    %2430 = vmatprep.subr.mxu0 0.0
    %2431 = vmatpush1.msra.mxu0 0.0
    %2432 = vmatprep.subr.mxu0 0.0
    %2433 = vmatpush1.msra.mxu0 0.0
    %2434 = vmatprep.subr.mxu0 0.0
    %2435 = vmatpush1.msra.mxu0 0.0
    %2436 = vmatprep.subr.mxu0 0.0
    %2437 = vmatpush1.msra.mxu0 0.0
    %2438 = vmatprep.subr.mxu0 0.0
    %2439 = vmatpush1.msra.mxu0 0.0
    %2440 = vmatprep.subr.mxu0 0.0
    %2441 = vmatpush1.msra.mxu0 0.0
    %2442 = vmatprep.subr.mxu0 0.0
    %2443 = vmatpush1.msra.mxu0 0.0
    %2444 = vmatprep.subr.mxu0 0.0
    %2445 = vmatpush1.msra.mxu0 0.0
    %2446 = vmatprep.subr.mxu0 0.0
    %2447 = vmatpush1.msra.mxu0 0.0
    %2448 = vmatprep.subr.mxu0 0.0
    %2449 = vmatpush1.msra.mxu0 0.0
    %2450 = vmatprep.subr.mxu0 0.0
    %2451 = vmatpush1.msra.mxu0 0.0
    %2452 = vmatprep.subr.mxu0 0.0
    %2453 = vmatpush1.msra.mxu0 0.0
    %2454 = vmatprep.subr.mxu0 0.0
    %2455 = vmatpush1.msra.mxu0 0.0
    %2456 = vmatprep.subr.mxu0 0.0
    %2457 = vmatpush1.msra.mxu0 0.0
    %2458 = vmatprep.subr.mxu0 0.0
    %2459 = vmatpush1.msra.mxu0 0.0
    %2460 = vmatprep.subr.mxu0 0.0
    %2461 = vmatpush1.msra.mxu0 0.0
    %2462 = vmatprep.mubr.f32.mxu0 0.0
    %2463 = vmatmul.mubr.f32.gmra.mrb[0].mxu0 %v1824
    %v2464 = vpop.f32.mrb[0].mxu0
    %v2465 = vadd.f32 0.0, %v2464
    %v2466 = vpop.f32.mrb[0].mxu0
    %v2467 = vadd.f32 0.0, %v2466
    %2468 = vmatprep.mubr.f32.mxu0 0.0
    %2469 = vmatmul.mubr.f32.gmra.mrb[0].mxu0 %v1827
    %v2470 = vpop.f32.mrb[0].mxu0
    %v2471 = vadd.f32 0.0, %v2470
    %v2472 = vpop.f32.mrb[0].mxu0
    %v2473 = vadd.f32 0.0, %v2472
    %2474 = vmatprep.mubr.f32.mxu0 0.0
    %2475 = vmatmul.mubr.f32.gmra.mrb[0].mxu0 %v1830
    %v2476 = vpop.f32.mrb[0].mxu0
    %v2477 = vadd.f32 0.0, %v2476
    %v2478 = vpop.f32.mrb[0].mxu0
    %v2479 = vadd.f32 0.0, %v2478
    %2480 = vmatprep.mubr.f32.mxu0 0.0
    %2481 = vmatmul.mubr.f32.gmra.mrb[0].mxu0 %v1833
    %v2482 = vpop.f32.mrb[0].mxu0
    %v2483 = vadd.f32 0.0, %v2482
    %v2484 = vpop.f32.mrb[0].mxu0
    %v2485 = vadd.f32 0.0, %v2484
    %2486 = vmatprep.mubr.f32.mxu0 0.0
    %2487 = vmatmul.mubr.f32.gmra.mrb[0].mxu0 %v1836
    %v2488 = vpop.f32.mrb[0].mxu0
    %v2489 = vadd.f32 0.0, %v2488
    %v2490 = vpop.f32.mrb[0].mxu0
    %v2491 = vadd.f32 0.0, %v2490
    %2492 = vmatprep.mubr.f32.mxu0 0.0
    %2493 = vmatmul.mubr.f32.gmra.mrb[0].mxu0 %v2092
    %v2494 = vpop.f32.mrb[0].mxu0
    %v2495 = vadd.f32 0.0, %v2494
    %v2496 = vpop.f32.mrb[0].mxu0
    %v2497 = vadd.f32 0.0, %v2496
    %2498 = vmatprep.mubr.f32.mxu0 0.0
    %2499 = vmatmul.mubr.f32.gmra.mrb[0].mxu0 %v2241
    %v2500 = vpop.f32.mrb[0].mxu0
    %v2501 = vadd.f32 0.0, %v2500
    %v2502 = vpop.f32.mrb[0].mxu0
    %v2503 = vadd.f32 0.0, %v2502
    %2504 = vmatprep.mubr.f32.mxu0 0.0
    %2505 = vmatmul.mubr.f32.gmra.mrb[0].mxu0 %v2390
    %v2506 = vpop.f32.mrb[0].mxu0
    %v2507 = vadd.f32 0.0, %v2506
    %v2508 = vpop.f32.mrb[0].mxu0
    %v2509 = vadd.f32 0.0, %v2508
    %2510 = vdwg.mxu0
    %v2511 = vadd.f32 %v2362, %v2465
    %v2512 = vadd.f32 %v2363, %v2467
    %v2513 = vadd.f32 %v2364, %v2471
    %v2514 = vadd.f32 %v2365, %v2473
    %v2515 = vadd.f32 %v2366, %v2477
    %v2516 = vadd.f32 %v2367, %v2479
    %v2517 = vadd.f32 %v2368, %v2483
    %v2518 = vadd.f32 %v2369, %v2485
    %v2519 = vadd.f32 %v2370, %v2489
    %v2520 = vadd.f32 %v2371, %v2491
    %v2521 = vadd.f32 %v2372, %v2495
    %v2522 = vadd.f32 %v2373, %v2497
    %v2523 = vadd.f32 %v2374, %v2501
    %v2524 = vadd.f32 %v2375, %v2503
    %v2525 = vadd.f32 %v2376, %v2507
    %v2526 = vadd.f32 %v2377, %v2509
    %v2527 = vld [vmem:[#allocation11] sm:$0x3]
    %v2529 = vlaneseq
    %v2530 = vshrl.u32 %v2529, 7
    %v2531 = vsub.s32 0, %v2530
    %v2532 = vrot.slane %v2527, %v2531
    %v2533 = vlaneseq
    %v2534 = vshrl.u32 %v2533, 7
    %v2535 = vsub.s32 1, %v2534
    %v2536 = vrot.slane %v2527, %v2535
    %v2539 = vadd.f32 %v2511, %v2532
    %v2540 = vadd.f32 %v2512, %v2536
    %v2541 = vadd.f32 %v2513, %v2532
    %v2542 = vadd.f32 %v2514, %v2536
    %v2543 = vadd.f32 %v2515, %v2532
    %v2544 = vadd.f32 %v2516, %v2536
    %v2545 = vadd.f32 %v2517, %v2532
    %v2546 = vadd.f32 %v2518, %v2536
    %v2547 = vadd.f32 %v2519, %v2532
    %v2548 = vadd.f32 %v2520, %v2536
    %v2549 = vadd.f32 %v2521, %v2532
    %v2550 = vadd.f32 %v2522, %v2536
    %v2551 = vadd.f32 %v2523, %v2532
    %v2552 = vadd.f32 %v2524, %v2536
    %v2553 = vadd.f32 %v2525, %v2532
    %v2554 = vadd.f32 %v2526, %v2536
    %v2555 = vmax.f32 %v2539, 0.0
    %v2556 = vmax.f32 %v2540, 0.0
    %v2557 = vmax.f32 %v2541, 0.0
    %v2558 = vmax.f32 %v2542, 0.0
    %v2559 = vmax.f32 %v2543, 0.0
    %v2560 = vmax.f32 %v2544, 0.0
    %v2561 = vmax.f32 %v2545, 0.0
    %v2562 = vmax.f32 %v2546, 0.0
    %v2563 = vmax.f32 %v2547, 0.0
    %v2564 = vmax.f32 %v2548, 0.0
    %v2565 = vmax.f32 %v2549, 0.0
    %v2566 = vmax.f32 %v2550, 0.0
    %v2567 = vmax.f32 %v2551, 0.0
    %v2568 = vmax.f32 %v2552, 0.0
    %v2569 = vmax.f32 %v2553, 0.0
    %v2570 = vmax.f32 %v2554, 0.0
    %v2571 = vld [vmem:[#allocation13] sm:$0xff]
    %v2572 = vld [vmem:[#allocation13 + $0x8] sm:$0xff]
    %v2573 = vld [vmem:[#allocation13 + $0x10] sm:$0xff]
    %v2574 = vld [vmem:[#allocation13 + $0x18] sm:$0xff]
    %v2575 = vld [vmem:[#allocation13 + $0x20] sm:$0xff]
    %v2576 = vld [vmem:[#allocation13 + $0x28] sm:$0xff]
    %v2577 = vld [vmem:[#allocation13 + $0x30] sm:$0xff]
    %v2578 = vld [vmem:[#allocation13 + $0x38] sm:$0xff]
    %v2579 = vld [vmem:[#allocation13 + $0x40] sm:$0xff]
    %v2580 = vld [vmem:[#allocation13 + $0x48] sm:$0xff]
    %v2581 = vld [vmem:[#allocation13 + $0x50] sm:$0xff]
    %v2582 = vld [vmem:[#allocation13 + $0x58] sm:$0xff]
    %v2583 = vld [vmem:[#allocation13 + $0x60] sm:$0xff]
    %v2584 = vld [vmem:[#allocation13 + $0x68] sm:$0xff]
    %v2585 = vld [vmem:[#allocation13 + $0x70] sm:$0xff]
    %v2586 = vld [vmem:[#allocation13 + $0x78] sm:$0xff]
    %v2587 = vld [vmem:[#allocation13 + $0x80] sm:$0xff]
    %v2588 = vld [vmem:[#allocation13 + $0x88] sm:$0xff]
    %v2589 = vld [vmem:[#allocation13 + $0x90] sm:$0xff]
    %v2590 = vld [vmem:[#allocation13 + $0x98] sm:$0xff]
    %v2591 = vld [vmem:[#allocation13 + $0xa0] sm:$0xff]
    %v2592 = vld [vmem:[#allocation13 + $0xa8] sm:$0xff]
    %v2593 = vld [vmem:[#allocation13 + $0xb0] sm:$0xff]
    %v2594 = vld [vmem:[#allocation13 + $0xb8] sm:$0xff]
    %v2595 = vld [vmem:[#allocation13 + $0xc0] sm:$0xff]
    %v2596 = vld [vmem:[#allocation13 + $0xc8] sm:$0xff]
    %v2597 = vld [vmem:[#allocation13 + $0xd0] sm:$0xff]
    %v2598 = vld [vmem:[#allocation13 + $0xd8] sm:$0xff]
    %s2599 = scalar_lea.vmem [#allocation13], 224
    %v2600 = vld [vmem:[%s2599] sm:$0xff]
    %v2601 = vld [vmem:[%s2599 + $0x8] sm:$0xff]
    %v2602 = vld [vmem:[%s2599 + $0x10] sm:$0xff]
    %v2603 = vld [vmem:[%s2599 + $0x18] sm:$0xff]
    %v2604 = vld [vmem:[%s2599 + $0x20] sm:$0xff]
    %v2605 = vld [vmem:[%s2599 + $0x28] sm:$0xff]
    %v2606 = vld [vmem:[%s2599 + $0x30] sm:$0xff]
    %v2607 = vld [vmem:[%s2599 + $0x38] sm:$0xff]
    %v2608 = vld [vmem:[%s2599 + $0x40] sm:$0xff]
    %v2609 = vld [vmem:[%s2599 + $0x48] sm:$0xff]
    %v2610 = vld [vmem:[%s2599 + $0x50] sm:$0xff]
    %v2611 = vld [vmem:[%s2599 + $0x58] sm:$0xff]
    %v2612 = vld [vmem:[%s2599 + $0x60] sm:$0xff]
    %v2613 = vld [vmem:[%s2599 + $0x68] sm:$0xff]
    %v2614 = vld [vmem:[%s2599 + $0x70] sm:$0xff]
    %v2615 = vld [vmem:[%s2599 + $0x78] sm:$0xff]
    %v2616 = vld [vmem:[%s2599 + $0x80] sm:$0xff]
    %v2617 = vld [vmem:[%s2599 + $0x88] sm:$0xff]
    %v2618 = vld [vmem:[%s2599 + $0x90] sm:$0xff]
    %v2619 = vld [vmem:[%s2599 + $0x98] sm:$0xff]
    %v2620 = vld [vmem:[%s2599 + $0xa0] sm:$0xff]
    %v2621 = vld [vmem:[%s2599 + $0xa8] sm:$0xff]
    %v2622 = vld [vmem:[%s2599 + $0xb0] sm:$0xff]
    %v2623 = vld [vmem:[%s2599 + $0xb8] sm:$0xff]
    %v2624 = vld [vmem:[%s2599 + $0xc0] sm:$0xff]
    %v2625 = vld [vmem:[%s2599 + $0xc8] sm:$0xff]
    %v2626 = vld [vmem:[%s2599 + $0xd0] sm:$0xff]
    %v2627 = vld [vmem:[%s2599 + $0xd8] sm:$0xff]
    %vm2628 = vcmask 785408
    %v2630 = vsel %vm2628, %v2558, 0
    %2632 = vmatprep.subr.mxu0 0.0
    %2633 = vmatpush1.msra.mxu0 %v2600
    %2634 = vmatprep.subr.mxu0 0.0
    %2635 = vmatpush1.msra.mxu0 %v2601
    %2636 = vmatprep.subr.mxu0 0.0
    %2637 = vmatpush1.msra.mxu0 %v2602
    %2638 = vmatprep.subr.mxu0 0.0
    %2639 = vmatpush1.msra.mxu0 %v2603
    %2640 = vmatprep.subr.mxu0 0.0
    %2641 = vmatpush1.msra.mxu0 %v2604
    %2642 = vmatprep.subr.mxu0 0.0
    %2643 = vmatpush1.msra.mxu0 %v2605
    %2644 = vmatprep.subr.mxu0 0.0
    %2645 = vmatpush1.msra.mxu0 %v2606
    %2646 = vmatprep.subr.mxu0 0.0
    %2647 = vmatpush1.msra.mxu0 %v2607
    %2648 = vmatprep.subr.mxu0 0.0
    %2649 = vmatpush1.msra.mxu0 %v2608
    %2650 = vmatprep.subr.mxu0 0.0
    %2651 = vmatpush1.msra.mxu0 %v2609
    %2652 = vmatprep.subr.mxu0 0.0
    %2653 = vmatpush1.msra.mxu0 %v2610
    %2654 = vmatprep.subr.mxu0 0.0
    %2655 = vmatpush1.msra.mxu0 %v2611
    %2656 = vmatprep.subr.mxu0 0.0
    %2657 = vmatpush1.msra.mxu0 %v2612
    %2658 = vmatprep.subr.mxu0 0.0
    %2659 = vmatpush1.msra.mxu0 %v2613
    %2660 = vmatprep.subr.mxu0 0.0
    %2661 = vmatpush1.msra.mxu0 %v2614
    %2662 = vmatprep.subr.mxu0 0.0
    %2663 = vmatpush1.msra.mxu0 %v2615
    %2664 = vmatprep.subr.mxu0 0.0
    %2665 = vmatpush1.msra.mxu0 %v2616
    %2666 = vmatprep.subr.mxu0 0.0
    %2667 = vmatpush1.msra.mxu0 %v2617
    %2668 = vmatprep.subr.mxu0 0.0
    %2669 = vmatpush1.msra.mxu0 %v2618
    %2670 = vmatprep.subr.mxu0 0.0
    %2671 = vmatpush1.msra.mxu0 %v2619
    %2672 = vmatprep.subr.mxu0 0.0
    %2673 = vmatpush1.msra.mxu0 %v2620
    %2674 = vmatprep.subr.mxu0 0.0
    %2675 = vmatpush1.msra.mxu0 %v2621
    %2676 = vmatprep.subr.mxu0 0.0
    %2677 = vmatpush1.msra.mxu0 %v2622
    %2678 = vmatprep.subr.mxu0 0.0
    %2679 = vmatpush1.msra.mxu0 %v2623
    %2680 = vmatprep.subr.mxu0 0.0
    %2681 = vmatpush1.msra.mxu0 %v2624
    %2682 = vmatprep.subr.mxu0 0.0
    %2683 = vmatpush1.msra.mxu0 %v2625
    %2684 = vmatprep.subr.mxu0 0.0
    %2685 = vmatpush1.msra.mxu0 %v2626
    %2686 = vmatprep.subr.mxu0 0.0
    %2687 = vmatpush1.msra.mxu0 %v2627
    %2688 = vmatprep.subr.mxu0 0.0
    %2689 = vmatpush1.msra.mxu0 0.0
    %2690 = vmatprep.subr.mxu0 0.0
    %2691 = vmatpush1.msra.mxu0 0.0
    %2692 = vmatprep.subr.mxu0 0.0
    %2693 = vmatpush1.msra.mxu0 0.0
    %2694 = vmatprep.subr.mxu0 0.0
    %2695 = vmatpush1.msra.mxu0 0.0
    %2696 = vmatprep.mubr.f32.mxu0 %v2630
    %2697 = vmatmul.mubr.f32.gmra.mrb[0].mxu0 %v2557
    %v2698 = vpop.f32.mrb[0].mxu0
    %v2699 = vadd.f32 0.0, %v2698
    %v2700 = vpop.f32.mrb[0].mxu0
    %2701 = vdwg.mxu0
    %v2703 = vsel %vm2628, %v2556, 0
    %2705 = vmatprep.subr.mxu0 0.0
    %2706 = vmatpush1.msra.mxu0 %v2571
    %2707 = vmatprep.subr.mxu0 0.0
    %2708 = vmatpush1.msra.mxu0 %v2572
    %2709 = vmatprep.subr.mxu0 0.0
    %2710 = vmatpush1.msra.mxu0 %v2573
    %2711 = vmatprep.subr.mxu0 0.0
    %2712 = vmatpush1.msra.mxu0 %v2574
    %2713 = vmatprep.subr.mxu0 0.0
    %2714 = vmatpush1.msra.mxu0 %v2575
    %2715 = vmatprep.subr.mxu0 0.0
    %2716 = vmatpush1.msra.mxu0 %v2576
    %2717 = vmatprep.subr.mxu0 0.0
    %2718 = vmatpush1.msra.mxu0 %v2577
    %2719 = vmatprep.subr.mxu0 0.0
    %2720 = vmatpush1.msra.mxu0 %v2578
    %2721 = vmatprep.subr.mxu0 0.0
    %2722 = vmatpush1.msra.mxu0 %v2579
    %2723 = vmatprep.subr.mxu0 0.0
    %2724 = vmatpush1.msra.mxu0 %v2580
    %2725 = vmatprep.subr.mxu0 0.0
    %2726 = vmatpush1.msra.mxu0 %v2581
    %2727 = vmatprep.subr.mxu0 0.0
    %2728 = vmatpush1.msra.mxu0 %v2582
    %2729 = vmatprep.subr.mxu0 0.0
    %2730 = vmatpush1.msra.mxu0 %v2583
    %2731 = vmatprep.subr.mxu0 0.0
    %2732 = vmatpush1.msra.mxu0 %v2584
    %2733 = vmatprep.subr.mxu0 0.0
    %2734 = vmatpush1.msra.mxu0 %v2585
    %2735 = vmatprep.subr.mxu0 0.0
    %2736 = vmatpush1.msra.mxu0 %v2586
    %2737 = vmatprep.subr.mxu0 0.0
    %2738 = vmatpush1.msra.mxu0 %v2587
    %2739 = vmatprep.subr.mxu0 0.0
    %2740 = vmatpush1.msra.mxu0 %v2588
    %2741 = vmatprep.subr.mxu0 0.0
    %2742 = vmatpush1.msra.mxu0 %v2589
    %2743 = vmatprep.subr.mxu0 0.0
    %2744 = vmatpush1.msra.mxu0 %v2590
    %2745 = vmatprep.subr.mxu0 0.0
    %2746 = vmatpush1.msra.mxu0 %v2591
    %2747 = vmatprep.subr.mxu0 0.0
    %2748 = vmatpush1.msra.mxu0 %v2592
    %2749 = vmatprep.subr.mxu0 0.0
    %2750 = vmatpush1.msra.mxu0 %v2593
    %2751 = vmatprep.subr.mxu0 0.0
    %2752 = vmatpush1.msra.mxu0 %v2594
    %2753 = vmatprep.subr.mxu0 0.0
    %2754 = vmatpush1.msra.mxu0 %v2595
    %2755 = vmatprep.subr.mxu0 0.0
    %2756 = vmatpush1.msra.mxu0 %v2596
    %2757 = vmatprep.subr.mxu0 0.0
    %2758 = vmatpush1.msra.mxu0 %v2597
    %2759 = vmatprep.subr.mxu0 0.0
    %2760 = vmatpush1.msra.mxu0 %v2598
    %2761 = vmatprep.subr.mxu0 0.0
    %2762 = vmatpush1.msra.mxu0 0.0
    %2763 = vmatprep.subr.mxu0 0.0
    %2764 = vmatpush1.msra.mxu0 0.0
    %2765 = vmatprep.subr.mxu0 0.0
    %2766 = vmatpush1.msra.mxu0 0.0
    %2767 = vmatprep.subr.mxu0 0.0
    %2768 = vmatpush1.msra.mxu0 0.0
    %2769 = vmatprep.mubr.f32.mxu0 %v2703
    %2770 = vmatmul.mubr.f32.gmra.mrb[0].mxu0 %v2555
    %v2771 = vpop.f32.mrb[0].mxu0
    %v2772 = vadd.f32 %v2699, %v2771
    %v2773 = vpop.f32.mrb[0].mxu0
    %2774 = vdwg.mxu0
    %s2775 = scalar_lea.vmem [#allocation13], 448
    %v2776 = vld [vmem:[%s2775] sm:$0xff]
    %v2777 = vld [vmem:[%s2775 + $0x8] sm:$0xff]
    %v2778 = vld [vmem:[%s2775 + $0x10] sm:$0xff]
    %v2779 = vld [vmem:[%s2775 + $0x18] sm:$0xff]
    %v2780 = vld [vmem:[%s2775 + $0x20] sm:$0xff]
    %v2781 = vld [vmem:[%s2775 + $0x28] sm:$0xff]
    %v2782 = vld [vmem:[%s2775 + $0x30] sm:$0xff]
    %v2783 = vld [vmem:[%s2775 + $0x38] sm:$0xff]
    %v2784 = vld [vmem:[%s2775 + $0x40] sm:$0xff]
    %v2785 = vld [vmem:[%s2775 + $0x48] sm:$0xff]
    %v2786 = vld [vmem:[%s2775 + $0x50] sm:$0xff]
    %v2787 = vld [vmem:[%s2775 + $0x58] sm:$0xff]
    %v2788 = vld [vmem:[%s2775 + $0x60] sm:$0xff]
    %v2789 = vld [vmem:[%s2775 + $0x68] sm:$0xff]
    %v2790 = vld [vmem:[%s2775 + $0x70] sm:$0xff]
    %v2791 = vld [vmem:[%s2775 + $0x78] sm:$0xff]
    %v2792 = vld [vmem:[%s2775 + $0x80] sm:$0xff]
    %v2793 = vld [vmem:[%s2775 + $0x88] sm:$0xff]
    %v2794 = vld [vmem:[%s2775 + $0x90] sm:$0xff]
    %v2795 = vld [vmem:[%s2775 + $0x98] sm:$0xff]
    %v2796 = vld [vmem:[%s2775 + $0xa0] sm:$0xff]
    %v2797 = vld [vmem:[%s2775 + $0xa8] sm:$0xff]
    %v2798 = vld [vmem:[%s2775 + $0xb0] sm:$0xff]
    %v2799 = vld [vmem:[%s2775 + $0xb8] sm:$0xff]
    %v2800 = vld [vmem:[%s2775 + $0xc0] sm:$0xff]
    %v2801 = vld [vmem:[%s2775 + $0xc8] sm:$0xff]
    %v2802 = vld [vmem:[%s2775 + $0xd0] sm:$0xff]
    %v2803 = vld [vmem:[%s2775 + $0xd8] sm:$0xff]
    %v2805 = vsel %vm2628, %v2560, 0
    %2807 = vmatprep.subr.mxu0 0.0
    %2808 = vmatpush1.msra.mxu0 %v2776
    %2809 = vmatprep.subr.mxu0 0.0
    %2810 = vmatpush1.msra.mxu0 %v2777
    %2811 = vmatprep.subr.mxu0 0.0
    %2812 = vmatpush1.msra.mxu0 %v2778
    %2813 = vmatprep.subr.mxu0 0.0
    %2814 = vmatpush1.msra.mxu0 %v2779
    %2815 = vmatprep.subr.mxu0 0.0
    %2816 = vmatpush1.msra.mxu0 %v2780
    %2817 = vmatprep.subr.mxu0 0.0
    %2818 = vmatpush1.msra.mxu0 %v2781
    %2819 = vmatprep.subr.mxu0 0.0
    %2820 = vmatpush1.msra.mxu0 %v2782
    %2821 = vmatprep.subr.mxu0 0.0
    %2822 = vmatpush1.msra.mxu0 %v2783
    %2823 = vmatprep.subr.mxu0 0.0
    %2824 = vmatpush1.msra.mxu0 %v2784
    %2825 = vmatprep.subr.mxu0 0.0
    %2826 = vmatpush1.msra.mxu0 %v2785
    %2827 = vmatprep.subr.mxu0 0.0
    %2828 = vmatpush1.msra.mxu0 %v2786
    %2829 = vmatprep.subr.mxu0 0.0
    %2830 = vmatpush1.msra.mxu0 %v2787
    %2831 = vmatprep.subr.mxu0 0.0
    %2832 = vmatpush1.msra.mxu0 %v2788
    %2833 = vmatprep.subr.mxu0 0.0
    %2834 = vmatpush1.msra.mxu0 %v2789
    %2835 = vmatprep.subr.mxu0 0.0
    %2836 = vmatpush1.msra.mxu0 %v2790
    %2837 = vmatprep.subr.mxu0 0.0
    %2838 = vmatpush1.msra.mxu0 %v2791
    %2839 = vmatprep.subr.mxu0 0.0
    %2840 = vmatpush1.msra.mxu0 %v2792
    %2841 = vmatprep.subr.mxu0 0.0
    %2842 = vmatpush1.msra.mxu0 %v2793
    %2843 = vmatprep.subr.mxu0 0.0
    %2844 = vmatpush1.msra.mxu0 %v2794
    %2845 = vmatprep.subr.mxu0 0.0
    %2846 = vmatpush1.msra.mxu0 %v2795
    %2847 = vmatprep.subr.mxu0 0.0
    %2848 = vmatpush1.msra.mxu0 %v2796
    %2849 = vmatprep.subr.mxu0 0.0
    %2850 = vmatpush1.msra.mxu0 %v2797
    %2851 = vmatprep.subr.mxu0 0.0
    %2852 = vmatpush1.msra.mxu0 %v2798
    %2853 = vmatprep.subr.mxu0 0.0
    %2854 = vmatpush1.msra.mxu0 %v2799
    %2855 = vmatprep.subr.mxu0 0.0
    %2856 = vmatpush1.msra.mxu0 %v2800
    %2857 = vmatprep.subr.mxu0 0.0
    %2858 = vmatpush1.msra.mxu0 %v2801
    %2859 = vmatprep.subr.mxu0 0.0
    %2860 = vmatpush1.msra.mxu0 %v2802
    %2861 = vmatprep.subr.mxu0 0.0
    %2862 = vmatpush1.msra.mxu0 %v2803
    %2863 = vmatprep.subr.mxu0 0.0
    %2864 = vmatpush1.msra.mxu0 0.0
    %2865 = vmatprep.subr.mxu0 0.0
    %2866 = vmatpush1.msra.mxu0 0.0
    %2867 = vmatprep.subr.mxu0 0.0
    %2868 = vmatpush1.msra.mxu0 0.0
    %2869 = vmatprep.subr.mxu0 0.0
    %2870 = vmatpush1.msra.mxu0 0.0
    %2871 = vmatprep.mubr.f32.mxu0 %v2805
    %2872 = vmatmul.mubr.f32.gmra.mrb[0].mxu0 %v2559
    %v2873 = vpop.f32.mrb[0].mxu0
    %v2874 = vadd.f32 0.0, %v2873
    %v2875 = vpop.f32.mrb[0].mxu0
    %2876 = vdwg.mxu0
    %v2877 = vadd.f32 %v2772, %v2874
    %s2878 = scalar_lea.vmem [#allocation13], 672
    %v2879 = vld [vmem:[%s2878] sm:$0xff]
    %v2880 = vld [vmem:[%s2878 + $0x8] sm:$0xff]
    %v2881 = vld [vmem:[%s2878 + $0x10] sm:$0xff]
    %v2882 = vld [vmem:[%s2878 + $0x18] sm:$0xff]
    %v2883 = vld [vmem:[%s2878 + $0x20] sm:$0xff]
    %v2884 = vld [vmem:[%s2878 + $0x28] sm:$0xff]
    %v2885 = vld [vmem:[%s2878 + $0x30] sm:$0xff]
    %v2886 = vld [vmem:[%s2878 + $0x38] sm:$0xff]
    %v2887 = vld [vmem:[%s2878 + $0x40] sm:$0xff]
    %v2888 = vld [vmem:[%s2878 + $0x48] sm:$0xff]
    %v2889 = vld [vmem:[%s2878 + $0x50] sm:$0xff]
    %v2890 = vld [vmem:[%s2878 + $0x58] sm:$0xff]
    %v2891 = vld [vmem:[%s2878 + $0x60] sm:$0xff]
    %v2892 = vld [vmem:[%s2878 + $0x68] sm:$0xff]
    %v2893 = vld [vmem:[%s2878 + $0x70] sm:$0xff]
    %v2894 = vld [vmem:[%s2878 + $0x78] sm:$0xff]
    %v2895 = vld [vmem:[%s2878 + $0x80] sm:$0xff]
    %v2896 = vld [vmem:[%s2878 + $0x88] sm:$0xff]
    %v2897 = vld [vmem:[%s2878 + $0x90] sm:$0xff]
    %v2898 = vld [vmem:[%s2878 + $0x98] sm:$0xff]
    %v2899 = vld [vmem:[%s2878 + $0xa0] sm:$0xff]
    %v2900 = vld [vmem:[%s2878 + $0xa8] sm:$0xff]
    %v2901 = vld [vmem:[%s2878 + $0xb0] sm:$0xff]
    %v2902 = vld [vmem:[%s2878 + $0xb8] sm:$0xff]
    %v2903 = vld [vmem:[%s2878 + $0xc0] sm:$0xff]
    %v2904 = vld [vmem:[%s2878 + $0xc8] sm:$0xff]
    %v2905 = vld [vmem:[%s2878 + $0xd0] sm:$0xff]
    %v2906 = vld [vmem:[%s2878 + $0xd8] sm:$0xff]
    %v2908 = vsel %vm2628, %v2562, 0
    %2910 = vmatprep.subr.mxu0 0.0
    %2911 = vmatpush1.msra.mxu0 %v2879
    %2912 = vmatprep.subr.mxu0 0.0
    %2913 = vmatpush1.msra.mxu0 %v2880
    %2914 = vmatprep.subr.mxu0 0.0
    %2915 = vmatpush1.msra.mxu0 %v2881
    %2916 = vmatprep.subr.mxu0 0.0
    %2917 = vmatpush1.msra.mxu0 %v2882
    %2918 = vmatprep.subr.mxu0 0.0
    %2919 = vmatpush1.msra.mxu0 %v2883
    %2920 = vmatprep.subr.mxu0 0.0
    %2921 = vmatpush1.msra.mxu0 %v2884
    %2922 = vmatprep.subr.mxu0 0.0
    %2923 = vmatpush1.msra.mxu0 %v2885
    %2924 = vmatprep.subr.mxu0 0.0
    %2925 = vmatpush1.msra.mxu0 %v2886
    %2926 = vmatprep.subr.mxu0 0.0
    %2927 = vmatpush1.msra.mxu0 %v2887
    %2928 = vmatprep.subr.mxu0 0.0
    %2929 = vmatpush1.msra.mxu0 %v2888
    %2930 = vmatprep.subr.mxu0 0.0
    %2931 = vmatpush1.msra.mxu0 %v2889
    %2932 = vmatprep.subr.mxu0 0.0
    %2933 = vmatpush1.msra.mxu0 %v2890
    %2934 = vmatprep.subr.mxu0 0.0
    %2935 = vmatpush1.msra.mxu0 %v2891
    %2936 = vmatprep.subr.mxu0 0.0
    %2937 = vmatpush1.msra.mxu0 %v2892
    %2938 = vmatprep.subr.mxu0 0.0
    %2939 = vmatpush1.msra.mxu0 %v2893
    %2940 = vmatprep.subr.mxu0 0.0
    %2941 = vmatpush1.msra.mxu0 %v2894
    %2942 = vmatprep.subr.mxu0 0.0
    %2943 = vmatpush1.msra.mxu0 %v2895
    %2944 = vmatprep.subr.mxu0 0.0
    %2945 = vmatpush1.msra.mxu0 %v2896
    %2946 = vmatprep.subr.mxu0 0.0
    %2947 = vmatpush1.msra.mxu0 %v2897
    %2948 = vmatprep.subr.mxu0 0.0
    %2949 = vmatpush1.msra.mxu0 %v2898
    %2950 = vmatprep.subr.mxu0 0.0
    %2951 = vmatpush1.msra.mxu0 %v2899
    %2952 = vmatprep.subr.mxu0 0.0
    %2953 = vmatpush1.msra.mxu0 %v2900
    %2954 = vmatprep.subr.mxu0 0.0
    %2955 = vmatpush1.msra.mxu0 %v2901
    %2956 = vmatprep.subr.mxu0 0.0
    %2957 = vmatpush1.msra.mxu0 %v2902
    %2958 = vmatprep.subr.mxu0 0.0
    %2959 = vmatpush1.msra.mxu0 %v2903
    %2960 = vmatprep.subr.mxu0 0.0
    %2961 = vmatpush1.msra.mxu0 %v2904
    %2962 = vmatprep.subr.mxu0 0.0
    %2963 = vmatpush1.msra.mxu0 %v2905
    %2964 = vmatprep.subr.mxu0 0.0
    %2965 = vmatpush1.msra.mxu0 %v2906
    %2966 = vmatprep.subr.mxu0 0.0
    %2967 = vmatpush1.msra.mxu0 0.0
    %2968 = vmatprep.subr.mxu0 0.0
    %2969 = vmatpush1.msra.mxu0 0.0
    %2970 = vmatprep.subr.mxu0 0.0
    %2971 = vmatpush1.msra.mxu0 0.0
    %2972 = vmatprep.subr.mxu0 0.0
    %2973 = vmatpush1.msra.mxu0 0.0
    %2974 = vmatprep.mubr.f32.mxu0 %v2908
    %2975 = vmatmul.mubr.f32.gmra.mrb[0].mxu0 %v2561
    %v2976 = vpop.f32.mrb[0].mxu0
    %v2977 = vadd.f32 0.0, %v2976
    %v2978 = vpop.f32.mrb[0].mxu0
    %2979 = vdwg.mxu0
    %v2980 = vadd.f32 %v2877, %v2977
    %s2981 = scalar_lea.vmem [#allocation13], 896
    %v2982 = vld [vmem:[%s2981] sm:$0xff]
    %v2983 = vld [vmem:[%s2981 + $0x8] sm:$0xff]
    %v2984 = vld [vmem:[%s2981 + $0x10] sm:$0xff]
    %v2985 = vld [vmem:[%s2981 + $0x18] sm:$0xff]
    %v2986 = vld [vmem:[%s2981 + $0x20] sm:$0xff]
    %v2987 = vld [vmem:[%s2981 + $0x28] sm:$0xff]
    %v2988 = vld [vmem:[%s2981 + $0x30] sm:$0xff]
    %v2989 = vld [vmem:[%s2981 + $0x38] sm:$0xff]
    %v2990 = vld [vmem:[%s2981 + $0x40] sm:$0xff]
    %v2991 = vld [vmem:[%s2981 + $0x48] sm:$0xff]
    %v2992 = vld [vmem:[%s2981 + $0x50] sm:$0xff]
    %v2993 = vld [vmem:[%s2981 + $0x58] sm:$0xff]
    %v2994 = vld [vmem:[%s2981 + $0x60] sm:$0xff]
    %v2995 = vld [vmem:[%s2981 + $0x68] sm:$0xff]
    %v2996 = vld [vmem:[%s2981 + $0x70] sm:$0xff]
    %v2997 = vld [vmem:[%s2981 + $0x78] sm:$0xff]
    %v2998 = vld [vmem:[%s2981 + $0x80] sm:$0xff]
    %v2999 = vld [vmem:[%s2981 + $0x88] sm:$0xff]
    %v3000 = vld [vmem:[%s2981 + $0x90] sm:$0xff]
    %v3001 = vld [vmem:[%s2981 + $0x98] sm:$0xff]
    %v3002 = vld [vmem:[%s2981 + $0xa0] sm:$0xff]
    %v3003 = vld [vmem:[%s2981 + $0xa8] sm:$0xff]
    %v3004 = vld [vmem:[%s2981 + $0xb0] sm:$0xff]
    %v3005 = vld [vmem:[%s2981 + $0xb8] sm:$0xff]
    %v3006 = vld [vmem:[%s2981 + $0xc0] sm:$0xff]
    %v3007 = vld [vmem:[%s2981 + $0xc8] sm:$0xff]
    %v3008 = vld [vmem:[%s2981 + $0xd0] sm:$0xff]
    %v3009 = vld [vmem:[%s2981 + $0xd8] sm:$0xff]
    %v3011 = vsel %vm2628, %v2564, 0
    %3013 = vmatprep.subr.mxu0 0.0
    %3014 = vmatpush1.msra.mxu0 %v2982
    %3015 = vmatprep.subr.mxu0 0.0
    %3016 = vmatpush1.msra.mxu0 %v2983
    %3017 = vmatprep.subr.mxu0 0.0
    %3018 = vmatpush1.msra.mxu0 %v2984
    %3019 = vmatprep.subr.mxu0 0.0
    %3020 = vmatpush1.msra.mxu0 %v2985
    %3021 = vmatprep.subr.mxu0 0.0
    %3022 = vmatpush1.msra.mxu0 %v2986
    %3023 = vmatprep.subr.mxu0 0.0
    %3024 = vmatpush1.msra.mxu0 %v2987
    %3025 = vmatprep.subr.mxu0 0.0
    %3026 = vmatpush1.msra.mxu0 %v2988
    %3027 = vmatprep.subr.mxu0 0.0
    %3028 = vmatpush1.msra.mxu0 %v2989
    %3029 = vmatprep.subr.mxu0 0.0
    %3030 = vmatpush1.msra.mxu0 %v2990
    %3031 = vmatprep.subr.mxu0 0.0
    %3032 = vmatpush1.msra.mxu0 %v2991
    %3033 = vmatprep.subr.mxu0 0.0
    %3034 = vmatpush1.msra.mxu0 %v2992
    %3035 = vmatprep.subr.mxu0 0.0
    %3036 = vmatpush1.msra.mxu0 %v2993
    %3037 = vmatprep.subr.mxu0 0.0
    %3038 = vmatpush1.msra.mxu0 %v2994
    %3039 = vmatprep.subr.mxu0 0.0
    %3040 = vmatpush1.msra.mxu0 %v2995
    %3041 = vmatprep.subr.mxu0 0.0
    %3042 = vmatpush1.msra.mxu0 %v2996
    %3043 = vmatprep.subr.mxu0 0.0
    %3044 = vmatpush1.msra.mxu0 %v2997
    %3045 = vmatprep.subr.mxu0 0.0
    %3046 = vmatpush1.msra.mxu0 %v2998
    %3047 = vmatprep.subr.mxu0 0.0
    %3048 = vmatpush1.msra.mxu0 %v2999
    %3049 = vmatprep.subr.mxu0 0.0
    %3050 = vmatpush1.msra.mxu0 %v3000
    %3051 = vmatprep.subr.mxu0 0.0
    %3052 = vmatpush1.msra.mxu0 %v3001
    %3053 = vmatprep.subr.mxu0 0.0
    %3054 = vmatpush1.msra.mxu0 %v3002
    %3055 = vmatprep.subr.mxu0 0.0
    %3056 = vmatpush1.msra.mxu0 %v3003
    %3057 = vmatprep.subr.mxu0 0.0
    %3058 = vmatpush1.msra.mxu0 %v3004
    %3059 = vmatprep.subr.mxu0 0.0
    %3060 = vmatpush1.msra.mxu0 %v3005
    %3061 = vmatprep.subr.mxu0 0.0
    %3062 = vmatpush1.msra.mxu0 %v3006
    %3063 = vmatprep.subr.mxu0 0.0
    %3064 = vmatpush1.msra.mxu0 %v3007
    %3065 = vmatprep.subr.mxu0 0.0
    %3066 = vmatpush1.msra.mxu0 %v3008
    %3067 = vmatprep.subr.mxu0 0.0
    %3068 = vmatpush1.msra.mxu0 %v3009
    %3069 = vmatprep.subr.mxu0 0.0
    %3070 = vmatpush1.msra.mxu0 0.0
    %3071 = vmatprep.subr.mxu0 0.0
    %3072 = vmatpush1.msra.mxu0 0.0
    %3073 = vmatprep.subr.mxu0 0.0
    %3074 = vmatpush1.msra.mxu0 0.0
    %3075 = vmatprep.subr.mxu0 0.0
    %3076 = vmatpush1.msra.mxu0 0.0
    %3077 = vmatprep.mubr.f32.mxu0 %v3011
    %3078 = vmatmul.mubr.f32.gmra.mrb[0].mxu0 %v2563
    %v3079 = vpop.f32.mrb[0].mxu0
    %v3080 = vadd.f32 0.0, %v3079
    %v3081 = vpop.f32.mrb[0].mxu0
    %3082 = vdwg.mxu0
    %v3083 = vadd.f32 %v2980, %v3080
    %s3084 = scalar_lea.vmem [#allocation13], 1120
    %v3085 = vld [vmem:[%s3084] sm:$0xff]
    %v3086 = vld [vmem:[%s3084 + $0x8] sm:$0xff]
    %v3087 = vld [vmem:[%s3084 + $0x10] sm:$0xff]
    %v3088 = vld [vmem:[%s3084 + $0x18] sm:$0xff]
    %v3089 = vld [vmem:[%s3084 + $0x20] sm:$0xff]
    %v3090 = vld [vmem:[%s3084 + $0x28] sm:$0xff]
    %v3091 = vld [vmem:[%s3084 + $0x30] sm:$0xff]
    %v3092 = vld [vmem:[%s3084 + $0x38] sm:$0xff]
    %v3093 = vld [vmem:[%s3084 + $0x40] sm:$0xff]
    %v3094 = vld [vmem:[%s3084 + $0x48] sm:$0xff]
    %v3095 = vld [vmem:[%s3084 + $0x50] sm:$0xff]
    %v3096 = vld [vmem:[%s3084 + $0x58] sm:$0xff]
    %v3097 = vld [vmem:[%s3084 + $0x60] sm:$0xff]
    %v3098 = vld [vmem:[%s3084 + $0x68] sm:$0xff]
    %v3099 = vld [vmem:[%s3084 + $0x70] sm:$0xff]
    %v3100 = vld [vmem:[%s3084 + $0x78] sm:$0xff]
    %v3101 = vld [vmem:[%s3084 + $0x80] sm:$0xff]
    %v3102 = vld [vmem:[%s3084 + $0x88] sm:$0xff]
    %v3103 = vld [vmem:[%s3084 + $0x90] sm:$0xff]
    %v3104 = vld [vmem:[%s3084 + $0x98] sm:$0xff]
    %v3105 = vld [vmem:[%s3084 + $0xa0] sm:$0xff]
    %v3106 = vld [vmem:[%s3084 + $0xa8] sm:$0xff]
    %v3107 = vld [vmem:[%s3084 + $0xb0] sm:$0xff]
    %v3108 = vld [vmem:[%s3084 + $0xb8] sm:$0xff]
    %v3109 = vld [vmem:[%s3084 + $0xc0] sm:$0xff]
    %v3110 = vld [vmem:[%s3084 + $0xc8] sm:$0xff]
    %v3111 = vld [vmem:[%s3084 + $0xd0] sm:$0xff]
    %v3112 = vld [vmem:[%s3084 + $0xd8] sm:$0xff]
    %v3114 = vsel %vm2628, %v2566, 0
    %3116 = vmatprep.subr.mxu0 0.0
    %3117 = vmatpush1.msra.mxu0 %v3085
    %3118 = vmatprep.subr.mxu0 0.0
    %3119 = vmatpush1.msra.mxu0 %v3086
    %3120 = vmatprep.subr.mxu0 0.0
    %3121 = vmatpush1.msra.mxu0 %v3087
    %3122 = vmatprep.subr.mxu0 0.0
    %3123 = vmatpush1.msra.mxu0 %v3088
    %3124 = vmatprep.subr.mxu0 0.0
    %3125 = vmatpush1.msra.mxu0 %v3089
    %3126 = vmatprep.subr.mxu0 0.0
    %3127 = vmatpush1.msra.mxu0 %v3090
    %3128 = vmatprep.subr.mxu0 0.0
    %3129 = vmatpush1.msra.mxu0 %v3091
    %3130 = vmatprep.subr.mxu0 0.0
    %3131 = vmatpush1.msra.mxu0 %v3092
    %3132 = vmatprep.subr.mxu0 0.0
    %3133 = vmatpush1.msra.mxu0 %v3093
    %3134 = vmatprep.subr.mxu0 0.0
    %3135 = vmatpush1.msra.mxu0 %v3094
    %3136 = vmatprep.subr.mxu0 0.0
    %3137 = vmatpush1.msra.mxu0 %v3095
    %3138 = vmatprep.subr.mxu0 0.0
    %3139 = vmatpush1.msra.mxu0 %v3096
    %3140 = vmatprep.subr.mxu0 0.0
    %3141 = vmatpush1.msra.mxu0 %v3097
    %3142 = vmatprep.subr.mxu0 0.0
    %3143 = vmatpush1.msra.mxu0 %v3098
    %3144 = vmatprep.subr.mxu0 0.0
    %3145 = vmatpush1.msra.mxu0 %v3099
    %3146 = vmatprep.subr.mxu0 0.0
    %3147 = vmatpush1.msra.mxu0 %v3100
    %3148 = vmatprep.subr.mxu0 0.0
    %3149 = vmatpush1.msra.mxu0 %v3101
    %3150 = vmatprep.subr.mxu0 0.0
    %3151 = vmatpush1.msra.mxu0 %v3102
    %3152 = vmatprep.subr.mxu0 0.0
    %3153 = vmatpush1.msra.mxu0 %v3103
    %3154 = vmatprep.subr.mxu0 0.0
    %3155 = vmatpush1.msra.mxu0 %v3104
    %3156 = vmatprep.subr.mxu0 0.0
    %3157 = vmatpush1.msra.mxu0 %v3105
    %3158 = vmatprep.subr.mxu0 0.0
    %3159 = vmatpush1.msra.mxu0 %v3106
    %3160 = vmatprep.subr.mxu0 0.0
    %3161 = vmatpush1.msra.mxu0 %v3107
    %3162 = vmatprep.subr.mxu0 0.0
    %3163 = vmatpush1.msra.mxu0 %v3108
    %3164 = vmatprep.subr.mxu0 0.0
    %3165 = vmatpush1.msra.mxu0 %v3109
    %3166 = vmatprep.subr.mxu0 0.0
    %3167 = vmatpush1.msra.mxu0 %v3110
    %3168 = vmatprep.subr.mxu0 0.0
    %3169 = vmatpush1.msra.mxu0 %v3111
    %3170 = vmatprep.subr.mxu0 0.0
    %3171 = vmatpush1.msra.mxu0 %v3112
    %3172 = vmatprep.subr.mxu0 0.0
    %3173 = vmatpush1.msra.mxu0 0.0
    %3174 = vmatprep.subr.mxu0 0.0
    %3175 = vmatpush1.msra.mxu0 0.0
    %3176 = vmatprep.subr.mxu0 0.0
    %3177 = vmatpush1.msra.mxu0 0.0
    %3178 = vmatprep.subr.mxu0 0.0
    %3179 = vmatpush1.msra.mxu0 0.0
    %3180 = vmatprep.mubr.f32.mxu0 %v3114
    %3181 = vmatmul.mubr.f32.gmra.mrb[0].mxu0 %v2565
    %v3182 = vpop.f32.mrb[0].mxu0
    %v3183 = vadd.f32 0.0, %v3182
    %v3184 = vpop.f32.mrb[0].mxu0
    %3185 = vdwg.mxu0
    %v3186 = vadd.f32 %v3083, %v3183
    %s3187 = scalar_lea.vmem [#allocation13], 1344
    %v3188 = vld [vmem:[%s3187] sm:$0xff]
    %v3189 = vld [vmem:[%s3187 + $0x8] sm:$0xff]
    %v3190 = vld [vmem:[%s3187 + $0x10] sm:$0xff]
    %v3191 = vld [vmem:[%s3187 + $0x18] sm:$0xff]
    %v3192 = vld [vmem:[%s3187 + $0x20] sm:$0xff]
    %v3193 = vld [vmem:[%s3187 + $0x28] sm:$0xff]
    %v3194 = vld [vmem:[%s3187 + $0x30] sm:$0xff]
    %v3195 = vld [vmem:[%s3187 + $0x38] sm:$0xff]
    %v3196 = vld [vmem:[%s3187 + $0x40] sm:$0xff]
    %v3197 = vld [vmem:[%s3187 + $0x48] sm:$0xff]
    %v3198 = vld [vmem:[%s3187 + $0x50] sm:$0xff]
    %v3199 = vld [vmem:[%s3187 + $0x58] sm:$0xff]
    %v3200 = vld [vmem:[%s3187 + $0x60] sm:$0xff]
    %v3201 = vld [vmem:[%s3187 + $0x68] sm:$0xff]
    %v3202 = vld [vmem:[%s3187 + $0x70] sm:$0xff]
    %v3203 = vld [vmem:[%s3187 + $0x78] sm:$0xff]
    %v3204 = vld [vmem:[%s3187 + $0x80] sm:$0xff]
    %v3205 = vld [vmem:[%s3187 + $0x88] sm:$0xff]
    %v3206 = vld [vmem:[%s3187 + $0x90] sm:$0xff]
    %v3207 = vld [vmem:[%s3187 + $0x98] sm:$0xff]
    %v3208 = vld [vmem:[%s3187 + $0xa0] sm:$0xff]
    %v3209 = vld [vmem:[%s3187 + $0xa8] sm:$0xff]
    %v3210 = vld [vmem:[%s3187 + $0xb0] sm:$0xff]
    %v3211 = vld [vmem:[%s3187 + $0xb8] sm:$0xff]
    %v3212 = vld [vmem:[%s3187 + $0xc0] sm:$0xff]
    %v3213 = vld [vmem:[%s3187 + $0xc8] sm:$0xff]
    %v3214 = vld [vmem:[%s3187 + $0xd0] sm:$0xff]
    %v3215 = vld [vmem:[%s3187 + $0xd8] sm:$0xff]
    %v3217 = vsel %vm2628, %v2568, 0
    %3219 = vmatprep.subr.mxu0 0.0
    %3220 = vmatpush1.msra.mxu0 %v3188
    %3221 = vmatprep.subr.mxu0 0.0
    %3222 = vmatpush1.msra.mxu0 %v3189
    %3223 = vmatprep.subr.mxu0 0.0
    %3224 = vmatpush1.msra.mxu0 %v3190
    %3225 = vmatprep.subr.mxu0 0.0
    %3226 = vmatpush1.msra.mxu0 %v3191
    %3227 = vmatprep.subr.mxu0 0.0
    %3228 = vmatpush1.msra.mxu0 %v3192
    %3229 = vmatprep.subr.mxu0 0.0
    %3230 = vmatpush1.msra.mxu0 %v3193
    %3231 = vmatprep.subr.mxu0 0.0
    %3232 = vmatpush1.msra.mxu0 %v3194
    %3233 = vmatprep.subr.mxu0 0.0
    %3234 = vmatpush1.msra.mxu0 %v3195
    %3235 = vmatprep.subr.mxu0 0.0
    %3236 = vmatpush1.msra.mxu0 %v3196
    %3237 = vmatprep.subr.mxu0 0.0
    %3238 = vmatpush1.msra.mxu0 %v3197
    %3239 = vmatprep.subr.mxu0 0.0
    %3240 = vmatpush1.msra.mxu0 %v3198
    %3241 = vmatprep.subr.mxu0 0.0
    %3242 = vmatpush1.msra.mxu0 %v3199
    %3243 = vmatprep.subr.mxu0 0.0
    %3244 = vmatpush1.msra.mxu0 %v3200
    %3245 = vmatprep.subr.mxu0 0.0
    %3246 = vmatpush1.msra.mxu0 %v3201
    %3247 = vmatprep.subr.mxu0 0.0
    %3248 = vmatpush1.msra.mxu0 %v3202
    %3249 = vmatprep.subr.mxu0 0.0
    %3250 = vmatpush1.msra.mxu0 %v3203
    %3251 = vmatprep.subr.mxu0 0.0
    %3252 = vmatpush1.msra.mxu0 %v3204
    %3253 = vmatprep.subr.mxu0 0.0
    %3254 = vmatpush1.msra.mxu0 %v3205
    %3255 = vmatprep.subr.mxu0 0.0
    %3256 = vmatpush1.msra.mxu0 %v3206
    %3257 = vmatprep.subr.mxu0 0.0
    %3258 = vmatpush1.msra.mxu0 %v3207
    %3259 = vmatprep.subr.mxu0 0.0
    %3260 = vmatpush1.msra.mxu0 %v3208
    %3261 = vmatprep.subr.mxu0 0.0
    %3262 = vmatpush1.msra.mxu0 %v3209
    %3263 = vmatprep.subr.mxu0 0.0
    %3264 = vmatpush1.msra.mxu0 %v3210
    %3265 = vmatprep.subr.mxu0 0.0
    %3266 = vmatpush1.msra.mxu0 %v3211
    %3267 = vmatprep.subr.mxu0 0.0
    %3268 = vmatpush1.msra.mxu0 %v3212
    %3269 = vmatprep.subr.mxu0 0.0
    %3270 = vmatpush1.msra.mxu0 %v3213
    %3271 = vmatprep.subr.mxu0 0.0
    %3272 = vmatpush1.msra.mxu0 %v3214
    %3273 = vmatprep.subr.mxu0 0.0
    %3274 = vmatpush1.msra.mxu0 %v3215
    %3275 = vmatprep.subr.mxu0 0.0
    %3276 = vmatpush1.msra.mxu0 0.0
    %3277 = vmatprep.subr.mxu0 0.0
    %3278 = vmatpush1.msra.mxu0 0.0
    %3279 = vmatprep.subr.mxu0 0.0
    %3280 = vmatpush1.msra.mxu0 0.0
    %3281 = vmatprep.subr.mxu0 0.0
    %3282 = vmatpush1.msra.mxu0 0.0
    %3283 = vmatprep.mubr.f32.mxu0 %v3217
    %3284 = vmatmul.mubr.f32.gmra.mrb[0].mxu0 %v2567
    %v3285 = vpop.f32.mrb[0].mxu0
    %v3286 = vadd.f32 0.0, %v3285
    %v3287 = vpop.f32.mrb[0].mxu0
    %3288 = vdwg.mxu0
    %v3289 = vadd.f32 %v3186, %v3286
    %s3290 = scalar_lea.vmem [#allocation13], 1568
    %v3291 = vld [vmem:[%s3290] sm:$0xff]
    %v3292 = vld [vmem:[%s3290 + $0x8] sm:$0xff]
    %v3293 = vld [vmem:[%s3290 + $0x10] sm:$0xff]
    %v3294 = vld [vmem:[%s3290 + $0x18] sm:$0xff]
    %v3295 = vld [vmem:[%s3290 + $0x20] sm:$0xff]
    %v3296 = vld [vmem:[%s3290 + $0x28] sm:$0xff]
    %v3297 = vld [vmem:[%s3290 + $0x30] sm:$0xff]
    %v3298 = vld [vmem:[%s3290 + $0x38] sm:$0xff]
    %v3299 = vld [vmem:[%s3290 + $0x40] sm:$0xff]
    %v3300 = vld [vmem:[%s3290 + $0x48] sm:$0xff]
    %v3301 = vld [vmem:[%s3290 + $0x50] sm:$0xff]
    %v3302 = vld [vmem:[%s3290 + $0x58] sm:$0xff]
    %v3303 = vld [vmem:[%s3290 + $0x60] sm:$0xff]
    %v3304 = vld [vmem:[%s3290 + $0x68] sm:$0xff]
    %v3305 = vld [vmem:[%s3290 + $0x70] sm:$0xff]
    %v3306 = vld [vmem:[%s3290 + $0x78] sm:$0xff]
    %v3307 = vld [vmem:[%s3290 + $0x80] sm:$0xff]
    %v3308 = vld [vmem:[%s3290 + $0x88] sm:$0xff]
    %v3309 = vld [vmem:[%s3290 + $0x90] sm:$0xff]
    %v3310 = vld [vmem:[%s3290 + $0x98] sm:$0xff]
    %v3311 = vld [vmem:[%s3290 + $0xa0] sm:$0xff]
    %v3312 = vld [vmem:[%s3290 + $0xa8] sm:$0xff]
    %v3313 = vld [vmem:[%s3290 + $0xb0] sm:$0xff]
    %v3314 = vld [vmem:[%s3290 + $0xb8] sm:$0xff]
    %v3315 = vld [vmem:[%s3290 + $0xc0] sm:$0xff]
    %v3316 = vld [vmem:[%s3290 + $0xc8] sm:$0xff]
    %v3317 = vld [vmem:[%s3290 + $0xd0] sm:$0xff]
    %v3318 = vld [vmem:[%s3290 + $0xd8] sm:$0xff]
    %v3320 = vsel %vm2628, %v2570, 0
    %3322 = vmatprep.subr.mxu0 0.0
    %3323 = vmatpush1.msra.mxu0 %v3291
    %3324 = vmatprep.subr.mxu0 0.0
    %3325 = vmatpush1.msra.mxu0 %v3292
    %3326 = vmatprep.subr.mxu0 0.0
    %3327 = vmatpush1.msra.mxu0 %v3293
    %3328 = vmatprep.subr.mxu0 0.0
    %3329 = vmatpush1.msra.mxu0 %v3294
    %3330 = vmatprep.subr.mxu0 0.0
    %3331 = vmatpush1.msra.mxu0 %v3295
    %3332 = vmatprep.subr.mxu0 0.0
    %3333 = vmatpush1.msra.mxu0 %v3296
    %3334 = vmatprep.subr.mxu0 0.0
    %3335 = vmatpush1.msra.mxu0 %v3297
    %3336 = vmatprep.subr.mxu0 0.0
    %3337 = vmatpush1.msra.mxu0 %v3298
    %3338 = vmatprep.subr.mxu0 0.0
    %3339 = vmatpush1.msra.mxu0 %v3299
    %3340 = vmatprep.subr.mxu0 0.0
    %3341 = vmatpush1.msra.mxu0 %v3300
    %3342 = vmatprep.subr.mxu0 0.0
    %3343 = vmatpush1.msra.mxu0 %v3301
    %3344 = vmatprep.subr.mxu0 0.0
    %3345 = vmatpush1.msra.mxu0 %v3302
    %3346 = vmatprep.subr.mxu0 0.0
    %3347 = vmatpush1.msra.mxu0 %v3303
    %3348 = vmatprep.subr.mxu0 0.0
    %3349 = vmatpush1.msra.mxu0 %v3304
    %3350 = vmatprep.subr.mxu0 0.0
    %3351 = vmatpush1.msra.mxu0 %v3305
    %3352 = vmatprep.subr.mxu0 0.0
    %3353 = vmatpush1.msra.mxu0 %v3306
    %3354 = vmatprep.subr.mxu0 0.0
    %3355 = vmatpush1.msra.mxu0 %v3307
    %3356 = vmatprep.subr.mxu0 0.0
    %3357 = vmatpush1.msra.mxu0 %v3308
    %3358 = vmatprep.subr.mxu0 0.0
    %3359 = vmatpush1.msra.mxu0 %v3309
    %3360 = vmatprep.subr.mxu0 0.0
    %3361 = vmatpush1.msra.mxu0 %v3310
    %3362 = vmatprep.subr.mxu0 0.0
    %3363 = vmatpush1.msra.mxu0 %v3311
    %3364 = vmatprep.subr.mxu0 0.0
    %3365 = vmatpush1.msra.mxu0 %v3312
    %3366 = vmatprep.subr.mxu0 0.0
    %3367 = vmatpush1.msra.mxu0 %v3313
    %3368 = vmatprep.subr.mxu0 0.0
    %3369 = vmatpush1.msra.mxu0 %v3314
    %3370 = vmatprep.subr.mxu0 0.0
    %3371 = vmatpush1.msra.mxu0 %v3315
    %3372 = vmatprep.subr.mxu0 0.0
    %3373 = vmatpush1.msra.mxu0 %v3316
    %3374 = vmatprep.subr.mxu0 0.0
    %3375 = vmatpush1.msra.mxu0 %v3317
    %3376 = vmatprep.subr.mxu0 0.0
    %3377 = vmatpush1.msra.mxu0 %v3318
    %3378 = vmatprep.subr.mxu0 0.0
    %3379 = vmatpush1.msra.mxu0 0.0
    %3380 = vmatprep.subr.mxu0 0.0
    %3381 = vmatpush1.msra.mxu0 0.0
    %3382 = vmatprep.subr.mxu0 0.0
    %3383 = vmatpush1.msra.mxu0 0.0
    %3384 = vmatprep.subr.mxu0 0.0
    %3385 = vmatpush1.msra.mxu0 0.0
    %3386 = vmatprep.mubr.f32.mxu0 %v3320
    %3387 = vmatmul.mubr.f32.gmra.mrb[0].mxu0 %v2569
    %v3388 = vpop.f32.mrb[0].mxu0
    %v3389 = vadd.f32 0.0, %v3388
    %v3390 = vpop.f32.mrb[0].mxu0
    %3391 = vdwg.mxu0
    %v3392 = vadd.f32 %v3289, %v3389
    %v3393 = vld [vmem:[#allocation14] sm:$0x1]
    %v3395 = vlaneseq
    %v3396 = vshrl.u32 %v3395, 7
    %v3397 = vsub.s32 0, %v3396
    %v3398 = vrot.slane %v3393, %v3397
    %v3400 = vadd.f32 %v3392, %v3398
    %v3401 = vmax.f32 %v3400, 0.0
    %v3402 = vld [vmem:[#allocation16] sm:$0xff]
    %v3403 = vld [vmem:[#allocation16 + $0x8] sm:$0xff]
    %v3404 = vld [vmem:[#allocation16 + $0x10] sm:$0xff]
    %v3405 = vld [vmem:[#allocation16 + $0x18] sm:$0xff]
    %v3406 = vld [vmem:[#allocation16 + $0x20] sm:$0xff]
    %v3407 = vld [vmem:[#allocation16 + $0x28] sm:$0xff]
    %v3408 = vld [vmem:[#allocation16 + $0x30] sm:$0xff]
    %v3409 = vld [vmem:[#allocation16 + $0x38] sm:$0xff]
    %v3410 = vld [vmem:[#allocation16 + $0x40] sm:$0xff]
    %v3411 = vld [vmem:[#allocation16 + $0x48] sm:$0xff]
    %v3412 = vld [vmem:[#allocation16 + $0x50] sm:$0xff]
    %v3413 = vld [vmem:[#allocation16 + $0x58] sm:$0xff]
    %v3414 = vld [vmem:[#allocation16 + $0x60] sm:$0xff]
    %v3415 = vld [vmem:[#allocation16 + $0x68] sm:$0xff]
    %v3416 = vld [vmem:[#allocation16 + $0x70] sm:$0xff]
    %v3417 = vld [vmem:[#allocation17] sm:$0x1]
    %v3419 = vlaneseq
    %v3420 = vshrl.u32 %v3419, 7
    %v3421 = vsub.s32 0, %v3420
    %v3422 = vrot.slane %v3417, %v3421
    %vm3424 = vcmask 982016
    %v3426 = vsel %vm3424, %v3401, 0
    %3428 = vmatprep.subr.mxu0 0.0
    %3429 = vmatpush1.msra.mxu0 %v3402
    %3430 = vmatprep.subr.mxu0 0.0
    %3431 = vmatpush1.msra.mxu0 %v3403
    %3432 = vmatprep.subr.mxu0 0.0
    %3433 = vmatpush1.msra.mxu0 %v3404
    %3434 = vmatprep.subr.mxu0 0.0
    %3435 = vmatpush1.msra.mxu0 %v3405
    %3436 = vmatprep.subr.mxu0 0.0
    %3437 = vmatpush1.msra.mxu0 %v3406
    %3438 = vmatprep.subr.mxu0 0.0
    %3439 = vmatpush1.msra.mxu0 %v3407
    %3440 = vmatprep.subr.mxu0 0.0
    %3441 = vmatpush1.msra.mxu0 %v3408
    %3442 = vmatprep.subr.mxu0 0.0
    %3443 = vmatpush1.msra.mxu0 %v3409
    %3444 = vmatprep.subr.mxu0 0.0
    %3445 = vmatpush1.msra.mxu0 %v3410
    %3446 = vmatprep.subr.mxu0 0.0
    %3447 = vmatpush1.msra.mxu0 %v3411
    %3448 = vmatprep.subr.mxu0 0.0
    %3449 = vmatpush1.msra.mxu0 %v3412
    %3450 = vmatprep.subr.mxu0 0.0
    %3451 = vmatpush1.msra.mxu0 %v3413
    %3452 = vmatprep.subr.mxu0 0.0
    %3453 = vmatpush1.msra.mxu0 %v3414
    %3454 = vmatprep.subr.mxu0 0.0
    %3455 = vmatpush1.msra.mxu0 %v3415
    %3456 = vmatprep.subr.mxu0 0.0
    %3457 = vmatpush1.msra.mxu0 %v3416
    %3458 = vmatprep.subr.mxu0 0.0
    %3459 = vmatpush1.msra.mxu0 0.0
    %3460 = vmatprep.subr.mxu0 0.0
    %3461 = vmatpush1.msra.mxu0 0.0
    %3462 = vmatprep.subr.mxu0 0.0
    %3463 = vmatpush1.msra.mxu0 0.0
    %3464 = vmatprep.subr.mxu0 0.0
    %3465 = vmatpush1.msra.mxu0 0.0
    %3466 = vmatprep.subr.mxu0 0.0
    %3467 = vmatpush1.msra.mxu0 0.0
    %3468 = vmatprep.subr.mxu0 0.0
    %3469 = vmatpush1.msra.mxu0 0.0
    %3470 = vmatprep.subr.mxu0 0.0
    %3471 = vmatpush1.msra.mxu0 0.0
    %3472 = vmatprep.subr.mxu0 0.0
    %3473 = vmatpush1.msra.mxu0 0.0
    %3474 = vmatprep.subr.mxu0 0.0
    %3475 = vmatpush1.msra.mxu0 0.0
    %3476 = vmatprep.subr.mxu0 0.0
    %3477 = vmatpush1.msra.mxu0 0.0
    %3478 = vmatprep.subr.mxu0 0.0
    %3479 = vmatpush1.msra.mxu0 0.0
    %3480 = vmatprep.subr.mxu0 0.0
    %3481 = vmatpush1.msra.mxu0 0.0
    %3482 = vmatprep.subr.mxu0 0.0
    %3483 = vmatpush1.msra.mxu0 0.0
    %3484 = vmatprep.subr.mxu0 0.0
    %3485 = vmatpush1.msra.mxu0 0.0
    %3486 = vmatprep.subr.mxu0 0.0
    %3487 = vmatpush1.msra.mxu0 0.0
    %3488 = vmatprep.subr.mxu0 0.0
    %3489 = vmatpush1.msra.mxu0 0.0
    %3490 = vmatprep.subr.mxu0 0.0
    %3491 = vmatpush1.msra.mxu0 0.0
    %3492 = vmatprep.mubr.f32.mxu0 0.0
    %3493 = vmatmul.mubr.f32.gmra.mrb[0].mxu0 %v3426
    %v3494 = vpop.f32.mrb[0].mxu0
    %v3495 = vadd.f32 %v3422, %v3494
    %v3496 = vpop.f32.mrb[0].mxu0
    %3497 = vdwg.mxu0
    %v3498 = vmax.f32 %v3495, 0.0
    %v3499 = vld [vmem:[#allocation19] sm:$0xff]
    %v3500 = vld [vmem:[#allocation19 + $0x8] sm:$0xff]
    %v3501 = vld [vmem:[#allocation19 + $0x10] sm:$0xff]
    %v3502 = vld [vmem:[#allocation19 + $0x18] sm:$0xff]
    %v3503 = vld [vmem:[#allocation19 + $0x20] sm:$0xff]
    %v3504 = vld [vmem:[#allocation19 + $0x28] sm:$0xff]
    %v3505 = vld [vmem:[#allocation19 + $0x30] sm:$0xff]
    %v3506 = vld [vmem:[#allocation19 + $0x38] sm:$0xff]
    %v3507 = vld [vmem:[#allocation19 + $0x40] sm:$0xff]
    %v3508 = vld [vmem:[#allocation19 + $0x48] sm:$0xff]
    %v3509 = vld [vmem:[#allocation19 + $0x50] sm:$0xf]
    %v3510 = vld [vmem:[#allocation20] sm:$0x1]
    %v3512 = vlaneseq
    %v3513 = vshrl.u32 %v3512, 7
    %v3514 = vsub.s32 0, %v3513
    %v3515 = vrot.slane %v3510, %v3514
    %vm3517 = vcmask 687104
    %v3519 = vsel %vm3517, %v3498, 0
    %v3522 = vsel %vm1838, %v3509, 0
    %3524 = vmatprep.subr.mxu0 0.0
    %3525 = vmatpush1.msra.mxu0 %v3499
    %3526 = vmatprep.subr.mxu0 0.0
    %3527 = vmatpush1.msra.mxu0 %v3500
    %3528 = vmatprep.subr.mxu0 0.0
    %3529 = vmatpush1.msra.mxu0 %v3501
    %3530 = vmatprep.subr.mxu0 0.0
    %3531 = vmatpush1.msra.mxu0 %v3502
    %3532 = vmatprep.subr.mxu0 0.0
    %3533 = vmatpush1.msra.mxu0 %v3503
    %3534 = vmatprep.subr.mxu0 0.0
    %3535 = vmatpush1.msra.mxu0 %v3504
    %3536 = vmatprep.subr.mxu0 0.0
    %3537 = vmatpush1.msra.mxu0 %v3505
    %3538 = vmatprep.subr.mxu0 0.0
    %3539 = vmatpush1.msra.mxu0 %v3506
    %3540 = vmatprep.subr.mxu0 0.0
    %3541 = vmatpush1.msra.mxu0 %v3507
    %3542 = vmatprep.subr.mxu0 0.0
    %3543 = vmatpush1.msra.mxu0 %v3508
    %3544 = vmatprep.subr.mxu0 0.0
    %3545 = vmatpush1.msra.mxu0 %v3522
    %3546 = vmatprep.subr.mxu0 0.0
    %3547 = vmatpush1.msra.mxu0 0.0
    %3548 = vmatprep.subr.mxu0 0.0
    %3549 = vmatpush1.msra.mxu0 0.0
    %3550 = vmatprep.subr.mxu0 0.0
    %3551 = vmatpush1.msra.mxu0 0.0
    %3552 = vmatprep.subr.mxu0 0.0
    %3553 = vmatpush1.msra.mxu0 0.0
    %3554 = vmatprep.subr.mxu0 0.0
    %3555 = vmatpush1.msra.mxu0 0.0
    %3556 = vmatprep.subr.mxu0 0.0
    %3557 = vmatpush1.msra.mxu0 0.0
    %3558 = vmatprep.subr.mxu0 0.0
    %3559 = vmatpush1.msra.mxu0 0.0
    %3560 = vmatprep.subr.mxu0 0.0
    %3561 = vmatpush1.msra.mxu0 0.0
    %3562 = vmatprep.subr.mxu0 0.0
    %3563 = vmatpush1.msra.mxu0 0.0
    %3564 = vmatprep.subr.mxu0 0.0
    %3565 = vmatpush1.msra.mxu0 0.0
    %3566 = vmatprep.subr.mxu0 0.0
    %3567 = vmatpush1.msra.mxu0 0.0
    %3568 = vmatprep.subr.mxu0 0.0
    %3569 = vmatpush1.msra.mxu0 0.0
    %3570 = vmatprep.subr.mxu0 0.0
    %3571 = vmatpush1.msra.mxu0 0.0
    %3572 = vmatprep.subr.mxu0 0.0
    %3573 = vmatpush1.msra.mxu0 0.0
    %3574 = vmatprep.subr.mxu0 0.0
    %3575 = vmatpush1.msra.mxu0 0.0
    %3576 = vmatprep.subr.mxu0 0.0
    %3577 = vmatpush1.msra.mxu0 0.0
    %3578 = vmatprep.subr.mxu0 0.0
    %3579 = vmatpush1.msra.mxu0 0.0
    %3580 = vmatprep.subr.mxu0 0.0
    %3581 = vmatpush1.msra.mxu0 0.0
    %3582 = vmatprep.subr.mxu0 0.0
    %3583 = vmatpush1.msra.mxu0 0.0
    %3584 = vmatprep.subr.mxu0 0.0
    %3585 = vmatpush1.msra.mxu0 0.0
    %3586 = vmatprep.subr.mxu0 0.0
    %3587 = vmatpush1.msra.mxu0 0.0
    %3588 = vmatprep.mubr.f32.mxu0 0.0
    %3589 = vmatmul.mubr.f32.gmra.mrb[0].mxu0 %v3519
    %v3590 = vpop.f32.mrb[0].mxu0
    %v3591 = vadd.f32 %v3515, %v3590
    %v3592 = vpop.f32.mrb[0].mxu0
    %3593 = vdwg.mxu0
    %3594 = vst [vmem:[#allocation22] sm:$0xff] %v3591
    // Predicated region
    $region98: #{tpu_custom_call.1} parent=1 // pred_check
      _
    $region99: #{tpu_custom_call.1} parent=1 // pred_check_branch
      %3596 = sbr.rel (0) target = $region101
    $region100: #{tpu_custom_call.1} parent=1 // pred_region
      %s3598 = ssub.s32 128, 128
      %3599 = vsyncadd [#allocation4], %s3598
      %s3601 = sshll.u32 [#allocation22], 4
      %s3602 = int_to_ptr.vmem [resolvable:$true] %s3601
      %3604 = dma.vmem_to_hbm [thread:$0]  %s3602, 128, %s12, [#allocation4]
    $region101: #{tpu_custom_call.1} parent=1 // pred_fallthru
      _
    // Predicated region
    $region102: #{tpu_custom_call.1} parent=1 // pred_check
      _
    $region103: #{tpu_custom_call.1} parent=1 // pred_check_branch
      %3606 = sbr.rel (0) target = $region105
    $region104: #{tpu_custom_call.1} parent=1 // pred_region
      %3607 = dma.done [#allocation4], 128
    $region105: #{tpu_custom_call.1} parent=1 // pred_fallthru
      _
    %3608 = vsyncpa [#allocation3], 1
    %3609 = vsyncpa [#allocation6], 1
    %3610 = vsyncpa [#allocation9], 1
    %3611 = vsyncpa [#allocation12], 1
    %3612 = vsyncpa [#allocation15], 1
    %3613 = vsyncpa [#allocation18], 1
    %3614 = vsyncpa [#allocation21], 1
    %3615 = vsyncpa [#allocation4], 1

</llo_original>
